<compile_context>
chip_gen: v6e
topology: v6e:2x2x1
jax: 0.10.0
libtpu: 0.0.40
codegen_flags: <defaults>
</compile_context>

<pallas_src>
import functools

import jax
import jax.numpy as jnp
from jax.experimental import pallas as pl
from jax.experimental.pallas import tpu as pltpu


def _ffsnn_kernel(beta_ref, thr_ref,                 # SMEM scalars (4,) each
                  x_ref,                             # (B, D_in)
                  w1_ref, b1_ref, w2_ref, b2_ref,
                  w3_ref, b3_ref, w4_ref, b4_ref,    # weights (in,out), biases (1,out)
                  cur_ref, spk_ref, mem_ref):        # outputs, resident (T, B, D_out)
    num_steps, batch, _ = cur_ref.shape

    # ---- time-invariant loads / broadcasts, hoisted out of the step loop ----
    x = x_ref[...]
    w1 = w1_ref[...]
    w2 = w2_ref[...]
    w3 = w3_ref[...]
    w4 = w4_ref[...]
    b1 = jnp.broadcast_to(b1_ref[...], (batch, w1.shape[1]))
    b2 = jnp.broadcast_to(b2_ref[...], (batch, w2.shape[1]))
    b3 = jnp.broadcast_to(b3_ref[...], (batch, w3.shape[1]))
    b4 = jnp.broadcast_to(b4_ref[...], (batch, w4.shape[1]))

    # learn_beta=True -> snntorch uses beta.clamp(0, 1); clip once, not per step.
    beta1 = jnp.clip(beta_ref[0], 0.0, 1.0)
    beta2 = jnp.clip(beta_ref[1], 0.0, 1.0)
    beta3 = jnp.clip(beta_ref[2], 0.0, 1.0)
    beta4 = jnp.clip(beta_ref[3], 0.0, 1.0)
    thr1 = thr_ref[0]
    thr2 = thr_ref[1]
    thr3 = thr_ref[2]
    thr4 = thr_ref[3]

    # fc1(x) does not depend on the time step -> compute once, reuse every step.
    cur1 = jnp.dot(x, w1, preferred_element_type=jnp.float32) + b1

    def lif(cur, mem_prev, beta, thr):
        # Heaviside via strict '>' matches snntorch's (mem_shift > 0) forward.
        reset = (mem_prev > thr).astype(jnp.float32)
        mem_new = beta * mem_prev + cur - reset * thr
        spk = (mem_new > thr).astype(jnp.float32)
        return spk, mem_new

    def zeros_like_out(w):
        return jnp.zeros((batch, w.shape[1]), jnp.float32)

    # Membranes start at zero (reset_mem()); carried in registers across steps.
    m1 = zeros_like_out(w1)
    m2 = zeros_like_out(w2)
    m3 = zeros_like_out(w3)
    m4 = zeros_like_out(w4)

    # Static Python loop: T is a small compile-time constant, so each output
    # store below has a fully static index and the scheduler sees every step.
    for t in range(num_steps):
        spk1, m1 = lif(cur1, m1, beta1, thr1)

        cur2 = jnp.dot(spk1, w2, preferred_element_type=jnp.float32) + b2
        spk2, m2 = lif(cur2, m2, beta2, thr2)

        cur3 = jnp.dot(spk2, w3, preferred_element_type=jnp.float32) + b3
        spk3, m3 = lif(cur3, m3, beta3, thr3)

        # spk3.flatten(1) is a no-op for fully-connected (B, H3) activations.
        cur4 = jnp.dot(spk3, w4, preferred_element_type=jnp.float32) + b4
        spk4, m4 = lif(cur4, m4, beta4, thr4)

        cur_ref[t] = cur4
        spk_ref[t] = spk4
        mem_ref[t] = m4


def ffsnn_forward(x, params, num_steps):
    """x: (B, D_in) float32. params: dict of weights/biases/betas/thresholds."""
    B, _ = x.shape
    w1, b1 = params["w1"], params["b1"]
    w2, b2 = params["w2"], params["b2"]
    w3, b3 = params["w3"], params["b3"]
    w4, b4 = params["w4"], params["b4"]
    betas = params["betas"]            # (4,) float32
    thresholds = params["thresholds"]  # (4,) float32
    d_out = w4.shape[1]

    full = lambda arr: pl.BlockSpec(arr.shape, lambda i: (0,) * arr.ndim)
    # Whole (T, B, d_out) output resident in VMEM; single writeback at the end.
    out_spec = pl.BlockSpec((num_steps, B, d_out), lambda i: (0, 0, 0))

    grid_spec = pltpu.PrefetchScalarGridSpec(
        num_scalar_prefetch=0,
        grid=(1,),                                   # single step; time loop is in-kernel
        in_specs=[
            pl.BlockSpec(memory_space=pltpu.SMEM),   # betas
            pl.BlockSpec(memory_space=pltpu.SMEM),   # thresholds
            full(x),
            full(w1), full(b1), full(w2), full(b2),
            full(w3), full(b3), full(w4), full(b4),
        ],
        out_specs=[out_spec, out_spec, out_spec],
    )

    out_shape = (
        jax.ShapeDtypeStruct((num_steps, B, d_out), jnp.float32),  # cur_last_rec
        jax.ShapeDtypeStruct((num_steps, B, d_out), jnp.float32),  # spk_last_rec
        jax.ShapeDtypeStruct((num_steps, B, d_out), jnp.float32),  # mem_last_rec
    )

    return pl.pallas_call(
        _ffsnn_kernel,
        out_shape=out_shape,
        grid_spec=grid_spec,
        compiler_params=pltpu.CompilerParams(
            dimension_semantics=("arbitrary",),
        ),
    )(betas, thresholds, x, w1, b1, w2, b2, w3, b3, w4, b4)


def init_linear(key, fan_in, fan_out):
    """Deterministic PyTorch-style nn.Linear init: U(-1/sqrt(fan_in), 1/sqrt(fan_in))."""
    k_w, k_b = jax.random.split(key)
    bound = 1.0 / jnp.sqrt(jnp.float32(fan_in))
    w = jax.random.uniform(k_w, (fan_in, fan_out), jnp.float32, -bound, bound)
    b = jax.random.uniform(k_b, (1, fan_out), jnp.float32, -bound, bound)
    return w, b


if __name__ == "__main__":
    # Small shapes consistent with the module:
    # topology = [16, 32, 32, 32, 10], batch=8, num_steps=8
    topology = [16, 32, 32, 32, 10]
    batch = 8
    num_steps = 8

    key = jax.random.PRNGKey(0)
    k_x, k1, k2, k3, k4 = jax.random.split(key, 5)

    w1, b1 = init_linear(k1, topology[0], topology[1])
    w2, b2 = init_linear(k2, topology[1], topology[2])
    w3, b3 = init_linear(k3, topology[2], topology[3])
    w4, b4 = init_linear(k4, topology[3], topology[4])

    params = dict(
        w1=w1, b1=b1, w2=w2, b2=b2, w3=w3, b3=b3, w4=w4, b4=b4,
        betas=jnp.array([0.9, 0.8, 0.7, 0.6], jnp.float32),
        thresholds=jnp.array([1.0, 1.0, 0.5, 0.5], jnp.float32),
    )

    x = jax.random.normal(k_x, (batch, topology[0]), jnp.float32)

    fwd = jax.jit(functools.partial(ffsnn_forward, num_steps=num_steps))
    cur_rec, spk_rec, mem_rec = fwd(x, params)
    jax.block_until_ready((cur_rec, spk_rec, mem_rec))

    assert cur_rec.shape == (num_steps, batch, topology[4])
    assert spk_rec.shape == (num_steps, batch, topology[4])
    assert mem_rec.shape == (num_steps, batch, topology[4])
    assert bool(jnp.all(jnp.isfinite(cur_rec)))
    assert bool(jnp.all(jnp.isfinite(mem_rec)))
    # Spikes must be exactly 0/1.
    assert bool(jnp.all((spk_rec == 0.0) | (spk_rec == 1.0)))
    print("KERNEL_OK")
</pallas_src>

<mosaic_0001>
module attributes {stable_mosaic.version = 11 : i64} {
  func.func @_ffsnn_kernel(%arg0: i32, %arg1: memref<4xf32, #tpu.memory_space<smem>>, %arg2: memref<4xf32, #tpu.memory_space<smem>>, %arg3: memref<8x16xf32, #tpu.memory_space<vmem>>, %arg4: memref<16x32xf32, #tpu.memory_space<vmem>>, %arg5: memref<1x32xf32, #tpu.memory_space<vmem>>, %arg6: memref<32x32xf32, #tpu.memory_space<vmem>>, %arg7: memref<1x32xf32, #tpu.memory_space<vmem>>, %arg8: memref<32x32xf32, #tpu.memory_space<vmem>>, %arg9: memref<1x32xf32, #tpu.memory_space<vmem>>, %arg10: memref<32x10xf32, #tpu.memory_space<vmem>>, %arg11: memref<1x10xf32, #tpu.memory_space<vmem>>, %arg12: memref<8x8x10xf32, #tpu.memory_space<vmem>>, %arg13: memref<8x8x10xf32, #tpu.memory_space<vmem>>, %arg14: memref<8x8x10xf32, #tpu.memory_space<vmem>>) attributes {dimension_semantics = [#tpu.dimension_semantics<arbitrary>], iteration_bounds = array<i64: 1>, scalar_prefetch = 0 : i64, scratch_operands = 0 : i64, tpu.core_type = #tpu.core_type<tc>, window_params = [{transform_indices = @transform_0, window_bounds = array<i64: 4>}, {transform_indices = @transform_1, window_bounds = array<i64: 4>}, {pipeline_mode = #tpu.pipeline_mode<synchronous>, transform_indices = @transform_2, window_bounds = array<i64: 8, 16>}, {pipeline_mode = #tpu.pipeline_mode<synchronous>, transform_indices = @transform_3, window_bounds = array<i64: 16, 32>}, {pipeline_mode = #tpu.pipeline_mode<synchronous>, transform_indices = @transform_4, window_bounds = array<i64: 1, 32>}, {pipeline_mode = #tpu.pipeline_mode<synchronous>, transform_indices = @transform_5, window_bounds = array<i64: 32, 32>}, {pipeline_mode = #tpu.pipeline_mode<synchronous>, transform_indices = @transform_6, window_bounds = array<i64: 1, 32>}, {pipeline_mode = #tpu.pipeline_mode<synchronous>, transform_indices = @transform_7, window_bounds = array<i64: 32, 32>}, {pipeline_mode = #tpu.pipeline_mode<synchronous>, transform_indices = @transform_8, window_bounds = array<i64: 1, 32>}, {pipeline_mode = #tpu.pipeline_mode<synchronous>, transform_indices = @transform_9, window_bounds = array<i64: 32, 10>}, {pipeline_mode = #tpu.pipeline_mode<synchronous>, transform_indices = @transform_10, window_bounds = array<i64: 1, 10>}, {pipeline_mode = #tpu.pipeline_mode<synchronous>, transform_indices = @transform_11, window_bounds = array<i64: 8, 8, 10>}, {pipeline_mode = #tpu.pipeline_mode<synchronous>, transform_indices = @transform_12, window_bounds = array<i64: 8, 8, 10>}, {pipeline_mode = #tpu.pipeline_mode<synchronous>, transform_indices = @transform_13, window_bounds = array<i64: 8, 8, 10>}]} {
    %c0 = arith.constant 0 : index
    %c0_0 = arith.constant 0 : index
    %0 = vector.load %arg3[%c0, %c0_0] : memref<8x16xf32, #tpu.memory_space<vmem>>, vector<8x16xf32>
    %c0_1 = arith.constant 0 : index
    %c0_2 = arith.constant 0 : index
    %1 = vector.load %arg4[%c0_1, %c0_2] : memref<16x32xf32, #tpu.memory_space<vmem>>, vector<16x32xf32>
    %c0_3 = arith.constant 0 : index
    %c0_4 = arith.constant 0 : index
    %2 = vector.load %arg6[%c0_3, %c0_4] : memref<32x32xf32, #tpu.memory_space<vmem>>, vector<32x32xf32>
    %c0_5 = arith.constant 0 : index
    %c0_6 = arith.constant 0 : index
    %3 = vector.load %arg8[%c0_5, %c0_6] : memref<32x32xf32, #tpu.memory_space<vmem>>, vector<32x32xf32>
    %c0_7 = arith.constant 0 : index
    %c0_8 = arith.constant 0 : index
    %4 = vector.load %arg10[%c0_7, %c0_8] : memref<32x10xf32, #tpu.memory_space<vmem>>, vector<32x10xf32>
    %c0_9 = arith.constant 0 : index
    %c0_10 = arith.constant 0 : index
    %5 = vector.load %arg5[%c0_9, %c0_10] : memref<1x32xf32, #tpu.memory_space<vmem>>, vector<1x32xf32>
    %6 = vector.shape_cast %5 : vector<1x32xf32> to vector<1x32xf32>
    %7 = vector.broadcast %6 : vector<1x32xf32> to vector<8x32xf32>
    %c0_11 = arith.constant 0 : index
    %c0_12 = arith.constant 0 : index
    %8 = vector.load %arg7[%c0_11, %c0_12] : memref<1x32xf32, #tpu.memory_space<vmem>>, vector<1x32xf32>
    %9 = vector.shape_cast %8 : vector<1x32xf32> to vector<1x32xf32>
    %10 = vector.broadcast %9 : vector<1x32xf32> to vector<8x32xf32>
    %c0_13 = arith.constant 0 : index
    %c0_14 = arith.constant 0 : index
    %11 = vector.load %arg9[%c0_13, %c0_14] : memref<1x32xf32, #tpu.memory_space<vmem>>, vector<1x32xf32>
    %12 = vector.shape_cast %11 : vector<1x32xf32> to vector<1x32xf32>
    %13 = vector.broadcast %12 : vector<1x32xf32> to vector<8x32xf32>
    %c0_15 = arith.constant 0 : index
    %c0_16 = arith.constant 0 : index
    %14 = vector.load %arg11[%c0_15, %c0_16] : memref<1x10xf32, #tpu.memory_space<vmem>>, vector<1x10xf32>
    %15 = vector.shape_cast %14 : vector<1x10xf32> to vector<1x10xf32>
    %16 = vector.broadcast %15 : vector<1x10xf32> to vector<8x10xf32>
    %c0_17 = arith.constant 0 : index
    %17 = memref.load %arg1[%c0_17] : memref<4xf32, #tpu.memory_space<smem>>
    %cst = arith.constant 0.000000e+00 : f32
    %cst_18 = arith.constant 1.000000e+00 : f32
    %18 = arith.maximumf %cst, %17 : f32
    %19 = arith.minimumf %cst_18, %18 : f32
    %c1 = arith.constant 1 : index
    %20 = memref.load %arg1[%c1] : memref<4xf32, #tpu.memory_space<smem>>
    %cst_19 = arith.constant 0.000000e+00 : f32
    %cst_20 = arith.constant 1.000000e+00 : f32
    %21 = arith.maximumf %cst_19, %20 : f32
    %22 = arith.minimumf %cst_20, %21 : f32
    %c2 = arith.constant 2 : index
    %23 = memref.load %arg1[%c2] : memref<4xf32, #tpu.memory_space<smem>>
    %cst_21 = arith.constant 0.000000e+00 : f32
    %cst_22 = arith.constant 1.000000e+00 : f32
    %24 = arith.maximumf %cst_21, %23 : f32
    %25 = arith.minimumf %cst_22, %24 : f32
    %c3 = arith.constant 3 : index
    %26 = memref.load %arg1[%c3] : memref<4xf32, #tpu.memory_space<smem>>
    %cst_23 = arith.constant 0.000000e+00 : f32
    %cst_24 = arith.constant 1.000000e+00 : f32
    %27 = arith.maximumf %cst_23, %26 : f32
    %28 = arith.minimumf %cst_24, %27 : f32
    %c0_25 = arith.constant 0 : index
    %29 = memref.load %arg2[%c0_25] : memref<4xf32, #tpu.memory_space<smem>>
    %c1_26 = arith.constant 1 : index
    %30 = memref.load %arg2[%c1_26] : memref<4xf32, #tpu.memory_space<smem>>
    %c2_27 = arith.constant 2 : index
    %31 = memref.load %arg2[%c2_27] : memref<4xf32, #tpu.memory_space<smem>>
    %c3_28 = arith.constant 3 : index
    %32 = memref.load %arg2[%c3_28] : memref<4xf32, #tpu.memory_space<smem>>
    %cst_29 = arith.constant dense<0.000000e+00> : vector<8x32xf32>
    %33 = tpu.matmul %0, %1, %cst_29 {dimension_numbers = #tpu.dot_dimension_numbers<[1], [0], [0], [1], [0, 0, 1, 1], [], []>} : vector<8x16xf32>, vector<16x32xf32>, vector<8x32xf32> -> vector<8x32xf32>
    %34 = arith.addf %33, %7 : vector<8x32xf32>
    %cst_30 = arith.constant 0.000000e+00 : f32
    %35 = vector.broadcast %cst_30 : f32 to vector<8x32xf32>
    %cst_31 = arith.constant 0.000000e+00 : f32
    %36 = vector.broadcast %cst_31 : f32 to vector<8x32xf32>
    %cst_32 = arith.constant 0.000000e+00 : f32
    %37 = vector.broadcast %cst_32 : f32 to vector<8x32xf32>
    %cst_33 = arith.constant 0.000000e+00 : f32
    %38 = vector.broadcast %cst_33 : f32 to vector<8x10xf32>
    %39 = vector.broadcast %29 : f32 to vector<8x32xf32>
    %40 = arith.cmpf ogt, %35, %39 : vector<8x32xf32>
    %41 = arith.extui %40 : vector<8x32xi1> to vector<8x32xi32>
    %42 = arith.sitofp %41 : vector<8x32xi32> to vector<8x32xf32>
    %43 = vector.broadcast %19 : f32 to vector<8x32xf32>
    %44 = arith.mulf %43, %35 : vector<8x32xf32>
    %45 = arith.addf %44, %34 : vector<8x32xf32>
    %46 = vector.broadcast %29 : f32 to vector<8x32xf32>
    %47 = arith.mulf %42, %46 : vector<8x32xf32>
    %48 = arith.subf %45, %47 : vector<8x32xf32>
    %49 = vector.broadcast %29 : f32 to vector<8x32xf32>
    %50 = arith.cmpf ogt, %48, %49 : vector<8x32xf32>
    %51 = arith.extui %50 : vector<8x32xi1> to vector<8x32xi32>
    %52 = arith.sitofp %51 : vector<8x32xi32> to vector<8x32xf32>
    %cst_34 = arith.constant dense<0.000000e+00> : vector<8x32xf32>
    %53 = tpu.matmul %52, %2, %cst_34 {dimension_numbers = #tpu.dot_dimension_numbers<[1], [0], [0], [1], [0, 0, 1, 1], [], []>} : vector<8x32xf32>, vector<32x32xf32>, vector<8x32xf32> -> vector<8x32xf32>
    %54 = arith.addf %53, %10 : vector<8x32xf32>
    %55 = vector.broadcast %30 : f32 to vector<8x32xf32>
    %56 = arith.cmpf ogt, %36, %55 : vector<8x32xf32>
    %57 = arith.extui %56 : vector<8x32xi1> to vector<8x32xi32>
    %58 = arith.sitofp %57 : vector<8x32xi32> to vector<8x32xf32>
    %59 = vector.broadcast %22 : f32 to vector<8x32xf32>
    %60 = arith.mulf %59, %36 : vector<8x32xf32>
    %61 = arith.addf %60, %54 : vector<8x32xf32>
    %62 = vector.broadcast %30 : f32 to vector<8x32xf32>
    %63 = arith.mulf %58, %62 : vector<8x32xf32>
    %64 = arith.subf %61, %63 : vector<8x32xf32>
    %65 = vector.broadcast %30 : f32 to vector<8x32xf32>
    %66 = arith.cmpf ogt, %64, %65 : vector<8x32xf32>
    %67 = arith.extui %66 : vector<8x32xi1> to vector<8x32xi32>
    %68 = arith.sitofp %67 : vector<8x32xi32> to vector<8x32xf32>
    %cst_35 = arith.constant dense<0.000000e+00> : vector<8x32xf32>
    %69 = tpu.matmul %68, %3, %cst_35 {dimension_numbers = #tpu.dot_dimension_numbers<[1], [0], [0], [1], [0, 0, 1, 1], [], []>} : vector<8x32xf32>, vector<32x32xf32>, vector<8x32xf32> -> vector<8x32xf32>
    %70 = arith.addf %69, %13 : vector<8x32xf32>
    %71 = vector.broadcast %31 : f32 to vector<8x32xf32>
    %72 = arith.cmpf ogt, %37, %71 : vector<8x32xf32>
    %73 = arith.extui %72 : vector<8x32xi1> to vector<8x32xi32>
    %74 = arith.sitofp %73 : vector<8x32xi32> to vector<8x32xf32>
    %75 = vector.broadcast %25 : f32 to vector<8x32xf32>
    %76 = arith.mulf %75, %37 : vector<8x32xf32>
    %77 = arith.addf %76, %70 : vector<8x32xf32>
    %78 = vector.broadcast %31 : f32 to vector<8x32xf32>
    %79 = arith.mulf %74, %78 : vector<8x32xf32>
    %80 = arith.subf %77, %79 : vector<8x32xf32>
    %81 = vector.broadcast %31 : f32 to vector<8x32xf32>
    %82 = arith.cmpf ogt, %80, %81 : vector<8x32xf32>
    %83 = arith.extui %82 : vector<8x32xi1> to vector<8x32xi32>
    %84 = arith.sitofp %83 : vector<8x32xi32> to vector<8x32xf32>
    %cst_36 = arith.constant dense<0.000000e+00> : vector<8x10xf32>
    %85 = tpu.matmul %84, %4, %cst_36 {dimension_numbers = #tpu.dot_dimension_numbers<[1], [0], [0], [1], [0, 0, 1, 1], [], []>} : vector<8x32xf32>, vector<32x10xf32>, vector<8x10xf32> -> vector<8x10xf32>
    %86 = arith.addf %85, %16 : vector<8x10xf32>
    %87 = vector.broadcast %32 : f32 to vector<8x10xf32>
    %88 = arith.cmpf ogt, %38, %87 : vector<8x10xf32>
    %89 = arith.extui %88 : vector<8x10xi1> to vector<8x10xi32>
    %90 = arith.sitofp %89 : vector<8x10xi32> to vector<8x10xf32>
    %91 = vector.broadcast %28 : f32 to vector<8x10xf32>
    %92 = arith.mulf %91, %38 : vector<8x10xf32>
    %93 = arith.addf %92, %86 : vector<8x10xf32>
    %94 = vector.broadcast %32 : f32 to vector<8x10xf32>
    %95 = arith.mulf %90, %94 : vector<8x10xf32>
    %96 = arith.subf %93, %95 : vector<8x10xf32>
    %97 = vector.broadcast %32 : f32 to vector<8x10xf32>
    %98 = arith.cmpf ogt, %96, %97 : vector<8x10xf32>
    %99 = arith.extui %98 : vector<8x10xi1> to vector<8x10xi32>
    %100 = arith.sitofp %99 : vector<8x10xi32> to vector<8x10xf32>
    %c0_37 = arith.constant 0 : index
    %c0_38 = arith.constant 0 : index
    %c0_39 = arith.constant 0 : index
    %101 = vector.load %arg12[%c0_37, %c0_38, %c0_39] : memref<8x8x10xf32, #tpu.memory_space<vmem>>, vector<1x8x10xf32>
    %102 = vector.shape_cast %101 : vector<1x8x10xf32> to vector<8x10xf32>
    %103 = vector.shape_cast %86 : vector<8x10xf32> to vector<1x8x10xf32>
    tpu.vector_store %arg12[%c0_37, %c0_38, %c0_39], %103 {strides = array<i32>} : memref<8x8x10xf32, #tpu.memory_space<vmem>>, vector<1x8x10xf32>,
    %c0_40 = arith.constant 0 : index
    %c0_41 = arith.constant 0 : index
    %c0_42 = arith.constant 0 : index
    %104 = vector.load %arg13[%c0_40, %c0_41, %c0_42] : memref<8x8x10xf32, #tpu.memory_space<vmem>>, vector<1x8x10xf32>
    %105 = vector.shape_cast %104 : vector<1x8x10xf32> to vector<8x10xf32>
    %106 = vector.shape_cast %100 : vector<8x10xf32> to vector<1x8x10xf32>
    tpu.vector_store %arg13[%c0_40, %c0_41, %c0_42], %106 {strides = array<i32>} : memref<8x8x10xf32, #tpu.memory_space<vmem>>, vector<1x8x10xf32>,
    %c0_43 = arith.constant 0 : index
    %c0_44 = arith.constant 0 : index
    %c0_45 = arith.constant 0 : index
    %107 = vector.load %arg14[%c0_43, %c0_44, %c0_45] : memref<8x8x10xf32, #tpu.memory_space<vmem>>, vector<1x8x10xf32>
    %108 = vector.shape_cast %107 : vector<1x8x10xf32> to vector<8x10xf32>
    %109 = vector.shape_cast %96 : vector<8x10xf32> to vector<1x8x10xf32>
    tpu.vector_store %arg14[%c0_43, %c0_44, %c0_45], %109 {strides = array<i32>} : memref<8x8x10xf32, #tpu.memory_space<vmem>>, vector<1x8x10xf32>,
    %110 = vector.broadcast %29 : f32 to vector<8x32xf32>
    %111 = arith.cmpf ogt, %48, %110 : vector<8x32xf32>
    %112 = arith.extui %111 : vector<8x32xi1> to vector<8x32xi32>
    %113 = arith.sitofp %112 : vector<8x32xi32> to vector<8x32xf32>
    %114 = vector.broadcast %19 : f32 to vector<8x32xf32>
    %115 = arith.mulf %114, %48 : vector<8x32xf32>
    %116 = arith.addf %115, %34 : vector<8x32xf32>
    %117 = vector.broadcast %29 : f32 to vector<8x32xf32>
    %118 = arith.mulf %113, %117 : vector<8x32xf32>
    %119 = arith.subf %116, %118 : vector<8x32xf32>
    %120 = vector.broadcast %29 : f32 to vector<8x32xf32>
    %121 = arith.cmpf ogt, %119, %120 : vector<8x32xf32>
    %122 = arith.extui %121 : vector<8x32xi1> to vector<8x32xi32>
    %123 = arith.sitofp %122 : vector<8x32xi32> to vector<8x32xf32>
    %cst_46 = arith.constant dense<0.000000e+00> : vector<8x32xf32>
    %124 = tpu.matmul %123, %2, %cst_46 {dimension_numbers = #tpu.dot_dimension_numbers<[1], [0], [0], [1], [0, 0, 1, 1], [], []>} : vector<8x32xf32>, vector<32x32xf32>, vector<8x32xf32> -> vector<8x32xf32>
    %125 = arith.addf %124, %10 : vector<8x32xf32>
    %126 = vector.broadcast %30 : f32 to vector<8x32xf32>
    %127 = arith.cmpf ogt, %64, %126 : vector<8x32xf32>
    %128 = arith.extui %127 : vector<8x32xi1> to vector<8x32xi32>
    %129 = arith.sitofp %128 : vector<8x32xi32> to vector<8x32xf32>
    %130 = vector.broadcast %22 : f32 to vector<8x32xf32>
    %131 = arith.mulf %130, %64 : vector<8x32xf32>
    %132 = arith.addf %131, %125 : vector<8x32xf32>
    %133 = vector.broadcast %30 : f32 to vector<8x32xf32>
    %134 = arith.mulf %129, %133 : vector<8x32xf32>
    %135 = arith.subf %132, %134 : vector<8x32xf32>
    %136 = vector.broadcast %30 : f32 to vector<8x32xf32>
    %137 = arith.cmpf ogt, %135, %136 : vector<8x32xf32>
    %138 = arith.extui %137 : vector<8x32xi1> to vector<8x32xi32>
    %139 = arith.sitofp %138 : vector<8x32xi32> to vector<8x32xf32>
    %cst_47 = arith.constant dense<0.000000e+00> : vector<8x32xf32>
    %140 = tpu.matmul %139, %3, %cst_47 {dimension_numbers = #tpu.dot_dimension_numbers<[1], [0], [0], [1], [0, 0, 1, 1], [], []>} : vector<8x32xf32>, vector<32x32xf32>, vector<8x32xf32> -> vector<8x32xf32>
    %141 = arith.addf %140, %13 : vector<8x32xf32>
    %142 = vector.broadcast %31 : f32 to vector<8x32xf32>
    %143 = arith.cmpf ogt, %80, %142 : vector<8x32xf32>
    %144 = arith.extui %143 : vector<8x32xi1> to vector<8x32xi32>
    %145 = arith.sitofp %144 : vector<8x32xi32> to vector<8x32xf32>
    %146 = vector.broadcast %25 : f32 to vector<8x32xf32>
    %147 = arith.mulf %146, %80 : vector<8x32xf32>
    %148 = arith.addf %147, %141 : vector<8x32xf32>
    %149 = vector.broadcast %31 : f32 to vector<8x32xf32>
    %150 = arith.mulf %145, %149 : vector<8x32xf32>
    %151 = arith.subf %148, %150 : vector<8x32xf32>
    %152 = vector.broadcast %31 : f32 to vector<8x32xf32>
    %153 = arith.cmpf ogt, %151, %152 : vector<8x32xf32>
    %154 = arith.extui %153 : vector<8x32xi1> to vector<8x32xi32>
    %155 = arith.sitofp %154 : vector<8x32xi32> to vector<8x32xf32>
    %cst_48 = arith.constant dense<0.000000e+00> : vector<8x10xf32>
    %156 = tpu.matmul %155, %4, %cst_48 {dimension_numbers = #tpu.dot_dimension_numbers<[1], [0], [0], [1], [0, 0, 1, 1], [], []>} : vector<8x32xf32>, vector<32x10xf32>, vector<8x10xf32> -> vector<8x10xf32>
    %157 = arith.addf %156, %16 : vector<8x10xf32>
    %158 = vector.broadcast %32 : f32 to vector<8x10xf32>
    %159 = arith.cmpf ogt, %96, %158 : vector<8x10xf32>
    %160 = arith.extui %159 : vector<8x10xi1> to vector<8x10xi32>
    %161 = arith.sitofp %160 : vector<8x10xi32> to vector<8x10xf32>
    %162 = vector.broadcast %28 : f32 to vector<8x10xf32>
    %163 = arith.mulf %162, %96 : vector<8x10xf32>
    %164 = arith.addf %163, %157 : vector<8x10xf32>
    %165 = vector.broadcast %32 : f32 to vector<8x10xf32>
    %166 = arith.mulf %161, %165 : vector<8x10xf32>
    %167 = arith.subf %164, %166 : vector<8x10xf32>
    %168 = vector.broadcast %32 : f32 to vector<8x10xf32>
    %169 = arith.cmpf ogt, %167, %168 : vector<8x10xf32>
    %170 = arith.extui %169 : vector<8x10xi1> to vector<8x10xi32>
    %171 = arith.sitofp %170 : vector<8x10xi32> to vector<8x10xf32>
    %c1_49 = arith.constant 1 : index
    %c0_50 = arith.constant 0 : index
    %c0_51 = arith.constant 0 : index
    %172 = vector.load %arg12[%c1_49, %c0_50, %c0_51] : memref<8x8x10xf32, #tpu.memory_space<vmem>>, vector<1x8x10xf32>
    %173 = vector.shape_cast %172 : vector<1x8x10xf32> to vector<8x10xf32>
    %174 = vector.shape_cast %157 : vector<8x10xf32> to vector<1x8x10xf32>
    tpu.vector_store %arg12[%c1_49, %c0_50, %c0_51], %174 {strides = array<i32>} : memref<8x8x10xf32, #tpu.memory_space<vmem>>, vector<1x8x10xf32>,
    %c1_52 = arith.constant 1 : index
    %c0_53 = arith.constant 0 : index
    %c0_54 = arith.constant 0 : index
    %175 = vector.load %arg13[%c1_52, %c0_53, %c0_54] : memref<8x8x10xf32, #tpu.memory_space<vmem>>, vector<1x8x10xf32>
    %176 = vector.shape_cast %175 : vector<1x8x10xf32> to vector<8x10xf32>
    %177 = vector.shape_cast %171 : vector<8x10xf32> to vector<1x8x10xf32>
    tpu.vector_store %arg13[%c1_52, %c0_53, %c0_54], %177 {strides = array<i32>} : memref<8x8x10xf32, #tpu.memory_space<vmem>>, vector<1x8x10xf32>,
    %c1_55 = arith.constant 1 : index
    %c0_56 = arith.constant 0 : index
    %c0_57 = arith.constant 0 : index
    %178 = vector.load %arg14[%c1_55, %c0_56, %c0_57] : memref<8x8x10xf32, #tpu.memory_space<vmem>>, vector<1x8x10xf32>
    %179 = vector.shape_cast %178 : vector<1x8x10xf32> to vector<8x10xf32>
    %180 = vector.shape_cast %167 : vector<8x10xf32> to vector<1x8x10xf32>
    tpu.vector_store %arg14[%c1_55, %c0_56, %c0_57], %180 {strides = array<i32>} : memref<8x8x10xf32, #tpu.memory_space<vmem>>, vector<1x8x10xf32>,
    %181 = vector.broadcast %29 : f32 to vector<8x32xf32>
    %182 = arith.cmpf ogt, %119, %181 : vector<8x32xf32>
    %183 = arith.extui %182 : vector<8x32xi1> to vector<8x32xi32>
    %184 = arith.sitofp %183 : vector<8x32xi32> to vector<8x32xf32>
    %185 = vector.broadcast %19 : f32 to vector<8x32xf32>
    %186 = arith.mulf %185, %119 : vector<8x32xf32>
    %187 = arith.addf %186, %34 : vector<8x32xf32>
    %188 = vector.broadcast %29 : f32 to vector<8x32xf32>
    %189 = arith.mulf %184, %188 : vector<8x32xf32>
    %190 = arith.subf %187, %189 : vector<8x32xf32>
    %191 = vector.broadcast %29 : f32 to vector<8x32xf32>
    %192 = arith.cmpf ogt, %190, %191 : vector<8x32xf32>
    %193 = arith.extui %192 : vector<8x32xi1> to vector<8x32xi32>
    %194 = arith.sitofp %193 : vector<8x32xi32> to vector<8x32xf32>
    %cst_58 = arith.constant dense<0.000000e+00> : vector<8x32xf32>
    %195 = tpu.matmul %194, %2, %cst_58 {dimension_numbers = #tpu.dot_dimension_numbers<[1], [0], [0], [1], [0, 0, 1, 1], [], []>} : vector<8x32xf32>, vector<32x32xf32>, vector<8x32xf32> -> vector<8x32xf32>
    %196 = arith.addf %195, %10 : vector<8x32xf32>
    %197 = vector.broadcast %30 : f32 to vector<8x32xf32>
    %198 = arith.cmpf ogt, %135, %197 : vector<8x32xf32>
    %199 = arith.extui %198 : vector<8x32xi1> to vector<8x32xi32>
    %200 = arith.sitofp %199 : vector<8x32xi32> to vector<8x32xf32>
    %201 = vector.broadcast %22 : f32 to vector<8x32xf32>
    %202 = arith.mulf %201, %135 : vector<8x32xf32>
    %203 = arith.addf %202, %196 : vector<8x32xf32>
    %204 = vector.broadcast %30 : f32 to vector<8x32xf32>
    %205 = arith.mulf %200, %204 : vector<8x32xf32>
    %206 = arith.subf %203, %205 : vector<8x32xf32>
    %207 = vector.broadcast %30 : f32 to vector<8x32xf32>
    %208 = arith.cmpf ogt, %206, %207 : vector<8x32xf32>
    %209 = arith.extui %208 : vector<8x32xi1> to vector<8x32xi32>
    %210 = arith.sitofp %209 : vector<8x32xi32> to vector<8x32xf32>
    %cst_59 = arith.constant dense<0.000000e+00> : vector<8x32xf32>
    %211 = tpu.matmul %210, %3, %cst_59 {dimension_numbers = #tpu.dot_dimension_numbers<[1], [0], [0], [1], [0, 0, 1, 1], [], []>} : vector<8x32xf32>, vector<32x32xf32>, vector<8x32xf32> -> vector<8x32xf32>
    %212 = arith.addf %211, %13 : vector<8x32xf32>
    %213 = vector.broadcast %31 : f32 to vector<8x32xf32>
    %214 = arith.cmpf ogt, %151, %213 : vector<8x32xf32>
    %215 = arith.extui %214 : vector<8x32xi1> to vector<8x32xi32>
    %216 = arith.sitofp %215 : vector<8x32xi32> to vector<8x32xf32>
    %217 = vector.broadcast %25 : f32 to vector<8x32xf32>
    %218 = arith.mulf %217, %151 : vector<8x32xf32>
    %219 = arith.addf %218, %212 : vector<8x32xf32>
    %220 = vector.broadcast %31 : f32 to vector<8x32xf32>
    %221 = arith.mulf %216, %220 : vector<8x32xf32>
    %222 = arith.subf %219, %221 : vector<8x32xf32>
    %223 = vector.broadcast %31 : f32 to vector<8x32xf32>
    %224 = arith.cmpf ogt, %222, %223 : vector<8x32xf32>
    %225 = arith.extui %224 : vector<8x32xi1> to vector<8x32xi32>
    %226 = arith.sitofp %225 : vector<8x32xi32> to vector<8x32xf32>
    %cst_60 = arith.constant dense<0.000000e+00> : vector<8x10xf32>
    %227 = tpu.matmul %226, %4, %cst_60 {dimension_numbers = #tpu.dot_dimension_numbers<[1], [0], [0], [1], [0, 0, 1, 1], [], []>} : vector<8x32xf32>, vector<32x10xf32>, vector<8x10xf32> -> vector<8x10xf32>
    %228 = arith.addf %227, %16 : vector<8x10xf32>
    %229 = vector.broadcast %32 : f32 to vector<8x10xf32>
    %230 = arith.cmpf ogt, %167, %229 : vector<8x10xf32>
    %231 = arith.extui %230 : vector<8x10xi1> to vector<8x10xi32>
    %232 = arith.sitofp %231 : vector<8x10xi32> to vector<8x10xf32>
    %233 = vector.broadcast %28 : f32 to vector<8x10xf32>
    %234 = arith.mulf %233, %167 : vector<8x10xf32>
    %235 = arith.addf %234, %228 : vector<8x10xf32>
    %236 = vector.broadcast %32 : f32 to vector<8x10xf32>
    %237 = arith.mulf %232, %236 : vector<8x10xf32>
    %238 = arith.subf %235, %237 : vector<8x10xf32>
    %239 = vector.broadcast %32 : f32 to vector<8x10xf32>
    %240 = arith.cmpf ogt, %238, %239 : vector<8x10xf32>
    %241 = arith.extui %240 : vector<8x10xi1> to vector<8x10xi32>
    %242 = arith.sitofp %241 : vector<8x10xi32> to vector<8x10xf32>
    %c2_61 = arith.constant 2 : index
    %c0_62 = arith.constant 0 : index
    %c0_63 = arith.constant 0 : index
    %243 = vector.load %arg12[%c2_61, %c0_62, %c0_63] : memref<8x8x10xf32, #tpu.memory_space<vmem>>, vector<1x8x10xf32>
    %244 = vector.shape_cast %243 : vector<1x8x10xf32> to vector<8x10xf32>
    %245 = vector.shape_cast %228 : vector<8x10xf32> to vector<1x8x10xf32>
    tpu.vector_store %arg12[%c2_61, %c0_62, %c0_63], %245 {strides = array<i32>} : memref<8x8x10xf32, #tpu.memory_space<vmem>>, vector<1x8x10xf32>,
    %c2_64 = arith.constant 2 : index
    %c0_65 = arith.constant 0 : index
    %c0_66 = arith.constant 0 : index
    %246 = vector.load %arg13[%c2_64, %c0_65, %c0_66] : memref<8x8x10xf32, #tpu.memory_space<vmem>>, vector<1x8x10xf32>
    %247 = vector.shape_cast %246 : vector<1x8x10xf32> to vector<8x10xf32>
    %248 = vector.shape_cast %242 : vector<8x10xf32> to vector<1x8x10xf32>
    tpu.vector_store %arg13[%c2_64, %c0_65, %c0_66], %248 {strides = array<i32>} : memref<8x8x10xf32, #tpu.memory_space<vmem>>, vector<1x8x10xf32>,
    %c2_67 = arith.constant 2 : index
    %c0_68 = arith.constant 0 : index
    %c0_69 = arith.constant 0 : index
    %249 = vector.load %arg14[%c2_67, %c0_68, %c0_69] : memref<8x8x10xf32, #tpu.memory_space<vmem>>, vector<1x8x10xf32>
    %250 = vector.shape_cast %249 : vector<1x8x10xf32> to vector<8x10xf32>
    %251 = vector.shape_cast %238 : vector<8x10xf32> to vector<1x8x10xf32>
    tpu.vector_store %arg14[%c2_67, %c0_68, %c0_69], %251 {strides = array<i32>} : memref<8x8x10xf32, #tpu.memory_space<vmem>>, vector<1x8x10xf32>,
    %252 = vector.broadcast %29 : f32 to vector<8x32xf32>
    %253 = arith.cmpf ogt, %190, %252 : vector<8x32xf32>
    %254 = arith.extui %253 : vector<8x32xi1> to vector<8x32xi32>
    %255 = arith.sitofp %254 : vector<8x32xi32> to vector<8x32xf32>
    %256 = vector.broadcast %19 : f32 to vector<8x32xf32>
    %257 = arith.mulf %256, %190 : vector<8x32xf32>
    %258 = arith.addf %257, %34 : vector<8x32xf32>
    %259 = vector.broadcast %29 : f32 to vector<8x32xf32>
    %260 = arith.mulf %255, %259 : vector<8x32xf32>
    %261 = arith.subf %258, %260 : vector<8x32xf32>
    %262 = vector.broadcast %29 : f32 to vector<8x32xf32>
    %263 = arith.cmpf ogt, %261, %262 : vector<8x32xf32>
    %264 = arith.extui %263 : vector<8x32xi1> to vector<8x32xi32>
    %265 = arith.sitofp %264 : vector<8x32xi32> to vector<8x32xf32>
    %cst_70 = arith.constant dense<0.000000e+00> : vector<8x32xf32>
    %266 = tpu.matmul %265, %2, %cst_70 {dimension_numbers = #tpu.dot_dimension_numbers<[1], [0], [0], [1], [0, 0, 1, 1], [], []>} : vector<8x32xf32>, vector<32x32xf32>, vector<8x32xf32> -> vector<8x32xf32>
    %267 = arith.addf %266, %10 : vector<8x32xf32>
    %268 = vector.broadcast %30 : f32 to vector<8x32xf32>
    %269 = arith.cmpf ogt, %206, %268 : vector<8x32xf32>
    %270 = arith.extui %269 : vector<8x32xi1> to vector<8x32xi32>
    %271 = arith.sitofp %270 : vector<8x32xi32> to vector<8x32xf32>
    %272 = vector.broadcast %22 : f32 to vector<8x32xf32>
    %273 = arith.mulf %272, %206 : vector<8x32xf32>
    %274 = arith.addf %273, %267 : vector<8x32xf32>
    %275 = vector.broadcast %30 : f32 to vector<8x32xf32>
    %276 = arith.mulf %271, %275 : vector<8x32xf32>
    %277 = arith.subf %274, %276 : vector<8x32xf32>
    %278 = vector.broadcast %30 : f32 to vector<8x32xf32>
    %279 = arith.cmpf ogt, %277, %278 : vector<8x32xf32>
    %280 = arith.extui %279 : vector<8x32xi1> to vector<8x32xi32>
    %281 = arith.sitofp %280 : vector<8x32xi32> to vector<8x32xf32>
    %cst_71 = arith.constant dense<0.000000e+00> : vector<8x32xf32>
    %282 = tpu.matmul %281, %3, %cst_71 {dimension_numbers = #tpu.dot_dimension_numbers<[1], [0], [0], [1], [0, 0, 1, 1], [], []>} : vector<8x32xf32>, vector<32x32xf32>, vector<8x32xf32> -> vector<8x32xf32>
    %283 = arith.addf %282, %13 : vector<8x32xf32>
    %284 = vector.broadcast %31 : f32 to vector<8x32xf32>
    %285 = arith.cmpf ogt, %222, %284 : vector<8x32xf32>
    %286 = arith.extui %285 : vector<8x32xi1> to vector<8x32xi32>
    %287 = arith.sitofp %286 : vector<8x32xi32> to vector<8x32xf32>
    %288 = vector.broadcast %25 : f32 to vector<8x32xf32>
    %289 = arith.mulf %288, %222 : vector<8x32xf32>
    %290 = arith.addf %289, %283 : vector<8x32xf32>
    %291 = vector.broadcast %31 : f32 to vector<8x32xf32>
    %292 = arith.mulf %287, %291 : vector<8x32xf32>
    %293 = arith.subf %290, %292 : vector<8x32xf32>
    %294 = vector.broadcast %31 : f32 to vector<8x32xf32>
    %295 = arith.cmpf ogt, %293, %294 : vector<8x32xf32>
    %296 = arith.extui %295 : vector<8x32xi1> to vector<8x32xi32>
    %297 = arith.sitofp %296 : vector<8x32xi32> to vector<8x32xf32>
    %cst_72 = arith.constant dense<0.000000e+00> : vector<8x10xf32>
    %298 = tpu.matmul %297, %4, %cst_72 {dimension_numbers = #tpu.dot_dimension_numbers<[1], [0], [0], [1], [0, 0, 1, 1], [], []>} : vector<8x32xf32>, vector<32x10xf32>, vector<8x10xf32> -> vector<8x10xf32>
    %299 = arith.addf %298, %16 : vector<8x10xf32>
    %300 = vector.broadcast %32 : f32 to vector<8x10xf32>
    %301 = arith.cmpf ogt, %238, %300 : vector<8x10xf32>
    %302 = arith.extui %301 : vector<8x10xi1> to vector<8x10xi32>
    %303 = arith.sitofp %302 : vector<8x10xi32> to vector<8x10xf32>
    %304 = vector.broadcast %28 : f32 to vector<8x10xf32>
    %305 = arith.mulf %304, %238 : vector<8x10xf32>
    %306 = arith.addf %305, %299 : vector<8x10xf32>
    %307 = vector.broadcast %32 : f32 to vector<8x10xf32>
    %308 = arith.mulf %303, %307 : vector<8x10xf32>
    %309 = arith.subf %306, %308 : vector<8x10xf32>
    %310 = vector.broadcast %32 : f32 to vector<8x10xf32>
    %311 = arith.cmpf ogt, %309, %310 : vector<8x10xf32>
    %312 = arith.extui %311 : vector<8x10xi1> to vector<8x10xi32>
    %313 = arith.sitofp %312 : vector<8x10xi32> to vector<8x10xf32>
    %c3_73 = arith.constant 3 : index
    %c0_74 = arith.constant 0 : index
    %c0_75 = arith.constant 0 : index
    %314 = vector.load %arg12[%c3_73, %c0_74, %c0_75] : memref<8x8x10xf32, #tpu.memory_space<vmem>>, vector<1x8x10xf32>
    %315 = vector.shape_cast %314 : vector<1x8x10xf32> to vector<8x10xf32>
    %316 = vector.shape_cast %299 : vector<8x10xf32> to vector<1x8x10xf32>
    tpu.vector_store %arg12[%c3_73, %c0_74, %c0_75], %316 {strides = array<i32>} : memref<8x8x10xf32, #tpu.memory_space<vmem>>, vector<1x8x10xf32>,
    %c3_76 = arith.constant 3 : index
    %c0_77 = arith.constant 0 : index
    %c0_78 = arith.constant 0 : index
    %317 = vector.load %arg13[%c3_76, %c0_77, %c0_78] : memref<8x8x10xf32, #tpu.memory_space<vmem>>, vector<1x8x10xf32>
    %318 = vector.shape_cast %317 : vector<1x8x10xf32> to vector<8x10xf32>
    %319 = vector.shape_cast %313 : vector<8x10xf32> to vector<1x8x10xf32>
    tpu.vector_store %arg13[%c3_76, %c0_77, %c0_78], %319 {strides = array<i32>} : memref<8x8x10xf32, #tpu.memory_space<vmem>>, vector<1x8x10xf32>,
    %c3_79 = arith.constant 3 : index
    %c0_80 = arith.constant 0 : index
    %c0_81 = arith.constant 0 : index
    %320 = vector.load %arg14[%c3_79, %c0_80, %c0_81] : memref<8x8x10xf32, #tpu.memory_space<vmem>>, vector<1x8x10xf32>
    %321 = vector.shape_cast %320 : vector<1x8x10xf32> to vector<8x10xf32>
    %322 = vector.shape_cast %309 : vector<8x10xf32> to vector<1x8x10xf32>
    tpu.vector_store %arg14[%c3_79, %c0_80, %c0_81], %322 {strides = array<i32>} : memref<8x8x10xf32, #tpu.memory_space<vmem>>, vector<1x8x10xf32>,
    %323 = vector.broadcast %29 : f32 to vector<8x32xf32>
    %324 = arith.cmpf ogt, %261, %323 : vector<8x32xf32>
    %325 = arith.extui %324 : vector<8x32xi1> to vector<8x32xi32>
    %326 = arith.sitofp %325 : vector<8x32xi32> to vector<8x32xf32>
    %327 = vector.broadcast %19 : f32 to vector<8x32xf32>
    %328 = arith.mulf %327, %261 : vector<8x32xf32>
    %329 = arith.addf %328, %34 : vector<8x32xf32>
    %330 = vector.broadcast %29 : f32 to vector<8x32xf32>
    %331 = arith.mulf %326, %330 : vector<8x32xf32>
    %332 = arith.subf %329, %331 : vector<8x32xf32>
    %333 = vector.broadcast %29 : f32 to vector<8x32xf32>
    %334 = arith.cmpf ogt, %332, %333 : vector<8x32xf32>
    %335 = arith.extui %334 : vector<8x32xi1> to vector<8x32xi32>
    %336 = arith.sitofp %335 : vector<8x32xi32> to vector<8x32xf32>
    %cst_82 = arith.constant dense<0.000000e+00> : vector<8x32xf32>
    %337 = tpu.matmul %336, %2, %cst_82 {dimension_numbers = #tpu.dot_dimension_numbers<[1], [0], [0], [1], [0, 0, 1, 1], [], []>} : vector<8x32xf32>, vector<32x32xf32>, vector<8x32xf32> -> vector<8x32xf32>
    %338 = arith.addf %337, %10 : vector<8x32xf32>
    %339 = vector.broadcast %30 : f32 to vector<8x32xf32>
    %340 = arith.cmpf ogt, %277, %339 : vector<8x32xf32>
    %341 = arith.extui %340 : vector<8x32xi1> to vector<8x32xi32>
    %342 = arith.sitofp %341 : vector<8x32xi32> to vector<8x32xf32>
    %343 = vector.broadcast %22 : f32 to vector<8x32xf32>
    %344 = arith.mulf %343, %277 : vector<8x32xf32>
    %345 = arith.addf %344, %338 : vector<8x32xf32>
    %346 = vector.broadcast %30 : f32 to vector<8x32xf32>
    %347 = arith.mulf %342, %346 : vector<8x32xf32>
    %348 = arith.subf %345, %347 : vector<8x32xf32>
    %349 = vector.broadcast %30 : f32 to vector<8x32xf32>
    %350 = arith.cmpf ogt, %348, %349 : vector<8x32xf32>
    %351 = arith.extui %350 : vector<8x32xi1> to vector<8x32xi32>
    %352 = arith.sitofp %351 : vector<8x32xi32> to vector<8x32xf32>
    %cst_83 = arith.constant dense<0.000000e+00> : vector<8x32xf32>
    %353 = tpu.matmul %352, %3, %cst_83 {dimension_numbers = #tpu.dot_dimension_numbers<[1], [0], [0], [1], [0, 0, 1, 1], [], []>} : vector<8x32xf32>, vector<32x32xf32>, vector<8x32xf32> -> vector<8x32xf32>
    %354 = arith.addf %353, %13 : vector<8x32xf32>
    %355 = vector.broadcast %31 : f32 to vector<8x32xf32>
    %356 = arith.cmpf ogt, %293, %355 : vector<8x32xf32>
    %357 = arith.extui %356 : vector<8x32xi1> to vector<8x32xi32>
    %358 = arith.sitofp %357 : vector<8x32xi32> to vector<8x32xf32>
    %359 = vector.broadcast %25 : f32 to vector<8x32xf32>
    %360 = arith.mulf %359, %293 : vector<8x32xf32>
    %361 = arith.addf %360, %354 : vector<8x32xf32>
    %362 = vector.broadcast %31 : f32 to vector<8x32xf32>
    %363 = arith.mulf %358, %362 : vector<8x32xf32>
    %364 = arith.subf %361, %363 : vector<8x32xf32>
    %365 = vector.broadcast %31 : f32 to vector<8x32xf32>
    %366 = arith.cmpf ogt, %364, %365 : vector<8x32xf32>
    %367 = arith.extui %366 : vector<8x32xi1> to vector<8x32xi32>
    %368 = arith.sitofp %367 : vector<8x32xi32> to vector<8x32xf32>
    %cst_84 = arith.constant dense<0.000000e+00> : vector<8x10xf32>
    %369 = tpu.matmul %368, %4, %cst_84 {dimension_numbers = #tpu.dot_dimension_numbers<[1], [0], [0], [1], [0, 0, 1, 1], [], []>} : vector<8x32xf32>, vector<32x10xf32>, vector<8x10xf32> -> vector<8x10xf32>
    %370 = arith.addf %369, %16 : vector<8x10xf32>
    %371 = vector.broadcast %32 : f32 to vector<8x10xf32>
    %372 = arith.cmpf ogt, %309, %371 : vector<8x10xf32>
    %373 = arith.extui %372 : vector<8x10xi1> to vector<8x10xi32>
    %374 = arith.sitofp %373 : vector<8x10xi32> to vector<8x10xf32>
    %375 = vector.broadcast %28 : f32 to vector<8x10xf32>
    %376 = arith.mulf %375, %309 : vector<8x10xf32>
    %377 = arith.addf %376, %370 : vector<8x10xf32>
    %378 = vector.broadcast %32 : f32 to vector<8x10xf32>
    %379 = arith.mulf %374, %378 : vector<8x10xf32>
    %380 = arith.subf %377, %379 : vector<8x10xf32>
    %381 = vector.broadcast %32 : f32 to vector<8x10xf32>
    %382 = arith.cmpf ogt, %380, %381 : vector<8x10xf32>
    %383 = arith.extui %382 : vector<8x10xi1> to vector<8x10xi32>
    %384 = arith.sitofp %383 : vector<8x10xi32> to vector<8x10xf32>
    %c4 = arith.constant 4 : index
    %c0_85 = arith.constant 0 : index
    %c0_86 = arith.constant 0 : index
    %385 = vector.load %arg12[%c4, %c0_85, %c0_86] : memref<8x8x10xf32, #tpu.memory_space<vmem>>, vector<1x8x10xf32>
    %386 = vector.shape_cast %385 : vector<1x8x10xf32> to vector<8x10xf32>
    %387 = vector.shape_cast %370 : vector<8x10xf32> to vector<1x8x10xf32>
    tpu.vector_store %arg12[%c4, %c0_85, %c0_86], %387 {strides = array<i32>} : memref<8x8x10xf32, #tpu.memory_space<vmem>>, vector<1x8x10xf32>,
    %c4_87 = arith.constant 4 : index
    %c0_88 = arith.constant 0 : index
    %c0_89 = arith.constant 0 : index
    %388 = vector.load %arg13[%c4_87, %c0_88, %c0_89] : memref<8x8x10xf32, #tpu.memory_space<vmem>>, vector<1x8x10xf32>
    %389 = vector.shape_cast %388 : vector<1x8x10xf32> to vector<8x10xf32>
    %390 = vector.shape_cast %384 : vector<8x10xf32> to vector<1x8x10xf32>
    tpu.vector_store %arg13[%c4_87, %c0_88, %c0_89], %390 {strides = array<i32>} : memref<8x8x10xf32, #tpu.memory_space<vmem>>, vector<1x8x10xf32>,
    %c4_90 = arith.constant 4 : index
    %c0_91 = arith.constant 0 : index
    %c0_92 = arith.constant 0 : index
    %391 = vector.load %arg14[%c4_90, %c0_91, %c0_92] : memref<8x8x10xf32, #tpu.memory_space<vmem>>, vector<1x8x10xf32>
    %392 = vector.shape_cast %391 : vector<1x8x10xf32> to vector<8x10xf32>
    %393 = vector.shape_cast %380 : vector<8x10xf32> to vector<1x8x10xf32>
    tpu.vector_store %arg14[%c4_90, %c0_91, %c0_92], %393 {strides = array<i32>} : memref<8x8x10xf32, #tpu.memory_space<vmem>>, vector<1x8x10xf32>,
    %394 = vector.broadcast %29 : f32 to vector<8x32xf32>
    %395 = arith.cmpf ogt, %332, %394 : vector<8x32xf32>
    %396 = arith.extui %395 : vector<8x32xi1> to vector<8x32xi32>
    %397 = arith.sitofp %396 : vector<8x32xi32> to vector<8x32xf32>
    %398 = vector.broadcast %19 : f32 to vector<8x32xf32>
    %399 = arith.mulf %398, %332 : vector<8x32xf32>
    %400 = arith.addf %399, %34 : vector<8x32xf32>
    %401 = vector.broadcast %29 : f32 to vector<8x32xf32>
    %402 = arith.mulf %397, %401 : vector<8x32xf32>
    %403 = arith.subf %400, %402 : vector<8x32xf32>
    %404 = vector.broadcast %29 : f32 to vector<8x32xf32>
    %405 = arith.cmpf ogt, %403, %404 : vector<8x32xf32>
    %406 = arith.extui %405 : vector<8x32xi1> to vector<8x32xi32>
    %407 = arith.sitofp %406 : vector<8x32xi32> to vector<8x32xf32>
    %cst_93 = arith.constant dense<0.000000e+00> : vector<8x32xf32>
    %408 = tpu.matmul %407, %2, %cst_93 {dimension_numbers = #tpu.dot_dimension_numbers<[1], [0], [0], [1], [0, 0, 1, 1], [], []>} : vector<8x32xf32>, vector<32x32xf32>, vector<8x32xf32> -> vector<8x32xf32>
    %409 = arith.addf %408, %10 : vector<8x32xf32>
    %410 = vector.broadcast %30 : f32 to vector<8x32xf32>
    %411 = arith.cmpf ogt, %348, %410 : vector<8x32xf32>
    %412 = arith.extui %411 : vector<8x32xi1> to vector<8x32xi32>
    %413 = arith.sitofp %412 : vector<8x32xi32> to vector<8x32xf32>
    %414 = vector.broadcast %22 : f32 to vector<8x32xf32>
    %415 = arith.mulf %414, %348 : vector<8x32xf32>
    %416 = arith.addf %415, %409 : vector<8x32xf32>
    %417 = vector.broadcast %30 : f32 to vector<8x32xf32>
    %418 = arith.mulf %413, %417 : vector<8x32xf32>
    %419 = arith.subf %416, %418 : vector<8x32xf32>
    %420 = vector.broadcast %30 : f32 to vector<8x32xf32>
    %421 = arith.cmpf ogt, %419, %420 : vector<8x32xf32>
    %422 = arith.extui %421 : vector<8x32xi1> to vector<8x32xi32>
    %423 = arith.sitofp %422 : vector<8x32xi32> to vector<8x32xf32>
    %cst_94 = arith.constant dense<0.000000e+00> : vector<8x32xf32>
    %424 = tpu.matmul %423, %3, %cst_94 {dimension_numbers = #tpu.dot_dimension_numbers<[1], [0], [0], [1], [0, 0, 1, 1], [], []>} : vector<8x32xf32>, vector<32x32xf32>, vector<8x32xf32> -> vector<8x32xf32>
    %425 = arith.addf %424, %13 : vector<8x32xf32>
    %426 = vector.broadcast %31 : f32 to vector<8x32xf32>
    %427 = arith.cmpf ogt, %364, %426 : vector<8x32xf32>
    %428 = arith.extui %427 : vector<8x32xi1> to vector<8x32xi32>
    %429 = arith.sitofp %428 : vector<8x32xi32> to vector<8x32xf32>
    %430 = vector.broadcast %25 : f32 to vector<8x32xf32>
    %431 = arith.mulf %430, %364 : vector<8x32xf32>
    %432 = arith.addf %431, %425 : vector<8x32xf32>
    %433 = vector.broadcast %31 : f32 to vector<8x32xf32>
    %434 = arith.mulf %429, %433 : vector<8x32xf32>
    %435 = arith.subf %432, %434 : vector<8x32xf32>
    %436 = vector.broadcast %31 : f32 to vector<8x32xf32>
    %437 = arith.cmpf ogt, %435, %436 : vector<8x32xf32>
    %438 = arith.extui %437 : vector<8x32xi1> to vector<8x32xi32>
    %439 = arith.sitofp %438 : vector<8x32xi32> to vector<8x32xf32>
    %cst_95 = arith.constant dense<0.000000e+00> : vector<8x10xf32>
    %440 = tpu.matmul %439, %4, %cst_95 {dimension_numbers = #tpu.dot_dimension_numbers<[1], [0], [0], [1], [0, 0, 1, 1], [], []>} : vector<8x32xf32>, vector<32x10xf32>, vector<8x10xf32> -> vector<8x10xf32>
    %441 = arith.addf %440, %16 : vector<8x10xf32>
    %442 = vector.broadcast %32 : f32 to vector<8x10xf32>
    %443 = arith.cmpf ogt, %380, %442 : vector<8x10xf32>
    %444 = arith.extui %443 : vector<8x10xi1> to vector<8x10xi32>
    %445 = arith.sitofp %444 : vector<8x10xi32> to vector<8x10xf32>
    %446 = vector.broadcast %28 : f32 to vector<8x10xf32>
    %447 = arith.mulf %446, %380 : vector<8x10xf32>
    %448 = arith.addf %447, %441 : vector<8x10xf32>
    %449 = vector.broadcast %32 : f32 to vector<8x10xf32>
    %450 = arith.mulf %445, %449 : vector<8x10xf32>
    %451 = arith.subf %448, %450 : vector<8x10xf32>
    %452 = vector.broadcast %32 : f32 to vector<8x10xf32>
    %453 = arith.cmpf ogt, %451, %452 : vector<8x10xf32>
    %454 = arith.extui %453 : vector<8x10xi1> to vector<8x10xi32>
    %455 = arith.sitofp %454 : vector<8x10xi32> to vector<8x10xf32>
    %c5 = arith.constant 5 : index
    %c0_96 = arith.constant 0 : index
    %c0_97 = arith.constant 0 : index
    %456 = vector.load %arg12[%c5, %c0_96, %c0_97] : memref<8x8x10xf32, #tpu.memory_space<vmem>>, vector<1x8x10xf32>
    %457 = vector.shape_cast %456 : vector<1x8x10xf32> to vector<8x10xf32>
    %458 = vector.shape_cast %441 : vector<8x10xf32> to vector<1x8x10xf32>
    tpu.vector_store %arg12[%c5, %c0_96, %c0_97], %458 {strides = array<i32>} : memref<8x8x10xf32, #tpu.memory_space<vmem>>, vector<1x8x10xf32>,
    %c5_98 = arith.constant 5 : index
    %c0_99 = arith.constant 0 : index
    %c0_100 = arith.constant 0 : index
    %459 = vector.load %arg13[%c5_98, %c0_99, %c0_100] : memref<8x8x10xf32, #tpu.memory_space<vmem>>, vector<1x8x10xf32>
    %460 = vector.shape_cast %459 : vector<1x8x10xf32> to vector<8x10xf32>
    %461 = vector.shape_cast %455 : vector<8x10xf32> to vector<1x8x10xf32>
    tpu.vector_store %arg13[%c5_98, %c0_99, %c0_100], %461 {strides = array<i32>} : memref<8x8x10xf32, #tpu.memory_space<vmem>>, vector<1x8x10xf32>,
    %c5_101 = arith.constant 5 : index
    %c0_102 = arith.constant 0 : index
    %c0_103 = arith.constant 0 : index
    %462 = vector.load %arg14[%c5_101, %c0_102, %c0_103] : memref<8x8x10xf32, #tpu.memory_space<vmem>>, vector<1x8x10xf32>
    %463 = vector.shape_cast %462 : vector<1x8x10xf32> to vector<8x10xf32>
    %464 = vector.shape_cast %451 : vector<8x10xf32> to vector<1x8x10xf32>
    tpu.vector_store %arg14[%c5_101, %c0_102, %c0_103], %464 {strides = array<i32>} : memref<8x8x10xf32, #tpu.memory_space<vmem>>, vector<1x8x10xf32>,
    %465 = vector.broadcast %29 : f32 to vector<8x32xf32>
    %466 = arith.cmpf ogt, %403, %465 : vector<8x32xf32>
    %467 = arith.extui %466 : vector<8x32xi1> to vector<8x32xi32>
    %468 = arith.sitofp %467 : vector<8x32xi32> to vector<8x32xf32>
    %469 = vector.broadcast %19 : f32 to vector<8x32xf32>
    %470 = arith.mulf %469, %403 : vector<8x32xf32>
    %471 = arith.addf %470, %34 : vector<8x32xf32>
    %472 = vector.broadcast %29 : f32 to vector<8x32xf32>
    %473 = arith.mulf %468, %472 : vector<8x32xf32>
    %474 = arith.subf %471, %473 : vector<8x32xf32>
    %475 = vector.broadcast %29 : f32 to vector<8x32xf32>
    %476 = arith.cmpf ogt, %474, %475 : vector<8x32xf32>
    %477 = arith.extui %476 : vector<8x32xi1> to vector<8x32xi32>
    %478 = arith.sitofp %477 : vector<8x32xi32> to vector<8x32xf32>
    %cst_104 = arith.constant dense<0.000000e+00> : vector<8x32xf32>
    %479 = tpu.matmul %478, %2, %cst_104 {dimension_numbers = #tpu.dot_dimension_numbers<[1], [0], [0], [1], [0, 0, 1, 1], [], []>} : vector<8x32xf32>, vector<32x32xf32>, vector<8x32xf32> -> vector<8x32xf32>
    %480 = arith.addf %479, %10 : vector<8x32xf32>
    %481 = vector.broadcast %30 : f32 to vector<8x32xf32>
    %482 = arith.cmpf ogt, %419, %481 : vector<8x32xf32>
    %483 = arith.extui %482 : vector<8x32xi1> to vector<8x32xi32>
    %484 = arith.sitofp %483 : vector<8x32xi32> to vector<8x32xf32>
    %485 = vector.broadcast %22 : f32 to vector<8x32xf32>
    %486 = arith.mulf %485, %419 : vector<8x32xf32>
    %487 = arith.addf %486, %480 : vector<8x32xf32>
    %488 = vector.broadcast %30 : f32 to vector<8x32xf32>
    %489 = arith.mulf %484, %488 : vector<8x32xf32>
    %490 = arith.subf %487, %489 : vector<8x32xf32>
    %491 = vector.broadcast %30 : f32 to vector<8x32xf32>
    %492 = arith.cmpf ogt, %490, %491 : vector<8x32xf32>
    %493 = arith.extui %492 : vector<8x32xi1> to vector<8x32xi32>
    %494 = arith.sitofp %493 : vector<8x32xi32> to vector<8x32xf32>
    %cst_105 = arith.constant dense<0.000000e+00> : vector<8x32xf32>
    %495 = tpu.matmul %494, %3, %cst_105 {dimension_numbers = #tpu.dot_dimension_numbers<[1], [0], [0], [1], [0, 0, 1, 1], [], []>} : vector<8x32xf32>, vector<32x32xf32>, vector<8x32xf32> -> vector<8x32xf32>
    %496 = arith.addf %495, %13 : vector<8x32xf32>
    %497 = vector.broadcast %31 : f32 to vector<8x32xf32>
    %498 = arith.cmpf ogt, %435, %497 : vector<8x32xf32>
    %499 = arith.extui %498 : vector<8x32xi1> to vector<8x32xi32>
    %500 = arith.sitofp %499 : vector<8x32xi32> to vector<8x32xf32>
    %501 = vector.broadcast %25 : f32 to vector<8x32xf32>
    %502 = arith.mulf %501, %435 : vector<8x32xf32>
    %503 = arith.addf %502, %496 : vector<8x32xf32>
    %504 = vector.broadcast %31 : f32 to vector<8x32xf32>
    %505 = arith.mulf %500, %504 : vector<8x32xf32>
    %506 = arith.subf %503, %505 : vector<8x32xf32>
    %507 = vector.broadcast %31 : f32 to vector<8x32xf32>
    %508 = arith.cmpf ogt, %506, %507 : vector<8x32xf32>
    %509 = arith.extui %508 : vector<8x32xi1> to vector<8x32xi32>
    %510 = arith.sitofp %509 : vector<8x32xi32> to vector<8x32xf32>
    %cst_106 = arith.constant dense<0.000000e+00> : vector<8x10xf32>
    %511 = tpu.matmul %510, %4, %cst_106 {dimension_numbers = #tpu.dot_dimension_numbers<[1], [0], [0], [1], [0, 0, 1, 1], [], []>} : vector<8x32xf32>, vector<32x10xf32>, vector<8x10xf32> -> vector<8x10xf32>
    %512 = arith.addf %511, %16 : vector<8x10xf32>
    %513 = vector.broadcast %32 : f32 to vector<8x10xf32>
    %514 = arith.cmpf ogt, %451, %513 : vector<8x10xf32>
    %515 = arith.extui %514 : vector<8x10xi1> to vector<8x10xi32>
    %516 = arith.sitofp %515 : vector<8x10xi32> to vector<8x10xf32>
    %517 = vector.broadcast %28 : f32 to vector<8x10xf32>
    %518 = arith.mulf %517, %451 : vector<8x10xf32>
    %519 = arith.addf %518, %512 : vector<8x10xf32>
    %520 = vector.broadcast %32 : f32 to vector<8x10xf32>
    %521 = arith.mulf %516, %520 : vector<8x10xf32>
    %522 = arith.subf %519, %521 : vector<8x10xf32>
    %523 = vector.broadcast %32 : f32 to vector<8x10xf32>
    %524 = arith.cmpf ogt, %522, %523 : vector<8x10xf32>
    %525 = arith.extui %524 : vector<8x10xi1> to vector<8x10xi32>
    %526 = arith.sitofp %525 : vector<8x10xi32> to vector<8x10xf32>
    %c6 = arith.constant 6 : index
    %c0_107 = arith.constant 0 : index
    %c0_108 = arith.constant 0 : index
    %527 = vector.load %arg12[%c6, %c0_107, %c0_108] : memref<8x8x10xf32, #tpu.memory_space<vmem>>, vector<1x8x10xf32>
    %528 = vector.shape_cast %527 : vector<1x8x10xf32> to vector<8x10xf32>
    %529 = vector.shape_cast %512 : vector<8x10xf32> to vector<1x8x10xf32>
    tpu.vector_store %arg12[%c6, %c0_107, %c0_108], %529 {strides = array<i32>} : memref<8x8x10xf32, #tpu.memory_space<vmem>>, vector<1x8x10xf32>,
    %c6_109 = arith.constant 6 : index
    %c0_110 = arith.constant 0 : index
    %c0_111 = arith.constant 0 : index
    %530 = vector.load %arg13[%c6_109, %c0_110, %c0_111] : memref<8x8x10xf32, #tpu.memory_space<vmem>>, vector<1x8x10xf32>
    %531 = vector.shape_cast %530 : vector<1x8x10xf32> to vector<8x10xf32>
    %532 = vector.shape_cast %526 : vector<8x10xf32> to vector<1x8x10xf32>
    tpu.vector_store %arg13[%c6_109, %c0_110, %c0_111], %532 {strides = array<i32>} : memref<8x8x10xf32, #tpu.memory_space<vmem>>, vector<1x8x10xf32>,
    %c6_112 = arith.constant 6 : index
    %c0_113 = arith.constant 0 : index
    %c0_114 = arith.constant 0 : index
    %533 = vector.load %arg14[%c6_112, %c0_113, %c0_114] : memref<8x8x10xf32, #tpu.memory_space<vmem>>, vector<1x8x10xf32>
    %534 = vector.shape_cast %533 : vector<1x8x10xf32> to vector<8x10xf32>
    %535 = vector.shape_cast %522 : vector<8x10xf32> to vector<1x8x10xf32>
    tpu.vector_store %arg14[%c6_112, %c0_113, %c0_114], %535 {strides = array<i32>} : memref<8x8x10xf32, #tpu.memory_space<vmem>>, vector<1x8x10xf32>,
    %536 = vector.broadcast %29 : f32 to vector<8x32xf32>
    %537 = arith.cmpf ogt, %474, %536 : vector<8x32xf32>
    %538 = arith.extui %537 : vector<8x32xi1> to vector<8x32xi32>
    %539 = arith.sitofp %538 : vector<8x32xi32> to vector<8x32xf32>
    %540 = vector.broadcast %19 : f32 to vector<8x32xf32>
    %541 = arith.mulf %540, %474 : vector<8x32xf32>
    %542 = arith.addf %541, %34 : vector<8x32xf32>
    %543 = vector.broadcast %29 : f32 to vector<8x32xf32>
    %544 = arith.mulf %539, %543 : vector<8x32xf32>
    %545 = arith.subf %542, %544 : vector<8x32xf32>
    %546 = vector.broadcast %29 : f32 to vector<8x32xf32>
    %547 = arith.cmpf ogt, %545, %546 : vector<8x32xf32>
    %548 = arith.extui %547 : vector<8x32xi1> to vector<8x32xi32>
    %549 = arith.sitofp %548 : vector<8x32xi32> to vector<8x32xf32>
    %cst_115 = arith.constant dense<0.000000e+00> : vector<8x32xf32>
    %550 = tpu.matmul %549, %2, %cst_115 {dimension_numbers = #tpu.dot_dimension_numbers<[1], [0], [0], [1], [0, 0, 1, 1], [], []>} : vector<8x32xf32>, vector<32x32xf32>, vector<8x32xf32> -> vector<8x32xf32>
    %551 = arith.addf %550, %10 : vector<8x32xf32>
    %552 = vector.broadcast %30 : f32 to vector<8x32xf32>
    %553 = arith.cmpf ogt, %490, %552 : vector<8x32xf32>
    %554 = arith.extui %553 : vector<8x32xi1> to vector<8x32xi32>
    %555 = arith.sitofp %554 : vector<8x32xi32> to vector<8x32xf32>
    %556 = vector.broadcast %22 : f32 to vector<8x32xf32>
    %557 = arith.mulf %556, %490 : vector<8x32xf32>
    %558 = arith.addf %557, %551 : vector<8x32xf32>
    %559 = vector.broadcast %30 : f32 to vector<8x32xf32>
    %560 = arith.mulf %555, %559 : vector<8x32xf32>
    %561 = arith.subf %558, %560 : vector<8x32xf32>
    %562 = vector.broadcast %30 : f32 to vector<8x32xf32>
    %563 = arith.cmpf ogt, %561, %562 : vector<8x32xf32>
    %564 = arith.extui %563 : vector<8x32xi1> to vector<8x32xi32>
    %565 = arith.sitofp %564 : vector<8x32xi32> to vector<8x32xf32>
    %cst_116 = arith.constant dense<0.000000e+00> : vector<8x32xf32>
    %566 = tpu.matmul %565, %3, %cst_116 {dimension_numbers = #tpu.dot_dimension_numbers<[1], [0], [0], [1], [0, 0, 1, 1], [], []>} : vector<8x32xf32>, vector<32x32xf32>, vector<8x32xf32> -> vector<8x32xf32>
    %567 = arith.addf %566, %13 : vector<8x32xf32>
    %568 = vector.broadcast %31 : f32 to vector<8x32xf32>
    %569 = arith.cmpf ogt, %506, %568 : vector<8x32xf32>
    %570 = arith.extui %569 : vector<8x32xi1> to vector<8x32xi32>
    %571 = arith.sitofp %570 : vector<8x32xi32> to vector<8x32xf32>
    %572 = vector.broadcast %25 : f32 to vector<8x32xf32>
    %573 = arith.mulf %572, %506 : vector<8x32xf32>
    %574 = arith.addf %573, %567 : vector<8x32xf32>
    %575 = vector.broadcast %31 : f32 to vector<8x32xf32>
    %576 = arith.mulf %571, %575 : vector<8x32xf32>
    %577 = arith.subf %574, %576 : vector<8x32xf32>
    %578 = vector.broadcast %31 : f32 to vector<8x32xf32>
    %579 = arith.cmpf ogt, %577, %578 : vector<8x32xf32>
    %580 = arith.extui %579 : vector<8x32xi1> to vector<8x32xi32>
    %581 = arith.sitofp %580 : vector<8x32xi32> to vector<8x32xf32>
    %cst_117 = arith.constant dense<0.000000e+00> : vector<8x10xf32>
    %582 = tpu.matmul %581, %4, %cst_117 {dimension_numbers = #tpu.dot_dimension_numbers<[1], [0], [0], [1], [0, 0, 1, 1], [], []>} : vector<8x32xf32>, vector<32x10xf32>, vector<8x10xf32> -> vector<8x10xf32>
    %583 = arith.addf %582, %16 : vector<8x10xf32>
    %584 = vector.broadcast %32 : f32 to vector<8x10xf32>
    %585 = arith.cmpf ogt, %522, %584 : vector<8x10xf32>
    %586 = arith.extui %585 : vector<8x10xi1> to vector<8x10xi32>
    %587 = arith.sitofp %586 : vector<8x10xi32> to vector<8x10xf32>
    %588 = vector.broadcast %28 : f32 to vector<8x10xf32>
    %589 = arith.mulf %588, %522 : vector<8x10xf32>
    %590 = arith.addf %589, %583 : vector<8x10xf32>
    %591 = vector.broadcast %32 : f32 to vector<8x10xf32>
    %592 = arith.mulf %587, %591 : vector<8x10xf32>
    %593 = arith.subf %590, %592 : vector<8x10xf32>
    %594 = vector.broadcast %32 : f32 to vector<8x10xf32>
    %595 = arith.cmpf ogt, %593, %594 : vector<8x10xf32>
    %596 = arith.extui %595 : vector<8x10xi1> to vector<8x10xi32>
    %597 = arith.sitofp %596 : vector<8x10xi32> to vector<8x10xf32>
    %c7 = arith.constant 7 : index
    %c0_118 = arith.constant 0 : index
    %c0_119 = arith.constant 0 : index
    %598 = vector.load %arg12[%c7, %c0_118, %c0_119] : memref<8x8x10xf32, #tpu.memory_space<vmem>>, vector<1x8x10xf32>
    %599 = vector.shape_cast %598 : vector<1x8x10xf32> to vector<8x10xf32>
    %600 = vector.shape_cast %583 : vector<8x10xf32> to vector<1x8x10xf32>
    tpu.vector_store %arg12[%c7, %c0_118, %c0_119], %600 {strides = array<i32>} : memref<8x8x10xf32, #tpu.memory_space<vmem>>, vector<1x8x10xf32>,
    %c7_120 = arith.constant 7 : index
    %c0_121 = arith.constant 0 : index
    %c0_122 = arith.constant 0 : index
    %601 = vector.load %arg13[%c7_120, %c0_121, %c0_122] : memref<8x8x10xf32, #tpu.memory_space<vmem>>, vector<1x8x10xf32>
    %602 = vector.shape_cast %601 : vector<1x8x10xf32> to vector<8x10xf32>
    %603 = vector.shape_cast %597 : vector<8x10xf32> to vector<1x8x10xf32>
    tpu.vector_store %arg13[%c7_120, %c0_121, %c0_122], %603 {strides = array<i32>} : memref<8x8x10xf32, #tpu.memory_space<vmem>>, vector<1x8x10xf32>,
    %c7_123 = arith.constant 7 : index
    %c0_124 = arith.constant 0 : index
    %c0_125 = arith.constant 0 : index
    %604 = vector.load %arg14[%c7_123, %c0_124, %c0_125] : memref<8x8x10xf32, #tpu.memory_space<vmem>>, vector<1x8x10xf32>
    %605 = vector.shape_cast %604 : vector<1x8x10xf32> to vector<8x10xf32>
    %606 = vector.shape_cast %593 : vector<8x10xf32> to vector<1x8x10xf32>
    tpu.vector_store %arg14[%c7_123, %c0_124, %c0_125], %606 {strides = array<i32>} : memref<8x8x10xf32, #tpu.memory_space<vmem>>, vector<1x8x10xf32>,
    return
  }
  func.func @transform_0(%arg0: i32) -> i32 {
    %c0_i32 = arith.constant 0 : i32
    %c0_i32_0 = arith.constant 0 : i32
    return %c0_i32 : i32
  }
  func.func @transform_1(%arg0: i32) -> i32 {
    %c0_i32 = arith.constant 0 : i32
    %c0_i32_0 = arith.constant 0 : i32
    return %c0_i32 : i32
  }
  func.func @transform_2(%arg0: i32) -> (i32, i32) {
    %c0_i32 = arith.constant 0 : i32
    %c0_i32_0 = arith.constant 0 : i32
    %c0_i32_1 = arith.constant 0 : i32
    return %c0_i32, %c0_i32_0 : i32, i32
  }
  func.func @transform_3(%arg0: i32) -> (i32, i32) {
    %c0_i32 = arith.constant 0 : i32
    %c0_i32_0 = arith.constant 0 : i32
    %c0_i32_1 = arith.constant 0 : i32
    return %c0_i32, %c0_i32_0 : i32, i32
  }
  func.func @transform_4(%arg0: i32) -> (i32, i32) {
    %c0_i32 = arith.constant 0 : i32
    %c0_i32_0 = arith.constant 0 : i32
    %c0_i32_1 = arith.constant 0 : i32
    return %c0_i32, %c0_i32_0 : i32, i32
  }
  func.func @transform_5(%arg0: i32) -> (i32, i32) {
    %c0_i32 = arith.constant 0 : i32
    %c0_i32_0 = arith.constant 0 : i32
    %c0_i32_1 = arith.constant 0 : i32
    return %c0_i32, %c0_i32_0 : i32, i32
  }
  func.func @transform_6(%arg0: i32) -> (i32, i32) {
    %c0_i32 = arith.constant 0 : i32
    %c0_i32_0 = arith.constant 0 : i32
    %c0_i32_1 = arith.constant 0 : i32
    return %c0_i32, %c0_i32_0 : i32, i32
  }
  func.func @transform_7(%arg0: i32) -> (i32, i32) {
    %c0_i32 = arith.constant 0 : i32
    %c0_i32_0 = arith.constant 0 : i32
    %c0_i32_1 = arith.constant 0 : i32
    return %c0_i32, %c0_i32_0 : i32, i32
  }
  func.func @transform_8(%arg0: i32) -> (i32, i32) {
    %c0_i32 = arith.constant 0 : i32
    %c0_i32_0 = arith.constant 0 : i32
    %c0_i32_1 = arith.constant 0 : i32
    return %c0_i32, %c0_i32_0 : i32, i32
  }
  func.func @transform_9(%arg0: i32) -> (i32, i32) {
    %c0_i32 = arith.constant 0 : i32
    %c0_i32_0 = arith.constant 0 : i32
    %c0_i32_1 = arith.constant 0 : i32
    return %c0_i32, %c0_i32_0 : i32, i32
  }
  func.func @transform_10(%arg0: i32) -> (i32, i32) {
    %c0_i32 = arith.constant 0 : i32
    %c0_i32_0 = arith.constant 0 : i32
    %c0_i32_1 = arith.constant 0 : i32
    return %c0_i32, %c0_i32_0 : i32, i32
  }
  func.func @transform_11(%arg0: i32) -> (i32, i32, i32) {
    %c0_i32 = arith.constant 0 : i32
    %c0_i32_0 = arith.constant 0 : i32
    %c0_i32_1 = arith.constant 0 : i32
    %c0_i32_2 = arith.constant 0 : i32
    return %c0_i32, %c0_i32_0, %c0_i32_1 : i32, i32, i32
  }
  func.func @transform_12(%arg0: i32) -> (i32, i32, i32) {
    %c0_i32 = arith.constant 0 : i32
    %c0_i32_0 = arith.constant 0 : i32
    %c0_i32_1 = arith.constant 0 : i32
    %c0_i32_2 = arith.constant 0 : i32
    return %c0_i32, %c0_i32_0, %c0_i32_1 : i32, i32, i32
  }
  func.func @transform_13(%arg0: i32) -> (i32, i32, i32) {
    %c0_i32 = arith.constant 0 : i32
    %c0_i32_0 = arith.constant 0 : i32
    %c0_i32_1 = arith.constant 0 : i32
    %c0_i32_2 = arith.constant 0 : i32
    return %c0_i32, %c0_i32_0, %c0_i32_1 : i32, i32, i32
  }
}

</mosaic_0001>

<llo_original>
// kernel: ffsnn_forward.1
$region0: #{ffsnn_forward.1}
  #allocation0 [shape = 'u32[]', space=smem, size = 0x4, offset = 0x4, fixed_abs, tag = 'smem constant byte address 0x4 - core index']
  #allocation1 [shape = 'u32[144,128]{1,0:T(1,128)}', space=vmem, size = 0x12000, scoped, tag = 'internal scratch']
  %s0 = inlined_call_operand.hbm [shape: f32[4], index: 0, kind: input, shape index: {}]
  %s1 = inlined_call_operand.hbm [shape: f32[4], index: 1, kind: input, shape index: {}]
  %s2 = inlined_call_operand.hbm [shape: f32[8,16], index: 2, kind: input, shape index: {}]
  %s3 = inlined_call_operand.hbm [shape: f32[16,32], index: 3, kind: input, shape index: {}]
  %s4 = inlined_call_operand.hbm [shape: f32[1,32], index: 4, kind: input, shape index: {}]
  %s5 = inlined_call_operand.vmem [shape: f32[32,32], index: 5, kind: input, shape index: {}]
  %s6 = inlined_call_operand.hbm [shape: f32[1,32], index: 6, kind: input, shape index: {}]
  %s7 = inlined_call_operand.vmem [shape: f32[32,32], index: 7, kind: input, shape index: {}]
  %s8 = inlined_call_operand.hbm [shape: f32[1,32], index: 8, kind: input, shape index: {}]
  %s9 = inlined_call_operand.vmem [shape: f32[32,10], index: 9, kind: input, shape index: {}]
  %s10 = inlined_call_operand.hbm [shape: f32[1,10], index: 10, kind: input, shape index: {}]
  %s11 = inlined_call_operand.hbm [shape: f32[8,8,10], index: 11, kind: output, shape index: {0}]
  %s12 = inlined_call_operand.hbm [shape: f32[8,8,10], index: 12, kind: output, shape index: {1}]
  %s13 = inlined_call_operand.hbm [shape: f32[8,8,10], index: 13, kind: output, shape index: {2}]
  %14 = xla_tuple %s11, %s12, %s13
  %s15 = sld [smem:[#allocation0]]
  $region102: #{ffsnn_forward.1} parent=0
    _
  %s17 = ssub.s32 1, %s15
  %s18 = scalar_select 0, %s17, %s15
  $region1: #{ffsnn_forward.1} parent=0
    #allocation2 [shape = 'u8[512]{0}', space=smem, size = 0x200, scoped, tag = 'input window, operand 0, single buffered']
    #allocation3 [shape = 's32[1]{0}', space=sflag, size = 0x4, scoped, tag = 'scoped memory for ffsnn_forward.1']
    #allocation4 [shape = 's32[1]{0}', space=sflag, size = 0x4, scoped, tag = 'scoped memory for ffsnn_forward.1']
    #allocation5 [shape = 's32[1]{0}', space=sflag, size = 0x4, scoped, tag = 'scoped memory for ffsnn_forward.1']
    #allocation6 [shape = 'u8[512]{0}', space=smem, size = 0x200, scoped, tag = 'input window, operand 1, single buffered']
    #allocation7 [shape = 's32[1]{0}', space=sflag, size = 0x4, scoped, tag = 'scoped memory for ffsnn_forward.1']
    #allocation8 [shape = 'u8[4096]{0}', space=vmem, size = 0x1000, scoped, tag = 'input window, operand 2, single buffered']
    #allocation9 [shape = 'u8[8192]{0}', space=vmem, size = 0x2000, scoped, tag = 'input window, operand 3, single buffered']
    #allocation10 [shape = 's32[1]{0}', space=sflag, size = 0x4, scoped, tag = 'scoped memory for ffsnn_forward.1']
    #allocation11 [shape = 'u8[512]{0}', space=vmem, size = 0x400, scoped, tag = 'input window, operand 4, single buffered']
    #allocation12 [shape = 'u8[512]{0}', space=vmem, size = 0x400, scoped, tag = 'input window, operand 6, single buffered']
    #allocation13 [shape = 's32[1]{0}', space=sflag, size = 0x4, scoped, tag = 'scoped memory for ffsnn_forward.1']
    #allocation14 [shape = 'u8[512]{0}', space=vmem, size = 0x400, scoped, tag = 'input window, operand 8, single buffered']
    #allocation15 [shape = 'u8[512]{0}', space=vmem, size = 0x400, scoped, tag = 'input window, operand 10, single buffered']
    #allocation16 [shape = 's32[1]{0}', space=sflag, size = 0x4, scoped, tag = 'scoped memory for ffsnn_forward.1']
    #allocation17 [shape = 'u8[32768]{0}', space=vmem, size = 0x8000, scoped, tag = 'output window, operand 0, single buffered']
    #allocation18 [shape = 'u8[32768]{0}', space=vmem, size = 0x8000, scoped, tag = 'output window, operand 1, single buffered']
    #allocation19 [shape = 's32[1]{0}', space=sflag, size = 0x4, scoped, tag = 'scoped memory for ffsnn_forward.1']
    #allocation20 [shape = 'u8[32768]{0}', space=vmem, size = 0x8000, scoped, tag = 'output window, operand 2, single buffered']
    %19 = vsyncpa [#allocation5], 0
    %20 = vsyncpa [#allocation7], 0
    %21 = vsyncpa [#allocation3], 0
    %22 = vsyncpa [#allocation10], 0
    %23 = vsyncpa [#allocation13], 0
    %24 = vsyncpa [#allocation16], 0
    %25 = vsyncpa [#allocation4], 0
    %26 = vsyncpa [#allocation19], 0
    // Predicated region
    $region2: #{ffsnn_forward.1} parent=1 // pred_check
      _
    $region3: #{ffsnn_forward.1} parent=1 // pred_check_branch
      %28 = sbr.rel (0) target = $region5
    $region4: #{ffsnn_forward.1} parent=1 // pred_region
      %s30 = ssub.s32 16, 16
      %31 = vsyncadd [#allocation5], %s30
      %34 = dma.hbm_to_smem %s0, 16, [#allocation2], [#allocation5]
    $region5: #{ffsnn_forward.1} parent=1 // pred_fallthru
      _
    // Predicated region
    $region6: #{ffsnn_forward.1} parent=1 // pred_check
      _
    $region7: #{ffsnn_forward.1} parent=1 // pred_check_branch
      %36 = sbr.rel (0) target = $region9
    $region8: #{ffsnn_forward.1} parent=1 // pred_region
      %s38 = ssub.s32 16, 16
      %39 = vsyncadd [#allocation7], %s38
      %42 = dma.hbm_to_smem %s1, 16, [#allocation6], [#allocation7]
    $region9: #{ffsnn_forward.1} parent=1 // pred_fallthru
      _
    // Predicated region
    $region10: #{ffsnn_forward.1} parent=1 // pred_check
      _
    $region11: #{ffsnn_forward.1} parent=1 // pred_check_branch
      %44 = sbr.rel (0) target = $region13
    $region12: #{ffsnn_forward.1} parent=1 // pred_region
      %s46 = ssub.s32 128, 128
      %47 = vsyncadd [#allocation3], %s46
      %s49 = sshll.u32 [#allocation8], 4
      %s50 = int_to_ptr.vmem [resolvable:$true] %s49
      %52 = dma.hbm_to_vmem [thread:$0]  %s2, 128, %s50, [#allocation3]
    $region13: #{ffsnn_forward.1} parent=1 // pred_fallthru
      _
    // Predicated region
    $region14: #{ffsnn_forward.1} parent=1 // pred_check
      _
    $region15: #{ffsnn_forward.1} parent=1 // pred_check_branch
      %54 = sbr.rel (0) target = $region17
    $region16: #{ffsnn_forward.1} parent=1 // pred_region
      %s56 = ssub.s32 256, 256
      %57 = vsyncadd [#allocation10], %s56
      %s58 = sshll.u32 [#allocation9], 4
      %s59 = int_to_ptr.vmem [resolvable:$true] %s58
      %64 = dma.hbm_to_vmem [thread:$0]  %s3, 256, %s59, [#allocation10], 128, 128, 8
    $region17: #{ffsnn_forward.1} parent=1 // pred_fallthru
      _
    // Predicated region
    $region18: #{ffsnn_forward.1} parent=1 // pred_check
      _
    $region19: #{ffsnn_forward.1} parent=1 // pred_check_branch
      %66 = sbr.rel (0) target = $region21
    $region20: #{ffsnn_forward.1} parent=1 // pred_region
      %s68 = ssub.s32 16, 16
      %69 = vsyncadd [#allocation10], %s68
      %s71 = sshll.u32 [#allocation11], 4
      %s72 = int_to_ptr.vmem [resolvable:$true] %s71
      %74 = dma.hbm_to_vmem [thread:$0]  %s4, 16, %s72, [#allocation10]
    $region21: #{ffsnn_forward.1} parent=1 // pred_fallthru
      _
    // Predicated region
    $region22: #{ffsnn_forward.1} parent=1 // pred_check
      _
    $region23: #{ffsnn_forward.1} parent=1 // pred_check_branch
      %76 = sbr.rel (0) target = $region25
    $region24: #{ffsnn_forward.1} parent=1 // pred_region
      _
    $region25: #{ffsnn_forward.1} parent=1 // pred_fallthru
      _
    // Predicated region
    $region26: #{ffsnn_forward.1} parent=1 // pred_check
      _
    $region27: #{ffsnn_forward.1} parent=1 // pred_check_branch
      %78 = sbr.rel (0) target = $region29
    $region28: #{ffsnn_forward.1} parent=1 // pred_region
      %s80 = ssub.s32 16, 16
      %81 = vsyncadd [#allocation13], %s80
      %s83 = sshll.u32 [#allocation12], 4
      %s84 = int_to_ptr.vmem [resolvable:$true] %s83
      %86 = dma.hbm_to_vmem [thread:$0]  %s6, 16, %s84, [#allocation13]
    $region29: #{ffsnn_forward.1} parent=1 // pred_fallthru
      _
    // Predicated region
    $region30: #{ffsnn_forward.1} parent=1 // pred_check
      _
    $region31: #{ffsnn_forward.1} parent=1 // pred_check_branch
      %88 = sbr.rel (0) target = $region33
    $region32: #{ffsnn_forward.1} parent=1 // pred_region
      _
    $region33: #{ffsnn_forward.1} parent=1 // pred_fallthru
      _
    // Predicated region
    $region34: #{ffsnn_forward.1} parent=1 // pred_check
      _
    $region35: #{ffsnn_forward.1} parent=1 // pred_check_branch
      %90 = sbr.rel (0) target = $region37
    $region36: #{ffsnn_forward.1} parent=1 // pred_region
      %s92 = ssub.s32 16, 16
      %93 = vsyncadd [#allocation13], %s92
      %s95 = sshll.u32 [#allocation14], 4
      %s96 = int_to_ptr.vmem [resolvable:$true] %s95
      %98 = dma.hbm_to_vmem [thread:$0]  %s8, 16, %s96, [#allocation13]
    $region37: #{ffsnn_forward.1} parent=1 // pred_fallthru
      _
    // Predicated region
    $region38: #{ffsnn_forward.1} parent=1 // pred_check
      _
    $region39: #{ffsnn_forward.1} parent=1 // pred_check_branch
      %100 = sbr.rel (0) target = $region41
    $region40: #{ffsnn_forward.1} parent=1 // pred_region
      _
    $region41: #{ffsnn_forward.1} parent=1 // pred_fallthru
      _
    // Predicated region
    $region42: #{ffsnn_forward.1} parent=1 // pred_check
      _
    $region43: #{ffsnn_forward.1} parent=1 // pred_check_branch
      %102 = sbr.rel (0) target = $region45
    $region44: #{ffsnn_forward.1} parent=1 // pred_region
      %s104 = ssub.s32 16, 16
      %105 = vsyncadd [#allocation16], %s104
      %s107 = sshll.u32 [#allocation15], 4
      %s108 = int_to_ptr.vmem [resolvable:$true] %s107
      %110 = dma.hbm_to_vmem [thread:$0]  %s10, 16, %s108, [#allocation16]
    $region45: #{ffsnn_forward.1} parent=1 // pred_fallthru
      _
    // Predicated region
    $region46: #{ffsnn_forward.1} parent=1 // pred_check
      _
    $region47: #{ffsnn_forward.1} parent=1 // pred_check_branch
      %112 = sbr.rel (0) target = $region49
    $region48: #{ffsnn_forward.1} parent=1 // pred_region
      %113 = dma.done [#allocation5], 16
    $region49: #{ffsnn_forward.1} parent=1 // pred_fallthru
      _
    // Predicated region
    $region50: #{ffsnn_forward.1} parent=1 // pred_check
      _
    $region51: #{ffsnn_forward.1} parent=1 // pred_check_branch
      %115 = sbr.rel (0) target = $region53
    $region52: #{ffsnn_forward.1} parent=1 // pred_region
      %116 = dma.done [#allocation7], 16
    $region53: #{ffsnn_forward.1} parent=1 // pred_fallthru
      _
    // Predicated region
    $region54: #{ffsnn_forward.1} parent=1 // pred_check
      _
    $region55: #{ffsnn_forward.1} parent=1 // pred_check_branch
      %118 = sbr.rel (0) target = $region57
    $region56: #{ffsnn_forward.1} parent=1 // pred_region
      %119 = dma.done [#allocation3], 128
    $region57: #{ffsnn_forward.1} parent=1 // pred_fallthru
      _
    // Predicated region
    $region58: #{ffsnn_forward.1} parent=1 // pred_check
      _
    $region59: #{ffsnn_forward.1} parent=1 // pred_check_branch
      %121 = sbr.rel (0) target = $region61
    $region60: #{ffsnn_forward.1} parent=1 // pred_region
      %122 = dma.done [#allocation10], 256
    $region61: #{ffsnn_forward.1} parent=1 // pred_fallthru
      _
    // Predicated region
    $region62: #{ffsnn_forward.1} parent=1 // pred_check
      _
    $region63: #{ffsnn_forward.1} parent=1 // pred_check_branch
      %124 = sbr.rel (0) target = $region65
    $region64: #{ffsnn_forward.1} parent=1 // pred_region
      %125 = dma.done [#allocation10], 16
    $region65: #{ffsnn_forward.1} parent=1 // pred_fallthru
      _
    // Predicated region
    $region66: #{ffsnn_forward.1} parent=1 // pred_check
      _
    $region67: #{ffsnn_forward.1} parent=1 // pred_check_branch
      %127 = sbr.rel (0) target = $region69
    $region68: #{ffsnn_forward.1} parent=1 // pred_region
      %128 = dma.done [#allocation13], 16
    $region69: #{ffsnn_forward.1} parent=1 // pred_fallthru
      _
    // Predicated region
    $region70: #{ffsnn_forward.1} parent=1 // pred_check
      _
    $region71: #{ffsnn_forward.1} parent=1 // pred_check_branch
      %130 = sbr.rel (0) target = $region73
    $region72: #{ffsnn_forward.1} parent=1 // pred_region
      %131 = dma.done [#allocation13], 16
    $region73: #{ffsnn_forward.1} parent=1 // pred_fallthru
      _
    // Predicated region
    $region74: #{ffsnn_forward.1} parent=1 // pred_check
      _
    $region75: #{ffsnn_forward.1} parent=1 // pred_check_branch
      %133 = sbr.rel (0) target = $region77
    $region76: #{ffsnn_forward.1} parent=1 // pred_region
      %134 = dma.done [#allocation16], 16
    $region77: #{ffsnn_forward.1} parent=1 // pred_fallthru
      _
    %135 = sfence
    %v136 = vld [vmem:[#allocation8] sm:$0xff]
    %v137 = vld [vmem:[#allocation9] sm:$0xff]
    %v138 = vld [vmem:[#allocation9 + $0x8] sm:$0xff]
    %v139 = vld [vmem:[%s5] sm:$0xff]
    %v140 = vld [vmem:[%s5 + $0x8] sm:$0xff]
    %v141 = vld [vmem:[%s5 + $0x10] sm:$0xff]
    %v142 = vld [vmem:[%s5 + $0x18] sm:$0xff]
    %v143 = vld [vmem:[%s7] sm:$0xff]
    %v144 = vld [vmem:[%s7 + $0x8] sm:$0xff]
    %v145 = vld [vmem:[%s7 + $0x10] sm:$0xff]
    %v146 = vld [vmem:[%s7 + $0x18] sm:$0xff]
    %v147 = vld [vmem:[%s9] sm:$0xff]
    %v148 = vld [vmem:[%s9 + $0x8] sm:$0xff]
    %v149 = vld [vmem:[%s9 + $0x10] sm:$0xff]
    %v150 = vld [vmem:[%s9 + $0x18] sm:$0xff]
    %v151 = vld [vmem:[#allocation11] sm:$0x1]
    %v153 = vlaneseq
    %v154 = vshrl.u32 %v153, 7
    %v155 = vsub.s32 0, %v154
    %v156 = vrot.slane %v151, %v155
    %v158 = vld [vmem:[#allocation12] sm:$0x1]
    %v160 = vlaneseq
    %v161 = vshrl.u32 %v160, 7
    %v162 = vsub.s32 0, %v161
    %v163 = vrot.slane %v158, %v162
    %v165 = vld [vmem:[#allocation14] sm:$0x1]
    %v167 = vlaneseq
    %v168 = vshrl.u32 %v167, 7
    %v169 = vsub.s32 0, %v168
    %v170 = vrot.slane %v165, %v169
    %v172 = vld [vmem:[#allocation15] sm:$0x1]
    %v174 = vlaneseq
    %v175 = vshrl.u32 %v174, 7
    %v176 = vsub.s32 0, %v175
    %v177 = vrot.slane %v172, %v176
    %s179 = sld [smem:[#allocation2]]
    %s180 = smax.f32 %s179, 0.0
    %s181 = smin.f32 %s180, 1.0
    %s182 = sld [smem:[#allocation2 + $0x1]]
    %s183 = smax.f32 %s182, 0.0
    %s184 = smin.f32 %s183, 1.0
    %s185 = sld [smem:[#allocation2 + $0x2]]
    %s186 = smax.f32 %s185, 0.0
    %s187 = smin.f32 %s186, 1.0
    %s188 = sld [smem:[#allocation2 + $0x3]]
    %s189 = smax.f32 %s188, 0.0
    %s190 = smin.f32 %s189, 1.0
    %s191 = sld [smem:[#allocation6]]
    %s192 = sld [smem:[#allocation6 + $0x1]]
    %s193 = sld [smem:[#allocation6 + $0x2]]
    %s194 = sld [smem:[#allocation6 + $0x3]]
    %vm195 = vcmask 130048
    %v197 = vsel %vm195, %v136, 0
    %199 = vmatprep.subr.mxu0 0.0
    %200 = vmatpush1.msra.mxu0 0.0
    %201 = vmatprep.subr.mxu0 0.0
    %202 = vmatpush1.msra.mxu0 0.0
    %203 = vmatprep.subr.mxu0 0.0
    %204 = vmatpush1.msra.mxu0 0.0
    %205 = vmatprep.subr.mxu0 0.0
    %206 = vmatpush1.msra.mxu0 0.0
    %207 = vmatprep.subr.mxu0 0.0
    %208 = vmatpush1.msra.mxu0 0.0
    %209 = vmatprep.subr.mxu0 0.0
    %210 = vmatpush1.msra.mxu0 0.0
    %211 = vmatprep.subr.mxu0 0.0
    %212 = vmatpush1.msra.mxu0 0.0
    %213 = vmatprep.subr.mxu0 0.0
    %214 = vmatpush1.msra.mxu0 0.0
    %215 = vmatprep.subr.mxu0 0.0
    %216 = vmatpush1.msra.mxu0 0.0
    %217 = vmatprep.subr.mxu0 0.0
    %218 = vmatpush1.msra.mxu0 0.0
    %219 = vmatprep.subr.mxu0 0.0
    %220 = vmatpush1.msra.mxu0 0.0
    %221 = vmatprep.subr.mxu0 0.0
    %222 = vmatpush1.msra.mxu0 0.0
    %223 = vmatprep.subr.mxu0 0.0
    %224 = vmatpush1.msra.mxu0 0.0
    %225 = vmatprep.subr.mxu0 0.0
    %226 = vmatpush1.msra.mxu0 0.0
    %227 = vmatprep.subr.mxu0 0.0
    %228 = vmatpush1.msra.mxu0 %v138
    %229 = vmatprep.subr.mxu0 0.0
    %230 = vmatpush1.msra.mxu0 %v137
    %231 = vmatprep.subr.mxu0 0.0
    %232 = vmatpush2.msra.mxu0 0.0
    %233 = vmatprep.subr.mxu0 0.0
    %234 = vmatpush2.msra.mxu0 0.0
    %235 = vmatprep.subr.mxu0 0.0
    %236 = vmatpush2.msra.mxu0 0.0
    %237 = vmatprep.subr.mxu0 0.0
    %238 = vmatpush2.msra.mxu0 0.0
    %239 = vmatprep.subr.mxu0 0.0
    %240 = vmatpush2.msra.mxu0 0.0
    %241 = vmatprep.subr.mxu0 0.0
    %242 = vmatpush2.msra.mxu0 0.0
    %243 = vmatprep.subr.mxu0 0.0
    %244 = vmatpush2.msra.mxu0 0.0
    %245 = vmatprep.subr.mxu0 0.0
    %246 = vmatpush2.msra.mxu0 0.0
    %247 = vmatprep.subr.mxu0 0.0
    %248 = vmatpush2.msra.mxu0 0.0
    %249 = vmatprep.subr.mxu0 0.0
    %250 = vmatpush2.msra.mxu0 0.0
    %251 = vmatprep.subr.mxu0 0.0
    %252 = vmatpush2.msra.mxu0 0.0
    %253 = vmatprep.subr.mxu0 0.0
    %254 = vmatpush2.msra.mxu0 0.0
    %255 = vmatprep.subr.mxu0 0.0
    %256 = vmatpush2.msra.mxu0 0.0
    %257 = vmatprep.subr.mxu0 0.0
    %258 = vmatpush2.msra.mxu0 0.0
    %259 = vmatprep.subr.mxu0 0.0
    %260 = vmatpush2.msra.mxu0 0.0
    %261 = vmatprep.subr.mxu0 0.0
    %262 = vmatpush2.msra.mxu0 0.0
    %263 = vmatprep.mubr.f32.mxu0 0.0
    %264 = vmatmul.mubr.f32.gmra.mxu0 %v197
    %v265 = vpop.f32.mrf.mxu0
    %v266 = vadd.f32 %v156, %v265
    %v267 = vpop.f32.mrf.mxu0
    %268 = vdwg.mxu0
    %v269 = vstv %s191
    %vm270 = vcmp.gt.f32.partialorder 0.0, %v269
    %v271 = vsel %vm270, 1, 0
    %v272 = vcvt.s32.f32 %v271
    %v273 = vstv %s181
    %v274 = vmul.f32 %v273, 0.0
    %v275 = vadd.f32 %v274, %v266
    %v276 = vmul.f32 %v272, %v269
    %v277 = vsub.f32 %v275, %v276
    %vm278 = vcmp.gt.f32.partialorder %v277, %v269
    %v279 = vsel %vm278, 1, 0
    %v280 = vcvt.s32.f32 %v279
    %vm281 = vcmask 261120
    %v283 = vsel %vm281, %v280, 0
    %285 = vmatprep.subr.mxu0 0.0
    %286 = vmatpush1.msra.mxu0 0.0
    %287 = vmatprep.subr.mxu0 0.0
    %288 = vmatpush1.msra.mxu0 0.0
    %289 = vmatprep.subr.mxu0 0.0
    %290 = vmatpush1.msra.mxu0 0.0
    %291 = vmatprep.subr.mxu0 0.0
    %292 = vmatpush1.msra.mxu0 0.0
    %293 = vmatprep.subr.mxu0 0.0
    %294 = vmatpush1.msra.mxu0 0.0
    %295 = vmatprep.subr.mxu0 0.0
    %296 = vmatpush1.msra.mxu0 0.0
    %297 = vmatprep.subr.mxu0 0.0
    %298 = vmatpush1.msra.mxu0 0.0
    %299 = vmatprep.subr.mxu0 0.0
    %300 = vmatpush1.msra.mxu0 0.0
    %301 = vmatprep.subr.mxu0 0.0
    %302 = vmatpush1.msra.mxu0 0.0
    %303 = vmatprep.subr.mxu0 0.0
    %304 = vmatpush1.msra.mxu0 0.0
    %305 = vmatprep.subr.mxu0 0.0
    %306 = vmatpush1.msra.mxu0 0.0
    %307 = vmatprep.subr.mxu0 0.0
    %308 = vmatpush1.msra.mxu0 0.0
    %309 = vmatprep.subr.mxu0 0.0
    %310 = vmatpush1.msra.mxu0 %v142
    %311 = vmatprep.subr.mxu0 0.0
    %312 = vmatpush1.msra.mxu0 %v141
    %313 = vmatprep.subr.mxu0 0.0
    %314 = vmatpush1.msra.mxu0 %v140
    %315 = vmatprep.subr.mxu0 0.0
    %316 = vmatpush1.msra.mxu0 %v139
    %317 = vmatprep.subr.mxu0 0.0
    %318 = vmatpush2.msra.mxu0 0.0
    %319 = vmatprep.subr.mxu0 0.0
    %320 = vmatpush2.msra.mxu0 0.0
    %321 = vmatprep.subr.mxu0 0.0
    %322 = vmatpush2.msra.mxu0 0.0
    %323 = vmatprep.subr.mxu0 0.0
    %324 = vmatpush2.msra.mxu0 0.0
    %325 = vmatprep.subr.mxu0 0.0
    %326 = vmatpush2.msra.mxu0 0.0
    %327 = vmatprep.subr.mxu0 0.0
    %328 = vmatpush2.msra.mxu0 0.0
    %329 = vmatprep.subr.mxu0 0.0
    %330 = vmatpush2.msra.mxu0 0.0
    %331 = vmatprep.subr.mxu0 0.0
    %332 = vmatpush2.msra.mxu0 0.0
    %333 = vmatprep.subr.mxu0 0.0
    %334 = vmatpush2.msra.mxu0 0.0
    %335 = vmatprep.subr.mxu0 0.0
    %336 = vmatpush2.msra.mxu0 0.0
    %337 = vmatprep.subr.mxu0 0.0
    %338 = vmatpush2.msra.mxu0 0.0
    %339 = vmatprep.subr.mxu0 0.0
    %340 = vmatpush2.msra.mxu0 0.0
    %341 = vmatprep.subr.mxu0 0.0
    %342 = vmatpush2.msra.mxu0 0.0
    %343 = vmatprep.subr.mxu0 0.0
    %344 = vmatpush2.msra.mxu0 0.0
    %345 = vmatprep.subr.mxu0 0.0
    %346 = vmatpush2.msra.mxu0 0.0
    %347 = vmatprep.subr.mxu0 0.0
    %348 = vmatpush2.msra.mxu0 0.0
    %349 = vmatprep.mubr.f32.mxu0 0.0
    %350 = vmatmul.mubr.f32.gmra.mxu0 %v283
    %v351 = vpop.f32.mrf.mxu0
    %v352 = vadd.f32 %v163, %v351
    %v353 = vpop.f32.mrf.mxu0
    %354 = vdwg.mxu0
    %v355 = vstv %s192
    %vm356 = vcmp.gt.f32.partialorder 0.0, %v355
    %v357 = vsel %vm356, 1, 0
    %v358 = vcvt.s32.f32 %v357
    %v359 = vstv %s184
    %v360 = vmul.f32 %v359, 0.0
    %v361 = vadd.f32 %v360, %v352
    %v362 = vmul.f32 %v358, %v355
    %v363 = vsub.f32 %v361, %v362
    %vm364 = vcmp.gt.f32.partialorder %v363, %v355
    %v365 = vsel %vm364, 1, 0
    %v366 = vcvt.s32.f32 %v365
    %v368 = vsel %vm281, %v366, 0
    %370 = vmatprep.subr.mxu0 0.0
    %371 = vmatpush1.msra.mxu0 0.0
    %372 = vmatprep.subr.mxu0 0.0
    %373 = vmatpush1.msra.mxu0 0.0
    %374 = vmatprep.subr.mxu0 0.0
    %375 = vmatpush1.msra.mxu0 0.0
    %376 = vmatprep.subr.mxu0 0.0
    %377 = vmatpush1.msra.mxu0 0.0
    %378 = vmatprep.subr.mxu0 0.0
    %379 = vmatpush1.msra.mxu0 0.0
    %380 = vmatprep.subr.mxu0 0.0
    %381 = vmatpush1.msra.mxu0 0.0
    %382 = vmatprep.subr.mxu0 0.0
    %383 = vmatpush1.msra.mxu0 0.0
    %384 = vmatprep.subr.mxu0 0.0
    %385 = vmatpush1.msra.mxu0 0.0
    %386 = vmatprep.subr.mxu0 0.0
    %387 = vmatpush1.msra.mxu0 0.0
    %388 = vmatprep.subr.mxu0 0.0
    %389 = vmatpush1.msra.mxu0 0.0
    %390 = vmatprep.subr.mxu0 0.0
    %391 = vmatpush1.msra.mxu0 0.0
    %392 = vmatprep.subr.mxu0 0.0
    %393 = vmatpush1.msra.mxu0 0.0
    %394 = vmatprep.subr.mxu0 0.0
    %395 = vmatpush1.msra.mxu0 %v146
    %396 = vmatprep.subr.mxu0 0.0
    %397 = vmatpush1.msra.mxu0 %v145
    %398 = vmatprep.subr.mxu0 0.0
    %399 = vmatpush1.msra.mxu0 %v144
    %400 = vmatprep.subr.mxu0 0.0
    %401 = vmatpush1.msra.mxu0 %v143
    %402 = vmatprep.subr.mxu0 0.0
    %403 = vmatpush2.msra.mxu0 0.0
    %404 = vmatprep.subr.mxu0 0.0
    %405 = vmatpush2.msra.mxu0 0.0
    %406 = vmatprep.subr.mxu0 0.0
    %407 = vmatpush2.msra.mxu0 0.0
    %408 = vmatprep.subr.mxu0 0.0
    %409 = vmatpush2.msra.mxu0 0.0
    %410 = vmatprep.subr.mxu0 0.0
    %411 = vmatpush2.msra.mxu0 0.0
    %412 = vmatprep.subr.mxu0 0.0
    %413 = vmatpush2.msra.mxu0 0.0
    %414 = vmatprep.subr.mxu0 0.0
    %415 = vmatpush2.msra.mxu0 0.0
    %416 = vmatprep.subr.mxu0 0.0
    %417 = vmatpush2.msra.mxu0 0.0
    %418 = vmatprep.subr.mxu0 0.0
    %419 = vmatpush2.msra.mxu0 0.0
    %420 = vmatprep.subr.mxu0 0.0
    %421 = vmatpush2.msra.mxu0 0.0
    %422 = vmatprep.subr.mxu0 0.0
    %423 = vmatpush2.msra.mxu0 0.0
    %424 = vmatprep.subr.mxu0 0.0
    %425 = vmatpush2.msra.mxu0 0.0
    %426 = vmatprep.subr.mxu0 0.0
    %427 = vmatpush2.msra.mxu0 0.0
    %428 = vmatprep.subr.mxu0 0.0
    %429 = vmatpush2.msra.mxu0 0.0
    %430 = vmatprep.subr.mxu0 0.0
    %431 = vmatpush2.msra.mxu0 0.0
    %432 = vmatprep.subr.mxu0 0.0
    %433 = vmatpush2.msra.mxu0 0.0
    %434 = vmatprep.mubr.f32.mxu0 0.0
    %435 = vmatmul.mubr.f32.gmra.mxu0 %v368
    %v436 = vpop.f32.mrf.mxu0
    %v437 = vadd.f32 %v170, %v436
    %v438 = vpop.f32.mrf.mxu0
    %439 = vdwg.mxu0
    %v440 = vstv %s193
    %vm441 = vcmp.gt.f32.partialorder 0.0, %v440
    %v442 = vsel %vm441, 1, 0
    %v443 = vcvt.s32.f32 %v442
    %v444 = vstv %s187
    %v445 = vmul.f32 %v444, 0.0
    %v446 = vadd.f32 %v445, %v437
    %v447 = vmul.f32 %v443, %v440
    %v448 = vsub.f32 %v446, %v447
    %vm449 = vcmp.gt.f32.partialorder %v448, %v440
    %v450 = vsel %vm449, 1, 0
    %v451 = vcvt.s32.f32 %v450
    %v453 = vsel %vm281, %v451, 0
    %455 = vmatprep.subr.mxu0 0.0
    %456 = vmatpush1.msra.mxu0 0.0
    %457 = vmatprep.subr.mxu0 0.0
    %458 = vmatpush1.msra.mxu0 0.0
    %459 = vmatprep.subr.mxu0 0.0
    %460 = vmatpush1.msra.mxu0 0.0
    %461 = vmatprep.subr.mxu0 0.0
    %462 = vmatpush1.msra.mxu0 0.0
    %463 = vmatprep.subr.mxu0 0.0
    %464 = vmatpush1.msra.mxu0 0.0
    %465 = vmatprep.subr.mxu0 0.0
    %466 = vmatpush1.msra.mxu0 0.0
    %467 = vmatprep.subr.mxu0 0.0
    %468 = vmatpush1.msra.mxu0 0.0
    %469 = vmatprep.subr.mxu0 0.0
    %470 = vmatpush1.msra.mxu0 0.0
    %471 = vmatprep.subr.mxu0 0.0
    %472 = vmatpush1.msra.mxu0 0.0
    %473 = vmatprep.subr.mxu0 0.0
    %474 = vmatpush1.msra.mxu0 0.0
    %475 = vmatprep.subr.mxu0 0.0
    %476 = vmatpush1.msra.mxu0 0.0
    %477 = vmatprep.subr.mxu0 0.0
    %478 = vmatpush1.msra.mxu0 0.0
    %479 = vmatprep.subr.mxu0 0.0
    %480 = vmatpush1.msra.mxu0 %v150
    %481 = vmatprep.subr.mxu0 0.0
    %482 = vmatpush1.msra.mxu0 %v149
    %483 = vmatprep.subr.mxu0 0.0
    %484 = vmatpush1.msra.mxu0 %v148
    %485 = vmatprep.subr.mxu0 0.0
    %486 = vmatpush1.msra.mxu0 %v147
    %487 = vmatprep.subr.mxu0 0.0
    %488 = vmatpush2.msra.mxu0 0.0
    %489 = vmatprep.subr.mxu0 0.0
    %490 = vmatpush2.msra.mxu0 0.0
    %491 = vmatprep.subr.mxu0 0.0
    %492 = vmatpush2.msra.mxu0 0.0
    %493 = vmatprep.subr.mxu0 0.0
    %494 = vmatpush2.msra.mxu0 0.0
    %495 = vmatprep.subr.mxu0 0.0
    %496 = vmatpush2.msra.mxu0 0.0
    %497 = vmatprep.subr.mxu0 0.0
    %498 = vmatpush2.msra.mxu0 0.0
    %499 = vmatprep.subr.mxu0 0.0
    %500 = vmatpush2.msra.mxu0 0.0
    %501 = vmatprep.subr.mxu0 0.0
    %502 = vmatpush2.msra.mxu0 0.0
    %503 = vmatprep.subr.mxu0 0.0
    %504 = vmatpush2.msra.mxu0 0.0
    %505 = vmatprep.subr.mxu0 0.0
    %506 = vmatpush2.msra.mxu0 0.0
    %507 = vmatprep.subr.mxu0 0.0
    %508 = vmatpush2.msra.mxu0 0.0
    %509 = vmatprep.subr.mxu0 0.0
    %510 = vmatpush2.msra.mxu0 0.0
    %511 = vmatprep.subr.mxu0 0.0
    %512 = vmatpush2.msra.mxu0 0.0
    %513 = vmatprep.subr.mxu0 0.0
    %514 = vmatpush2.msra.mxu0 0.0
    %515 = vmatprep.subr.mxu0 0.0
    %516 = vmatpush2.msra.mxu0 0.0
    %517 = vmatprep.subr.mxu0 0.0
    %518 = vmatpush2.msra.mxu0 0.0
    %519 = vmatprep.mubr.f32.mxu0 0.0
    %520 = vmatmul.mubr.f32.gmra.mxu0 %v453
    %v521 = vpop.f32.mrf.mxu0
    %v522 = vadd.f32 %v177, %v521
    %v523 = vpop.f32.mrf.mxu0
    %524 = vdwg.mxu0
    %v525 = vstv %s194
    %vm526 = vcmp.gt.f32.partialorder 0.0, %v525
    %v527 = vsel %vm526, 1, 0
    %v528 = vcvt.s32.f32 %v527
    %v529 = vstv %s190
    %v530 = vmul.f32 %v529, 0.0
    %v531 = vadd.f32 %v530, %v522
    %v532 = vmul.f32 %v528, %v525
    %v533 = vsub.f32 %v531, %v532
    %vm534 = vcmp.gt.f32.partialorder %v533, %v525
    %v535 = vsel %vm534, 1, 0
    %v536 = vcvt.s32.f32 %v535
    %vm537 = vcmask 80896
    %538 = vst.msk [vmem:[#allocation17] sm:$0xff] %vm537, %v522
    %539 = vst.msk [vmem:[#allocation18] sm:$0xff] %vm537, %v536
    %540 = vst.msk [vmem:[#allocation20] sm:$0xff] %vm537, %v533
    %v541 = vmul.f32 %v273, %v277
    %v542 = vadd.f32 %v541, %v266
    %v543 = vmul.f32 %v280, %v269
    %v544 = vsub.f32 %v542, %v543
    %vm545 = vcmp.gt.f32.partialorder %v544, %v269
    %v546 = vsel %vm545, 1, 0
    %v547 = vcvt.s32.f32 %v546
    %v549 = vsel %vm281, %v547, 0
    %551 = vmatprep.subr.mxu0 0.0
    %552 = vmatpush1.msra.mxu0 0.0
    %553 = vmatprep.subr.mxu0 0.0
    %554 = vmatpush1.msra.mxu0 0.0
    %555 = vmatprep.subr.mxu0 0.0
    %556 = vmatpush1.msra.mxu0 0.0
    %557 = vmatprep.subr.mxu0 0.0
    %558 = vmatpush1.msra.mxu0 0.0
    %559 = vmatprep.subr.mxu0 0.0
    %560 = vmatpush1.msra.mxu0 0.0
    %561 = vmatprep.subr.mxu0 0.0
    %562 = vmatpush1.msra.mxu0 0.0
    %563 = vmatprep.subr.mxu0 0.0
    %564 = vmatpush1.msra.mxu0 0.0
    %565 = vmatprep.subr.mxu0 0.0
    %566 = vmatpush1.msra.mxu0 0.0
    %567 = vmatprep.subr.mxu0 0.0
    %568 = vmatpush1.msra.mxu0 0.0
    %569 = vmatprep.subr.mxu0 0.0
    %570 = vmatpush1.msra.mxu0 0.0
    %571 = vmatprep.subr.mxu0 0.0
    %572 = vmatpush1.msra.mxu0 0.0
    %573 = vmatprep.subr.mxu0 0.0
    %574 = vmatpush1.msra.mxu0 0.0
    %575 = vmatprep.subr.mxu0 0.0
    %576 = vmatpush1.msra.mxu0 %v142
    %577 = vmatprep.subr.mxu0 0.0
    %578 = vmatpush1.msra.mxu0 %v141
    %579 = vmatprep.subr.mxu0 0.0
    %580 = vmatpush1.msra.mxu0 %v140
    %581 = vmatprep.subr.mxu0 0.0
    %582 = vmatpush1.msra.mxu0 %v139
    %583 = vmatprep.subr.mxu0 0.0
    %584 = vmatpush2.msra.mxu0 0.0
    %585 = vmatprep.subr.mxu0 0.0
    %586 = vmatpush2.msra.mxu0 0.0
    %587 = vmatprep.subr.mxu0 0.0
    %588 = vmatpush2.msra.mxu0 0.0
    %589 = vmatprep.subr.mxu0 0.0
    %590 = vmatpush2.msra.mxu0 0.0
    %591 = vmatprep.subr.mxu0 0.0
    %592 = vmatpush2.msra.mxu0 0.0
    %593 = vmatprep.subr.mxu0 0.0
    %594 = vmatpush2.msra.mxu0 0.0
    %595 = vmatprep.subr.mxu0 0.0
    %596 = vmatpush2.msra.mxu0 0.0
    %597 = vmatprep.subr.mxu0 0.0
    %598 = vmatpush2.msra.mxu0 0.0
    %599 = vmatprep.subr.mxu0 0.0
    %600 = vmatpush2.msra.mxu0 0.0
    %601 = vmatprep.subr.mxu0 0.0
    %602 = vmatpush2.msra.mxu0 0.0
    %603 = vmatprep.subr.mxu0 0.0
    %604 = vmatpush2.msra.mxu0 0.0
    %605 = vmatprep.subr.mxu0 0.0
    %606 = vmatpush2.msra.mxu0 0.0
    %607 = vmatprep.subr.mxu0 0.0
    %608 = vmatpush2.msra.mxu0 0.0
    %609 = vmatprep.subr.mxu0 0.0
    %610 = vmatpush2.msra.mxu0 0.0
    %611 = vmatprep.subr.mxu0 0.0
    %612 = vmatpush2.msra.mxu0 0.0
    %613 = vmatprep.subr.mxu0 0.0
    %614 = vmatpush2.msra.mxu0 0.0
    %615 = vmatprep.mubr.f32.mxu0 0.0
    %616 = vmatmul.mubr.f32.gmra.mxu0 %v549
    %v617 = vpop.f32.mrf.mxu0
    %v618 = vadd.f32 %v163, %v617
    %v619 = vpop.f32.mrf.mxu0
    %620 = vdwg.mxu0
    %v621 = vmul.f32 %v359, %v363
    %v622 = vadd.f32 %v621, %v618
    %v623 = vmul.f32 %v366, %v355
    %v624 = vsub.f32 %v622, %v623
    %vm625 = vcmp.gt.f32.partialorder %v624, %v355
    %v626 = vsel %vm625, 1, 0
    %v627 = vcvt.s32.f32 %v626
    %v629 = vsel %vm281, %v627, 0
    %631 = vmatprep.subr.mxu0 0.0
    %632 = vmatpush1.msra.mxu0 0.0
    %633 = vmatprep.subr.mxu0 0.0
    %634 = vmatpush1.msra.mxu0 0.0
    %635 = vmatprep.subr.mxu0 0.0
    %636 = vmatpush1.msra.mxu0 0.0
    %637 = vmatprep.subr.mxu0 0.0
    %638 = vmatpush1.msra.mxu0 0.0
    %639 = vmatprep.subr.mxu0 0.0
    %640 = vmatpush1.msra.mxu0 0.0
    %641 = vmatprep.subr.mxu0 0.0
    %642 = vmatpush1.msra.mxu0 0.0
    %643 = vmatprep.subr.mxu0 0.0
    %644 = vmatpush1.msra.mxu0 0.0
    %645 = vmatprep.subr.mxu0 0.0
    %646 = vmatpush1.msra.mxu0 0.0
    %647 = vmatprep.subr.mxu0 0.0
    %648 = vmatpush1.msra.mxu0 0.0
    %649 = vmatprep.subr.mxu0 0.0
    %650 = vmatpush1.msra.mxu0 0.0
    %651 = vmatprep.subr.mxu0 0.0
    %652 = vmatpush1.msra.mxu0 0.0
    %653 = vmatprep.subr.mxu0 0.0
    %654 = vmatpush1.msra.mxu0 0.0
    %655 = vmatprep.subr.mxu0 0.0
    %656 = vmatpush1.msra.mxu0 %v146
    %657 = vmatprep.subr.mxu0 0.0
    %658 = vmatpush1.msra.mxu0 %v145
    %659 = vmatprep.subr.mxu0 0.0
    %660 = vmatpush1.msra.mxu0 %v144
    %661 = vmatprep.subr.mxu0 0.0
    %662 = vmatpush1.msra.mxu0 %v143
    %663 = vmatprep.subr.mxu0 0.0
    %664 = vmatpush2.msra.mxu0 0.0
    %665 = vmatprep.subr.mxu0 0.0
    %666 = vmatpush2.msra.mxu0 0.0
    %667 = vmatprep.subr.mxu0 0.0
    %668 = vmatpush2.msra.mxu0 0.0
    %669 = vmatprep.subr.mxu0 0.0
    %670 = vmatpush2.msra.mxu0 0.0
    %671 = vmatprep.subr.mxu0 0.0
    %672 = vmatpush2.msra.mxu0 0.0
    %673 = vmatprep.subr.mxu0 0.0
    %674 = vmatpush2.msra.mxu0 0.0
    %675 = vmatprep.subr.mxu0 0.0
    %676 = vmatpush2.msra.mxu0 0.0
    %677 = vmatprep.subr.mxu0 0.0
    %678 = vmatpush2.msra.mxu0 0.0
    %679 = vmatprep.subr.mxu0 0.0
    %680 = vmatpush2.msra.mxu0 0.0
    %681 = vmatprep.subr.mxu0 0.0
    %682 = vmatpush2.msra.mxu0 0.0
    %683 = vmatprep.subr.mxu0 0.0
    %684 = vmatpush2.msra.mxu0 0.0
    %685 = vmatprep.subr.mxu0 0.0
    %686 = vmatpush2.msra.mxu0 0.0
    %687 = vmatprep.subr.mxu0 0.0
    %688 = vmatpush2.msra.mxu0 0.0
    %689 = vmatprep.subr.mxu0 0.0
    %690 = vmatpush2.msra.mxu0 0.0
    %691 = vmatprep.subr.mxu0 0.0
    %692 = vmatpush2.msra.mxu0 0.0
    %693 = vmatprep.subr.mxu0 0.0
    %694 = vmatpush2.msra.mxu0 0.0
    %695 = vmatprep.mubr.f32.mxu0 0.0
    %696 = vmatmul.mubr.f32.gmra.mxu0 %v629
    %v697 = vpop.f32.mrf.mxu0
    %v698 = vadd.f32 %v170, %v697
    %v699 = vpop.f32.mrf.mxu0
    %700 = vdwg.mxu0
    %v701 = vmul.f32 %v444, %v448
    %v702 = vadd.f32 %v701, %v698
    %v703 = vmul.f32 %v451, %v440
    %v704 = vsub.f32 %v702, %v703
    %vm705 = vcmp.gt.f32.partialorder %v704, %v440
    %v706 = vsel %vm705, 1, 0
    %v707 = vcvt.s32.f32 %v706
    %v709 = vsel %vm281, %v707, 0
    %711 = vmatprep.subr.mxu0 0.0
    %712 = vmatpush1.msra.mxu0 0.0
    %713 = vmatprep.subr.mxu0 0.0
    %714 = vmatpush1.msra.mxu0 0.0
    %715 = vmatprep.subr.mxu0 0.0
    %716 = vmatpush1.msra.mxu0 0.0
    %717 = vmatprep.subr.mxu0 0.0
    %718 = vmatpush1.msra.mxu0 0.0
    %719 = vmatprep.subr.mxu0 0.0
    %720 = vmatpush1.msra.mxu0 0.0
    %721 = vmatprep.subr.mxu0 0.0
    %722 = vmatpush1.msra.mxu0 0.0
    %723 = vmatprep.subr.mxu0 0.0
    %724 = vmatpush1.msra.mxu0 0.0
    %725 = vmatprep.subr.mxu0 0.0
    %726 = vmatpush1.msra.mxu0 0.0
    %727 = vmatprep.subr.mxu0 0.0
    %728 = vmatpush1.msra.mxu0 0.0
    %729 = vmatprep.subr.mxu0 0.0
    %730 = vmatpush1.msra.mxu0 0.0
    %731 = vmatprep.subr.mxu0 0.0
    %732 = vmatpush1.msra.mxu0 0.0
    %733 = vmatprep.subr.mxu0 0.0
    %734 = vmatpush1.msra.mxu0 0.0
    %735 = vmatprep.subr.mxu0 0.0
    %736 = vmatpush1.msra.mxu0 %v150
    %737 = vmatprep.subr.mxu0 0.0
    %738 = vmatpush1.msra.mxu0 %v149
    %739 = vmatprep.subr.mxu0 0.0
    %740 = vmatpush1.msra.mxu0 %v148
    %741 = vmatprep.subr.mxu0 0.0
    %742 = vmatpush1.msra.mxu0 %v147
    %743 = vmatprep.subr.mxu0 0.0
    %744 = vmatpush2.msra.mxu0 0.0
    %745 = vmatprep.subr.mxu0 0.0
    %746 = vmatpush2.msra.mxu0 0.0
    %747 = vmatprep.subr.mxu0 0.0
    %748 = vmatpush2.msra.mxu0 0.0
    %749 = vmatprep.subr.mxu0 0.0
    %750 = vmatpush2.msra.mxu0 0.0
    %751 = vmatprep.subr.mxu0 0.0
    %752 = vmatpush2.msra.mxu0 0.0
    %753 = vmatprep.subr.mxu0 0.0
    %754 = vmatpush2.msra.mxu0 0.0
    %755 = vmatprep.subr.mxu0 0.0
    %756 = vmatpush2.msra.mxu0 0.0
    %757 = vmatprep.subr.mxu0 0.0
    %758 = vmatpush2.msra.mxu0 0.0
    %759 = vmatprep.subr.mxu0 0.0
    %760 = vmatpush2.msra.mxu0 0.0
    %761 = vmatprep.subr.mxu0 0.0
    %762 = vmatpush2.msra.mxu0 0.0
    %763 = vmatprep.subr.mxu0 0.0
    %764 = vmatpush2.msra.mxu0 0.0
    %765 = vmatprep.subr.mxu0 0.0
    %766 = vmatpush2.msra.mxu0 0.0
    %767 = vmatprep.subr.mxu0 0.0
    %768 = vmatpush2.msra.mxu0 0.0
    %769 = vmatprep.subr.mxu0 0.0
    %770 = vmatpush2.msra.mxu0 0.0
    %771 = vmatprep.subr.mxu0 0.0
    %772 = vmatpush2.msra.mxu0 0.0
    %773 = vmatprep.subr.mxu0 0.0
    %774 = vmatpush2.msra.mxu0 0.0
    %775 = vmatprep.mubr.f32.mxu0 0.0
    %776 = vmatmul.mubr.f32.gmra.mxu0 %v709
    %v777 = vpop.f32.mrf.mxu0
    %v778 = vadd.f32 %v177, %v777
    %v779 = vpop.f32.mrf.mxu0
    %780 = vdwg.mxu0
    %v781 = vmul.f32 %v529, %v533
    %v782 = vadd.f32 %v781, %v778
    %v783 = vmul.f32 %v536, %v525
    %v784 = vsub.f32 %v782, %v783
    %vm785 = vcmp.gt.f32.partialorder %v784, %v525
    %v786 = vsel %vm785, 1, 0
    %v787 = vcvt.s32.f32 %v786
    %s788 = scalar_lea.vmem [#allocation17], 8
    %789 = vst.msk [vmem:[%s788] sm:$0xff] %vm537, %v778
    %s790 = scalar_lea.vmem [#allocation18], 8
    %791 = vst.msk [vmem:[%s790] sm:$0xff] %vm537, %v787
    %s792 = scalar_lea.vmem [#allocation20], 8
    %793 = vst.msk [vmem:[%s792] sm:$0xff] %vm537, %v784
    %v794 = vmul.f32 %v273, %v544
    %v795 = vadd.f32 %v794, %v266
    %v796 = vmul.f32 %v547, %v269
    %v797 = vsub.f32 %v795, %v796
    %vm798 = vcmp.gt.f32.partialorder %v797, %v269
    %v799 = vsel %vm798, 1, 0
    %v800 = vcvt.s32.f32 %v799
    %v802 = vsel %vm281, %v800, 0
    %804 = vmatprep.subr.mxu0 0.0
    %805 = vmatpush1.msra.mxu0 0.0
    %806 = vmatprep.subr.mxu0 0.0
    %807 = vmatpush1.msra.mxu0 0.0
    %808 = vmatprep.subr.mxu0 0.0
    %809 = vmatpush1.msra.mxu0 0.0
    %810 = vmatprep.subr.mxu0 0.0
    %811 = vmatpush1.msra.mxu0 0.0
    %812 = vmatprep.subr.mxu0 0.0
    %813 = vmatpush1.msra.mxu0 0.0
    %814 = vmatprep.subr.mxu0 0.0
    %815 = vmatpush1.msra.mxu0 0.0
    %816 = vmatprep.subr.mxu0 0.0
    %817 = vmatpush1.msra.mxu0 0.0
    %818 = vmatprep.subr.mxu0 0.0
    %819 = vmatpush1.msra.mxu0 0.0
    %820 = vmatprep.subr.mxu0 0.0
    %821 = vmatpush1.msra.mxu0 0.0
    %822 = vmatprep.subr.mxu0 0.0
    %823 = vmatpush1.msra.mxu0 0.0
    %824 = vmatprep.subr.mxu0 0.0
    %825 = vmatpush1.msra.mxu0 0.0
    %826 = vmatprep.subr.mxu0 0.0
    %827 = vmatpush1.msra.mxu0 0.0
    %828 = vmatprep.subr.mxu0 0.0
    %829 = vmatpush1.msra.mxu0 %v142
    %830 = vmatprep.subr.mxu0 0.0
    %831 = vmatpush1.msra.mxu0 %v141
    %832 = vmatprep.subr.mxu0 0.0
    %833 = vmatpush1.msra.mxu0 %v140
    %834 = vmatprep.subr.mxu0 0.0
    %835 = vmatpush1.msra.mxu0 %v139
    %836 = vmatprep.subr.mxu0 0.0
    %837 = vmatpush2.msra.mxu0 0.0
    %838 = vmatprep.subr.mxu0 0.0
    %839 = vmatpush2.msra.mxu0 0.0
    %840 = vmatprep.subr.mxu0 0.0
    %841 = vmatpush2.msra.mxu0 0.0
    %842 = vmatprep.subr.mxu0 0.0
    %843 = vmatpush2.msra.mxu0 0.0
    %844 = vmatprep.subr.mxu0 0.0
    %845 = vmatpush2.msra.mxu0 0.0
    %846 = vmatprep.subr.mxu0 0.0
    %847 = vmatpush2.msra.mxu0 0.0
    %848 = vmatprep.subr.mxu0 0.0
    %849 = vmatpush2.msra.mxu0 0.0
    %850 = vmatprep.subr.mxu0 0.0
    %851 = vmatpush2.msra.mxu0 0.0
    %852 = vmatprep.subr.mxu0 0.0
    %853 = vmatpush2.msra.mxu0 0.0
    %854 = vmatprep.subr.mxu0 0.0
    %855 = vmatpush2.msra.mxu0 0.0
    %856 = vmatprep.subr.mxu0 0.0
    %857 = vmatpush2.msra.mxu0 0.0
    %858 = vmatprep.subr.mxu0 0.0
    %859 = vmatpush2.msra.mxu0 0.0
    %860 = vmatprep.subr.mxu0 0.0
    %861 = vmatpush2.msra.mxu0 0.0
    %862 = vmatprep.subr.mxu0 0.0
    %863 = vmatpush2.msra.mxu0 0.0
    %864 = vmatprep.subr.mxu0 0.0
    %865 = vmatpush2.msra.mxu0 0.0
    %866 = vmatprep.subr.mxu0 0.0
    %867 = vmatpush2.msra.mxu0 0.0
    %868 = vmatprep.mubr.f32.mxu0 0.0
    %869 = vmatmul.mubr.f32.gmra.mxu0 %v802
    %v870 = vpop.f32.mrf.mxu0
    %v871 = vadd.f32 %v163, %v870
    %v872 = vpop.f32.mrf.mxu0
    %873 = vdwg.mxu0
    %v874 = vmul.f32 %v359, %v624
    %v875 = vadd.f32 %v874, %v871
    %v876 = vmul.f32 %v627, %v355
    %v877 = vsub.f32 %v875, %v876
    %vm878 = vcmp.gt.f32.partialorder %v877, %v355
    %v879 = vsel %vm878, 1, 0
    %v880 = vcvt.s32.f32 %v879
    %v882 = vsel %vm281, %v880, 0
    %884 = vmatprep.subr.mxu0 0.0
    %885 = vmatpush1.msra.mxu0 0.0
    %886 = vmatprep.subr.mxu0 0.0
    %887 = vmatpush1.msra.mxu0 0.0
    %888 = vmatprep.subr.mxu0 0.0
    %889 = vmatpush1.msra.mxu0 0.0
    %890 = vmatprep.subr.mxu0 0.0
    %891 = vmatpush1.msra.mxu0 0.0
    %892 = vmatprep.subr.mxu0 0.0
    %893 = vmatpush1.msra.mxu0 0.0
    %894 = vmatprep.subr.mxu0 0.0
    %895 = vmatpush1.msra.mxu0 0.0
    %896 = vmatprep.subr.mxu0 0.0
    %897 = vmatpush1.msra.mxu0 0.0
    %898 = vmatprep.subr.mxu0 0.0
    %899 = vmatpush1.msra.mxu0 0.0
    %900 = vmatprep.subr.mxu0 0.0
    %901 = vmatpush1.msra.mxu0 0.0
    %902 = vmatprep.subr.mxu0 0.0
    %903 = vmatpush1.msra.mxu0 0.0
    %904 = vmatprep.subr.mxu0 0.0
    %905 = vmatpush1.msra.mxu0 0.0
    %906 = vmatprep.subr.mxu0 0.0
    %907 = vmatpush1.msra.mxu0 0.0
    %908 = vmatprep.subr.mxu0 0.0
    %909 = vmatpush1.msra.mxu0 %v146
    %910 = vmatprep.subr.mxu0 0.0
    %911 = vmatpush1.msra.mxu0 %v145
    %912 = vmatprep.subr.mxu0 0.0
    %913 = vmatpush1.msra.mxu0 %v144
    %914 = vmatprep.subr.mxu0 0.0
    %915 = vmatpush1.msra.mxu0 %v143
    %916 = vmatprep.subr.mxu0 0.0
    %917 = vmatpush2.msra.mxu0 0.0
    %918 = vmatprep.subr.mxu0 0.0
    %919 = vmatpush2.msra.mxu0 0.0
    %920 = vmatprep.subr.mxu0 0.0
    %921 = vmatpush2.msra.mxu0 0.0
    %922 = vmatprep.subr.mxu0 0.0
    %923 = vmatpush2.msra.mxu0 0.0
    %924 = vmatprep.subr.mxu0 0.0
    %925 = vmatpush2.msra.mxu0 0.0
    %926 = vmatprep.subr.mxu0 0.0
    %927 = vmatpush2.msra.mxu0 0.0
    %928 = vmatprep.subr.mxu0 0.0
    %929 = vmatpush2.msra.mxu0 0.0
    %930 = vmatprep.subr.mxu0 0.0
    %931 = vmatpush2.msra.mxu0 0.0
    %932 = vmatprep.subr.mxu0 0.0
    %933 = vmatpush2.msra.mxu0 0.0
    %934 = vmatprep.subr.mxu0 0.0
    %935 = vmatpush2.msra.mxu0 0.0
    %936 = vmatprep.subr.mxu0 0.0
    %937 = vmatpush2.msra.mxu0 0.0
    %938 = vmatprep.subr.mxu0 0.0
    %939 = vmatpush2.msra.mxu0 0.0
    %940 = vmatprep.subr.mxu0 0.0
    %941 = vmatpush2.msra.mxu0 0.0
    %942 = vmatprep.subr.mxu0 0.0
    %943 = vmatpush2.msra.mxu0 0.0
    %944 = vmatprep.subr.mxu0 0.0
    %945 = vmatpush2.msra.mxu0 0.0
    %946 = vmatprep.subr.mxu0 0.0
    %947 = vmatpush2.msra.mxu0 0.0
    %948 = vmatprep.mubr.f32.mxu0 0.0
    %949 = vmatmul.mubr.f32.gmra.mxu0 %v882
    %v950 = vpop.f32.mrf.mxu0
    %v951 = vadd.f32 %v170, %v950
    %v952 = vpop.f32.mrf.mxu0
    %953 = vdwg.mxu0
    %v954 = vmul.f32 %v444, %v704
    %v955 = vadd.f32 %v954, %v951
    %v956 = vmul.f32 %v707, %v440
    %v957 = vsub.f32 %v955, %v956
    %vm958 = vcmp.gt.f32.partialorder %v957, %v440
    %v959 = vsel %vm958, 1, 0
    %v960 = vcvt.s32.f32 %v959
    %v962 = vsel %vm281, %v960, 0
    %964 = vmatprep.subr.mxu0 0.0
    %965 = vmatpush1.msra.mxu0 0.0
    %966 = vmatprep.subr.mxu0 0.0
    %967 = vmatpush1.msra.mxu0 0.0
    %968 = vmatprep.subr.mxu0 0.0
    %969 = vmatpush1.msra.mxu0 0.0
    %970 = vmatprep.subr.mxu0 0.0
    %971 = vmatpush1.msra.mxu0 0.0
    %972 = vmatprep.subr.mxu0 0.0
    %973 = vmatpush1.msra.mxu0 0.0
    %974 = vmatprep.subr.mxu0 0.0
    %975 = vmatpush1.msra.mxu0 0.0
    %976 = vmatprep.subr.mxu0 0.0
    %977 = vmatpush1.msra.mxu0 0.0
    %978 = vmatprep.subr.mxu0 0.0
    %979 = vmatpush1.msra.mxu0 0.0
    %980 = vmatprep.subr.mxu0 0.0
    %981 = vmatpush1.msra.mxu0 0.0
    %982 = vmatprep.subr.mxu0 0.0
    %983 = vmatpush1.msra.mxu0 0.0
    %984 = vmatprep.subr.mxu0 0.0
    %985 = vmatpush1.msra.mxu0 0.0
    %986 = vmatprep.subr.mxu0 0.0
    %987 = vmatpush1.msra.mxu0 0.0
    %988 = vmatprep.subr.mxu0 0.0
    %989 = vmatpush1.msra.mxu0 %v150
    %990 = vmatprep.subr.mxu0 0.0
    %991 = vmatpush1.msra.mxu0 %v149
    %992 = vmatprep.subr.mxu0 0.0
    %993 = vmatpush1.msra.mxu0 %v148
    %994 = vmatprep.subr.mxu0 0.0
    %995 = vmatpush1.msra.mxu0 %v147
    %996 = vmatprep.subr.mxu0 0.0
    %997 = vmatpush2.msra.mxu0 0.0
    %998 = vmatprep.subr.mxu0 0.0
    %999 = vmatpush2.msra.mxu0 0.0
    %1000 = vmatprep.subr.mxu0 0.0
    %1001 = vmatpush2.msra.mxu0 0.0
    %1002 = vmatprep.subr.mxu0 0.0
    %1003 = vmatpush2.msra.mxu0 0.0
    %1004 = vmatprep.subr.mxu0 0.0
    %1005 = vmatpush2.msra.mxu0 0.0
    %1006 = vmatprep.subr.mxu0 0.0
    %1007 = vmatpush2.msra.mxu0 0.0
    %1008 = vmatprep.subr.mxu0 0.0
    %1009 = vmatpush2.msra.mxu0 0.0
    %1010 = vmatprep.subr.mxu0 0.0
    %1011 = vmatpush2.msra.mxu0 0.0
    %1012 = vmatprep.subr.mxu0 0.0
    %1013 = vmatpush2.msra.mxu0 0.0
    %1014 = vmatprep.subr.mxu0 0.0
    %1015 = vmatpush2.msra.mxu0 0.0
    %1016 = vmatprep.subr.mxu0 0.0
    %1017 = vmatpush2.msra.mxu0 0.0
    %1018 = vmatprep.subr.mxu0 0.0
    %1019 = vmatpush2.msra.mxu0 0.0
    %1020 = vmatprep.subr.mxu0 0.0
    %1021 = vmatpush2.msra.mxu0 0.0
    %1022 = vmatprep.subr.mxu0 0.0
    %1023 = vmatpush2.msra.mxu0 0.0
    %1024 = vmatprep.subr.mxu0 0.0
    %1025 = vmatpush2.msra.mxu0 0.0
    %1026 = vmatprep.subr.mxu0 0.0
    %1027 = vmatpush2.msra.mxu0 0.0
    %1028 = vmatprep.mubr.f32.mxu0 0.0
    %1029 = vmatmul.mubr.f32.gmra.mxu0 %v962
    %v1030 = vpop.f32.mrf.mxu0
    %v1031 = vadd.f32 %v177, %v1030
    %v1032 = vpop.f32.mrf.mxu0
    %1033 = vdwg.mxu0
    %v1034 = vmul.f32 %v529, %v784
    %v1035 = vadd.f32 %v1034, %v1031
    %v1036 = vmul.f32 %v787, %v525
    %v1037 = vsub.f32 %v1035, %v1036
    %vm1038 = vcmp.gt.f32.partialorder %v1037, %v525
    %v1039 = vsel %vm1038, 1, 0
    %v1040 = vcvt.s32.f32 %v1039
    %s1041 = scalar_lea.vmem [#allocation17], 16
    %1042 = vst.msk [vmem:[%s1041] sm:$0xff] %vm537, %v1031
    %s1043 = scalar_lea.vmem [#allocation18], 16
    %1044 = vst.msk [vmem:[%s1043] sm:$0xff] %vm537, %v1040
    %s1045 = scalar_lea.vmem [#allocation20], 16
    %1046 = vst.msk [vmem:[%s1045] sm:$0xff] %vm537, %v1037
    %v1047 = vmul.f32 %v273, %v797
    %v1048 = vadd.f32 %v1047, %v266
    %v1049 = vmul.f32 %v800, %v269
    %v1050 = vsub.f32 %v1048, %v1049
    %vm1051 = vcmp.gt.f32.partialorder %v1050, %v269
    %v1052 = vsel %vm1051, 1, 0
    %v1053 = vcvt.s32.f32 %v1052
    %v1055 = vsel %vm281, %v1053, 0
    %1057 = vmatprep.subr.mxu0 0.0
    %1058 = vmatpush1.msra.mxu0 0.0
    %1059 = vmatprep.subr.mxu0 0.0
    %1060 = vmatpush1.msra.mxu0 0.0
    %1061 = vmatprep.subr.mxu0 0.0
    %1062 = vmatpush1.msra.mxu0 0.0
    %1063 = vmatprep.subr.mxu0 0.0
    %1064 = vmatpush1.msra.mxu0 0.0
    %1065 = vmatprep.subr.mxu0 0.0
    %1066 = vmatpush1.msra.mxu0 0.0
    %1067 = vmatprep.subr.mxu0 0.0
    %1068 = vmatpush1.msra.mxu0 0.0
    %1069 = vmatprep.subr.mxu0 0.0
    %1070 = vmatpush1.msra.mxu0 0.0
    %1071 = vmatprep.subr.mxu0 0.0
    %1072 = vmatpush1.msra.mxu0 0.0
    %1073 = vmatprep.subr.mxu0 0.0
    %1074 = vmatpush1.msra.mxu0 0.0
    %1075 = vmatprep.subr.mxu0 0.0
    %1076 = vmatpush1.msra.mxu0 0.0
    %1077 = vmatprep.subr.mxu0 0.0
    %1078 = vmatpush1.msra.mxu0 0.0
    %1079 = vmatprep.subr.mxu0 0.0
    %1080 = vmatpush1.msra.mxu0 0.0
    %1081 = vmatprep.subr.mxu0 0.0
    %1082 = vmatpush1.msra.mxu0 %v142
    %1083 = vmatprep.subr.mxu0 0.0
    %1084 = vmatpush1.msra.mxu0 %v141
    %1085 = vmatprep.subr.mxu0 0.0
    %1086 = vmatpush1.msra.mxu0 %v140
    %1087 = vmatprep.subr.mxu0 0.0
    %1088 = vmatpush1.msra.mxu0 %v139
    %1089 = vmatprep.subr.mxu0 0.0
    %1090 = vmatpush2.msra.mxu0 0.0
    %1091 = vmatprep.subr.mxu0 0.0
    %1092 = vmatpush2.msra.mxu0 0.0
    %1093 = vmatprep.subr.mxu0 0.0
    %1094 = vmatpush2.msra.mxu0 0.0
    %1095 = vmatprep.subr.mxu0 0.0
    %1096 = vmatpush2.msra.mxu0 0.0
    %1097 = vmatprep.subr.mxu0 0.0
    %1098 = vmatpush2.msra.mxu0 0.0
    %1099 = vmatprep.subr.mxu0 0.0
    %1100 = vmatpush2.msra.mxu0 0.0
    %1101 = vmatprep.subr.mxu0 0.0
    %1102 = vmatpush2.msra.mxu0 0.0
    %1103 = vmatprep.subr.mxu0 0.0
    %1104 = vmatpush2.msra.mxu0 0.0
    %1105 = vmatprep.subr.mxu0 0.0
    %1106 = vmatpush2.msra.mxu0 0.0
    %1107 = vmatprep.subr.mxu0 0.0
    %1108 = vmatpush2.msra.mxu0 0.0
    %1109 = vmatprep.subr.mxu0 0.0
    %1110 = vmatpush2.msra.mxu0 0.0
    %1111 = vmatprep.subr.mxu0 0.0
    %1112 = vmatpush2.msra.mxu0 0.0
    %1113 = vmatprep.subr.mxu0 0.0
    %1114 = vmatpush2.msra.mxu0 0.0
    %1115 = vmatprep.subr.mxu0 0.0
    %1116 = vmatpush2.msra.mxu0 0.0
    %1117 = vmatprep.subr.mxu0 0.0
    %1118 = vmatpush2.msra.mxu0 0.0
    %1119 = vmatprep.subr.mxu0 0.0
    %1120 = vmatpush2.msra.mxu0 0.0
    %1121 = vmatprep.mubr.f32.mxu0 0.0
    %1122 = vmatmul.mubr.f32.gmra.mxu0 %v1055
    %v1123 = vpop.f32.mrf.mxu0
    %v1124 = vadd.f32 %v163, %v1123
    %v1125 = vpop.f32.mrf.mxu0
    %1126 = vdwg.mxu0
    %v1127 = vmul.f32 %v359, %v877
    %v1128 = vadd.f32 %v1127, %v1124
    %v1129 = vmul.f32 %v880, %v355
    %v1130 = vsub.f32 %v1128, %v1129
    %vm1131 = vcmp.gt.f32.partialorder %v1130, %v355
    %v1132 = vsel %vm1131, 1, 0
    %v1133 = vcvt.s32.f32 %v1132
    %v1135 = vsel %vm281, %v1133, 0
    %1137 = vmatprep.subr.mxu0 0.0
    %1138 = vmatpush1.msra.mxu0 0.0
    %1139 = vmatprep.subr.mxu0 0.0
    %1140 = vmatpush1.msra.mxu0 0.0
    %1141 = vmatprep.subr.mxu0 0.0
    %1142 = vmatpush1.msra.mxu0 0.0
    %1143 = vmatprep.subr.mxu0 0.0
    %1144 = vmatpush1.msra.mxu0 0.0
    %1145 = vmatprep.subr.mxu0 0.0
    %1146 = vmatpush1.msra.mxu0 0.0
    %1147 = vmatprep.subr.mxu0 0.0
    %1148 = vmatpush1.msra.mxu0 0.0
    %1149 = vmatprep.subr.mxu0 0.0
    %1150 = vmatpush1.msra.mxu0 0.0
    %1151 = vmatprep.subr.mxu0 0.0
    %1152 = vmatpush1.msra.mxu0 0.0
    %1153 = vmatprep.subr.mxu0 0.0
    %1154 = vmatpush1.msra.mxu0 0.0
    %1155 = vmatprep.subr.mxu0 0.0
    %1156 = vmatpush1.msra.mxu0 0.0
    %1157 = vmatprep.subr.mxu0 0.0
    %1158 = vmatpush1.msra.mxu0 0.0
    %1159 = vmatprep.subr.mxu0 0.0
    %1160 = vmatpush1.msra.mxu0 0.0
    %1161 = vmatprep.subr.mxu0 0.0
    %1162 = vmatpush1.msra.mxu0 %v146
    %1163 = vmatprep.subr.mxu0 0.0
    %1164 = vmatpush1.msra.mxu0 %v145
    %1165 = vmatprep.subr.mxu0 0.0
    %1166 = vmatpush1.msra.mxu0 %v144
    %1167 = vmatprep.subr.mxu0 0.0
    %1168 = vmatpush1.msra.mxu0 %v143
    %1169 = vmatprep.subr.mxu0 0.0
    %1170 = vmatpush2.msra.mxu0 0.0
    %1171 = vmatprep.subr.mxu0 0.0
    %1172 = vmatpush2.msra.mxu0 0.0
    %1173 = vmatprep.subr.mxu0 0.0
    %1174 = vmatpush2.msra.mxu0 0.0
    %1175 = vmatprep.subr.mxu0 0.0
    %1176 = vmatpush2.msra.mxu0 0.0
    %1177 = vmatprep.subr.mxu0 0.0
    %1178 = vmatpush2.msra.mxu0 0.0
    %1179 = vmatprep.subr.mxu0 0.0
    %1180 = vmatpush2.msra.mxu0 0.0
    %1181 = vmatprep.subr.mxu0 0.0
    %1182 = vmatpush2.msra.mxu0 0.0
    %1183 = vmatprep.subr.mxu0 0.0
    %1184 = vmatpush2.msra.mxu0 0.0
    %1185 = vmatprep.subr.mxu0 0.0
    %1186 = vmatpush2.msra.mxu0 0.0
    %1187 = vmatprep.subr.mxu0 0.0
    %1188 = vmatpush2.msra.mxu0 0.0
    %1189 = vmatprep.subr.mxu0 0.0
    %1190 = vmatpush2.msra.mxu0 0.0
    %1191 = vmatprep.subr.mxu0 0.0
    %1192 = vmatpush2.msra.mxu0 0.0
    %1193 = vmatprep.subr.mxu0 0.0
    %1194 = vmatpush2.msra.mxu0 0.0
    %1195 = vmatprep.subr.mxu0 0.0
    %1196 = vmatpush2.msra.mxu0 0.0
    %1197 = vmatprep.subr.mxu0 0.0
    %1198 = vmatpush2.msra.mxu0 0.0
    %1199 = vmatprep.subr.mxu0 0.0
    %1200 = vmatpush2.msra.mxu0 0.0
    %1201 = vmatprep.mubr.f32.mxu0 0.0
    %1202 = vmatmul.mubr.f32.gmra.mxu0 %v1135
    %v1203 = vpop.f32.mrf.mxu0
    %v1204 = vadd.f32 %v170, %v1203
    %v1205 = vpop.f32.mrf.mxu0
    %1206 = vdwg.mxu0
    %v1207 = vmul.f32 %v444, %v957
    %v1208 = vadd.f32 %v1207, %v1204
    %v1209 = vmul.f32 %v960, %v440
    %v1210 = vsub.f32 %v1208, %v1209
    %vm1211 = vcmp.gt.f32.partialorder %v1210, %v440
    %v1212 = vsel %vm1211, 1, 0
    %v1213 = vcvt.s32.f32 %v1212
    %v1215 = vsel %vm281, %v1213, 0
    %1217 = vmatprep.subr.mxu0 0.0
    %1218 = vmatpush1.msra.mxu0 0.0
    %1219 = vmatprep.subr.mxu0 0.0
    %1220 = vmatpush1.msra.mxu0 0.0
    %1221 = vmatprep.subr.mxu0 0.0
    %1222 = vmatpush1.msra.mxu0 0.0
    %1223 = vmatprep.subr.mxu0 0.0
    %1224 = vmatpush1.msra.mxu0 0.0
    %1225 = vmatprep.subr.mxu0 0.0
    %1226 = vmatpush1.msra.mxu0 0.0
    %1227 = vmatprep.subr.mxu0 0.0
    %1228 = vmatpush1.msra.mxu0 0.0
    %1229 = vmatprep.subr.mxu0 0.0
    %1230 = vmatpush1.msra.mxu0 0.0
    %1231 = vmatprep.subr.mxu0 0.0
    %1232 = vmatpush1.msra.mxu0 0.0
    %1233 = vmatprep.subr.mxu0 0.0
    %1234 = vmatpush1.msra.mxu0 0.0
    %1235 = vmatprep.subr.mxu0 0.0
    %1236 = vmatpush1.msra.mxu0 0.0
    %1237 = vmatprep.subr.mxu0 0.0
    %1238 = vmatpush1.msra.mxu0 0.0
    %1239 = vmatprep.subr.mxu0 0.0
    %1240 = vmatpush1.msra.mxu0 0.0
    %1241 = vmatprep.subr.mxu0 0.0
    %1242 = vmatpush1.msra.mxu0 %v150
    %1243 = vmatprep.subr.mxu0 0.0
    %1244 = vmatpush1.msra.mxu0 %v149
    %1245 = vmatprep.subr.mxu0 0.0
    %1246 = vmatpush1.msra.mxu0 %v148
    %1247 = vmatprep.subr.mxu0 0.0
    %1248 = vmatpush1.msra.mxu0 %v147
    %1249 = vmatprep.subr.mxu0 0.0
    %1250 = vmatpush2.msra.mxu0 0.0
    %1251 = vmatprep.subr.mxu0 0.0
    %1252 = vmatpush2.msra.mxu0 0.0
    %1253 = vmatprep.subr.mxu0 0.0
    %1254 = vmatpush2.msra.mxu0 0.0
    %1255 = vmatprep.subr.mxu0 0.0
    %1256 = vmatpush2.msra.mxu0 0.0
    %1257 = vmatprep.subr.mxu0 0.0
    %1258 = vmatpush2.msra.mxu0 0.0
    %1259 = vmatprep.subr.mxu0 0.0
    %1260 = vmatpush2.msra.mxu0 0.0
    %1261 = vmatprep.subr.mxu0 0.0
    %1262 = vmatpush2.msra.mxu0 0.0
    %1263 = vmatprep.subr.mxu0 0.0
    %1264 = vmatpush2.msra.mxu0 0.0
    %1265 = vmatprep.subr.mxu0 0.0
    %1266 = vmatpush2.msra.mxu0 0.0
    %1267 = vmatprep.subr.mxu0 0.0
    %1268 = vmatpush2.msra.mxu0 0.0
    %1269 = vmatprep.subr.mxu0 0.0
    %1270 = vmatpush2.msra.mxu0 0.0
    %1271 = vmatprep.subr.mxu0 0.0
    %1272 = vmatpush2.msra.mxu0 0.0
    %1273 = vmatprep.subr.mxu0 0.0
    %1274 = vmatpush2.msra.mxu0 0.0
    %1275 = vmatprep.subr.mxu0 0.0
    %1276 = vmatpush2.msra.mxu0 0.0
    %1277 = vmatprep.subr.mxu0 0.0
    %1278 = vmatpush2.msra.mxu0 0.0
    %1279 = vmatprep.subr.mxu0 0.0
    %1280 = vmatpush2.msra.mxu0 0.0
    %1281 = vmatprep.mubr.f32.mxu0 0.0
    %1282 = vmatmul.mubr.f32.gmra.mxu0 %v1215
    %v1283 = vpop.f32.mrf.mxu0
    %v1284 = vadd.f32 %v177, %v1283
    %v1285 = vpop.f32.mrf.mxu0
    %1286 = vdwg.mxu0
    %v1287 = vmul.f32 %v529, %v1037
    %v1288 = vadd.f32 %v1287, %v1284
    %v1289 = vmul.f32 %v1040, %v525
    %v1290 = vsub.f32 %v1288, %v1289
    %vm1291 = vcmp.gt.f32.partialorder %v1290, %v525
    %v1292 = vsel %vm1291, 1, 0
    %v1293 = vcvt.s32.f32 %v1292
    %s1294 = scalar_lea.vmem [#allocation17], 24
    %1295 = vst.msk [vmem:[%s1294] sm:$0xff] %vm537, %v1284
    %s1296 = scalar_lea.vmem [#allocation18], 24
    %1297 = vst.msk [vmem:[%s1296] sm:$0xff] %vm537, %v1293
    %s1298 = scalar_lea.vmem [#allocation20], 24
    %1299 = vst.msk [vmem:[%s1298] sm:$0xff] %vm537, %v1290
    %v1300 = vmul.f32 %v273, %v1050
    %v1301 = vadd.f32 %v1300, %v266
    %v1302 = vmul.f32 %v1053, %v269
    %v1303 = vsub.f32 %v1301, %v1302
    %vm1304 = vcmp.gt.f32.partialorder %v1303, %v269
    %v1305 = vsel %vm1304, 1, 0
    %v1306 = vcvt.s32.f32 %v1305
    %v1308 = vsel %vm281, %v1306, 0
    %1310 = vmatprep.subr.mxu0 0.0
    %1311 = vmatpush1.msra.mxu0 0.0
    %1312 = vmatprep.subr.mxu0 0.0
    %1313 = vmatpush1.msra.mxu0 0.0
    %1314 = vmatprep.subr.mxu0 0.0
    %1315 = vmatpush1.msra.mxu0 0.0
    %1316 = vmatprep.subr.mxu0 0.0
    %1317 = vmatpush1.msra.mxu0 0.0
    %1318 = vmatprep.subr.mxu0 0.0
    %1319 = vmatpush1.msra.mxu0 0.0
    %1320 = vmatprep.subr.mxu0 0.0
    %1321 = vmatpush1.msra.mxu0 0.0
    %1322 = vmatprep.subr.mxu0 0.0
    %1323 = vmatpush1.msra.mxu0 0.0
    %1324 = vmatprep.subr.mxu0 0.0
    %1325 = vmatpush1.msra.mxu0 0.0
    %1326 = vmatprep.subr.mxu0 0.0
    %1327 = vmatpush1.msra.mxu0 0.0
    %1328 = vmatprep.subr.mxu0 0.0
    %1329 = vmatpush1.msra.mxu0 0.0
    %1330 = vmatprep.subr.mxu0 0.0
    %1331 = vmatpush1.msra.mxu0 0.0
    %1332 = vmatprep.subr.mxu0 0.0
    %1333 = vmatpush1.msra.mxu0 0.0
    %1334 = vmatprep.subr.mxu0 0.0
    %1335 = vmatpush1.msra.mxu0 %v142
    %1336 = vmatprep.subr.mxu0 0.0
    %1337 = vmatpush1.msra.mxu0 %v141
    %1338 = vmatprep.subr.mxu0 0.0
    %1339 = vmatpush1.msra.mxu0 %v140
    %1340 = vmatprep.subr.mxu0 0.0
    %1341 = vmatpush1.msra.mxu0 %v139
    %1342 = vmatprep.subr.mxu0 0.0
    %1343 = vmatpush2.msra.mxu0 0.0
    %1344 = vmatprep.subr.mxu0 0.0
    %1345 = vmatpush2.msra.mxu0 0.0
    %1346 = vmatprep.subr.mxu0 0.0
    %1347 = vmatpush2.msra.mxu0 0.0
    %1348 = vmatprep.subr.mxu0 0.0
    %1349 = vmatpush2.msra.mxu0 0.0
    %1350 = vmatprep.subr.mxu0 0.0
    %1351 = vmatpush2.msra.mxu0 0.0
    %1352 = vmatprep.subr.mxu0 0.0
    %1353 = vmatpush2.msra.mxu0 0.0
    %1354 = vmatprep.subr.mxu0 0.0
    %1355 = vmatpush2.msra.mxu0 0.0
    %1356 = vmatprep.subr.mxu0 0.0
    %1357 = vmatpush2.msra.mxu0 0.0
    %1358 = vmatprep.subr.mxu0 0.0
    %1359 = vmatpush2.msra.mxu0 0.0
    %1360 = vmatprep.subr.mxu0 0.0
    %1361 = vmatpush2.msra.mxu0 0.0
    %1362 = vmatprep.subr.mxu0 0.0
    %1363 = vmatpush2.msra.mxu0 0.0
    %1364 = vmatprep.subr.mxu0 0.0
    %1365 = vmatpush2.msra.mxu0 0.0
    %1366 = vmatprep.subr.mxu0 0.0
    %1367 = vmatpush2.msra.mxu0 0.0
    %1368 = vmatprep.subr.mxu0 0.0
    %1369 = vmatpush2.msra.mxu0 0.0
    %1370 = vmatprep.subr.mxu0 0.0
    %1371 = vmatpush2.msra.mxu0 0.0
    %1372 = vmatprep.subr.mxu0 0.0
    %1373 = vmatpush2.msra.mxu0 0.0
    %1374 = vmatprep.mubr.f32.mxu0 0.0
    %1375 = vmatmul.mubr.f32.gmra.mxu0 %v1308
    %v1376 = vpop.f32.mrf.mxu0
    %v1377 = vadd.f32 %v163, %v1376
    %v1378 = vpop.f32.mrf.mxu0
    %1379 = vdwg.mxu0
    %v1380 = vmul.f32 %v359, %v1130
    %v1381 = vadd.f32 %v1380, %v1377
    %v1382 = vmul.f32 %v1133, %v355
    %v1383 = vsub.f32 %v1381, %v1382
    %vm1384 = vcmp.gt.f32.partialorder %v1383, %v355
    %v1385 = vsel %vm1384, 1, 0
    %v1386 = vcvt.s32.f32 %v1385
    %v1388 = vsel %vm281, %v1386, 0
    %1390 = vmatprep.subr.mxu0 0.0
    %1391 = vmatpush1.msra.mxu0 0.0
    %1392 = vmatprep.subr.mxu0 0.0
    %1393 = vmatpush1.msra.mxu0 0.0
    %1394 = vmatprep.subr.mxu0 0.0
    %1395 = vmatpush1.msra.mxu0 0.0
    %1396 = vmatprep.subr.mxu0 0.0
    %1397 = vmatpush1.msra.mxu0 0.0
    %1398 = vmatprep.subr.mxu0 0.0
    %1399 = vmatpush1.msra.mxu0 0.0
    %1400 = vmatprep.subr.mxu0 0.0
    %1401 = vmatpush1.msra.mxu0 0.0
    %1402 = vmatprep.subr.mxu0 0.0
    %1403 = vmatpush1.msra.mxu0 0.0
    %1404 = vmatprep.subr.mxu0 0.0
    %1405 = vmatpush1.msra.mxu0 0.0
    %1406 = vmatprep.subr.mxu0 0.0
    %1407 = vmatpush1.msra.mxu0 0.0
    %1408 = vmatprep.subr.mxu0 0.0
    %1409 = vmatpush1.msra.mxu0 0.0
    %1410 = vmatprep.subr.mxu0 0.0
    %1411 = vmatpush1.msra.mxu0 0.0
    %1412 = vmatprep.subr.mxu0 0.0
    %1413 = vmatpush1.msra.mxu0 0.0
    %1414 = vmatprep.subr.mxu0 0.0
    %1415 = vmatpush1.msra.mxu0 %v146
    %1416 = vmatprep.subr.mxu0 0.0
    %1417 = vmatpush1.msra.mxu0 %v145
    %1418 = vmatprep.subr.mxu0 0.0
    %1419 = vmatpush1.msra.mxu0 %v144
    %1420 = vmatprep.subr.mxu0 0.0
    %1421 = vmatpush1.msra.mxu0 %v143
    %1422 = vmatprep.subr.mxu0 0.0
    %1423 = vmatpush2.msra.mxu0 0.0
    %1424 = vmatprep.subr.mxu0 0.0
    %1425 = vmatpush2.msra.mxu0 0.0
    %1426 = vmatprep.subr.mxu0 0.0
    %1427 = vmatpush2.msra.mxu0 0.0
    %1428 = vmatprep.subr.mxu0 0.0
    %1429 = vmatpush2.msra.mxu0 0.0
    %1430 = vmatprep.subr.mxu0 0.0
    %1431 = vmatpush2.msra.mxu0 0.0
    %1432 = vmatprep.subr.mxu0 0.0
    %1433 = vmatpush2.msra.mxu0 0.0
    %1434 = vmatprep.subr.mxu0 0.0
    %1435 = vmatpush2.msra.mxu0 0.0
    %1436 = vmatprep.subr.mxu0 0.0
    %1437 = vmatpush2.msra.mxu0 0.0
    %1438 = vmatprep.subr.mxu0 0.0
    %1439 = vmatpush2.msra.mxu0 0.0
    %1440 = vmatprep.subr.mxu0 0.0
    %1441 = vmatpush2.msra.mxu0 0.0
    %1442 = vmatprep.subr.mxu0 0.0
    %1443 = vmatpush2.msra.mxu0 0.0
    %1444 = vmatprep.subr.mxu0 0.0
    %1445 = vmatpush2.msra.mxu0 0.0
    %1446 = vmatprep.subr.mxu0 0.0
    %1447 = vmatpush2.msra.mxu0 0.0
    %1448 = vmatprep.subr.mxu0 0.0
    %1449 = vmatpush2.msra.mxu0 0.0
    %1450 = vmatprep.subr.mxu0 0.0
    %1451 = vmatpush2.msra.mxu0 0.0
    %1452 = vmatprep.subr.mxu0 0.0
    %1453 = vmatpush2.msra.mxu0 0.0
    %1454 = vmatprep.mubr.f32.mxu0 0.0
    %1455 = vmatmul.mubr.f32.gmra.mxu0 %v1388
    %v1456 = vpop.f32.mrf.mxu0
    %v1457 = vadd.f32 %v170, %v1456
    %v1458 = vpop.f32.mrf.mxu0
    %1459 = vdwg.mxu0
    %v1460 = vmul.f32 %v444, %v1210
    %v1461 = vadd.f32 %v1460, %v1457
    %v1462 = vmul.f32 %v1213, %v440
    %v1463 = vsub.f32 %v1461, %v1462
    %vm1464 = vcmp.gt.f32.partialorder %v1463, %v440
    %v1465 = vsel %vm1464, 1, 0
    %v1466 = vcvt.s32.f32 %v1465
    %v1468 = vsel %vm281, %v1466, 0
    %1470 = vmatprep.subr.mxu0 0.0
    %1471 = vmatpush1.msra.mxu0 0.0
    %1472 = vmatprep.subr.mxu0 0.0
    %1473 = vmatpush1.msra.mxu0 0.0
    %1474 = vmatprep.subr.mxu0 0.0
    %1475 = vmatpush1.msra.mxu0 0.0
    %1476 = vmatprep.subr.mxu0 0.0
    %1477 = vmatpush1.msra.mxu0 0.0
    %1478 = vmatprep.subr.mxu0 0.0
    %1479 = vmatpush1.msra.mxu0 0.0
    %1480 = vmatprep.subr.mxu0 0.0
    %1481 = vmatpush1.msra.mxu0 0.0
    %1482 = vmatprep.subr.mxu0 0.0
    %1483 = vmatpush1.msra.mxu0 0.0
    %1484 = vmatprep.subr.mxu0 0.0
    %1485 = vmatpush1.msra.mxu0 0.0
    %1486 = vmatprep.subr.mxu0 0.0
    %1487 = vmatpush1.msra.mxu0 0.0
    %1488 = vmatprep.subr.mxu0 0.0
    %1489 = vmatpush1.msra.mxu0 0.0
    %1490 = vmatprep.subr.mxu0 0.0
    %1491 = vmatpush1.msra.mxu0 0.0
    %1492 = vmatprep.subr.mxu0 0.0
    %1493 = vmatpush1.msra.mxu0 0.0
    %1494 = vmatprep.subr.mxu0 0.0
    %1495 = vmatpush1.msra.mxu0 %v150
    %1496 = vmatprep.subr.mxu0 0.0
    %1497 = vmatpush1.msra.mxu0 %v149
    %1498 = vmatprep.subr.mxu0 0.0
    %1499 = vmatpush1.msra.mxu0 %v148
    %1500 = vmatprep.subr.mxu0 0.0
    %1501 = vmatpush1.msra.mxu0 %v147
    %1502 = vmatprep.subr.mxu0 0.0
    %1503 = vmatpush2.msra.mxu0 0.0
    %1504 = vmatprep.subr.mxu0 0.0
    %1505 = vmatpush2.msra.mxu0 0.0
    %1506 = vmatprep.subr.mxu0 0.0
    %1507 = vmatpush2.msra.mxu0 0.0
    %1508 = vmatprep.subr.mxu0 0.0
    %1509 = vmatpush2.msra.mxu0 0.0
    %1510 = vmatprep.subr.mxu0 0.0
    %1511 = vmatpush2.msra.mxu0 0.0
    %1512 = vmatprep.subr.mxu0 0.0
    %1513 = vmatpush2.msra.mxu0 0.0
    %1514 = vmatprep.subr.mxu0 0.0
    %1515 = vmatpush2.msra.mxu0 0.0
    %1516 = vmatprep.subr.mxu0 0.0
    %1517 = vmatpush2.msra.mxu0 0.0
    %1518 = vmatprep.subr.mxu0 0.0
    %1519 = vmatpush2.msra.mxu0 0.0
    %1520 = vmatprep.subr.mxu0 0.0
    %1521 = vmatpush2.msra.mxu0 0.0
    %1522 = vmatprep.subr.mxu0 0.0
    %1523 = vmatpush2.msra.mxu0 0.0
    %1524 = vmatprep.subr.mxu0 0.0
    %1525 = vmatpush2.msra.mxu0 0.0
    %1526 = vmatprep.subr.mxu0 0.0
    %1527 = vmatpush2.msra.mxu0 0.0
    %1528 = vmatprep.subr.mxu0 0.0
    %1529 = vmatpush2.msra.mxu0 0.0
    %1530 = vmatprep.subr.mxu0 0.0
    %1531 = vmatpush2.msra.mxu0 0.0
    %1532 = vmatprep.subr.mxu0 0.0
    %1533 = vmatpush2.msra.mxu0 0.0
    %1534 = vmatprep.mubr.f32.mxu0 0.0
    %1535 = vmatmul.mubr.f32.gmra.mxu0 %v1468
    %v1536 = vpop.f32.mrf.mxu0
    %v1537 = vadd.f32 %v177, %v1536
    %v1538 = vpop.f32.mrf.mxu0
    %1539 = vdwg.mxu0
    %v1540 = vmul.f32 %v529, %v1290
    %v1541 = vadd.f32 %v1540, %v1537
    %v1542 = vmul.f32 %v1293, %v525
    %v1543 = vsub.f32 %v1541, %v1542
    %vm1544 = vcmp.gt.f32.partialorder %v1543, %v525
    %v1545 = vsel %vm1544, 1, 0
    %v1546 = vcvt.s32.f32 %v1545
    %s1547 = scalar_lea.vmem [#allocation17], 32
    %1548 = vst.msk [vmem:[%s1547] sm:$0xff] %vm537, %v1537
    %s1549 = scalar_lea.vmem [#allocation18], 32
    %1550 = vst.msk [vmem:[%s1549] sm:$0xff] %vm537, %v1546
    %s1551 = scalar_lea.vmem [#allocation20], 32
    %1552 = vst.msk [vmem:[%s1551] sm:$0xff] %vm537, %v1543
    %v1553 = vmul.f32 %v273, %v1303
    %v1554 = vadd.f32 %v1553, %v266
    %v1555 = vmul.f32 %v1306, %v269
    %v1556 = vsub.f32 %v1554, %v1555
    %vm1557 = vcmp.gt.f32.partialorder %v1556, %v269
    %v1558 = vsel %vm1557, 1, 0
    %v1559 = vcvt.s32.f32 %v1558
    %v1561 = vsel %vm281, %v1559, 0
    %1563 = vmatprep.subr.mxu0 0.0
    %1564 = vmatpush1.msra.mxu0 0.0
    %1565 = vmatprep.subr.mxu0 0.0
    %1566 = vmatpush1.msra.mxu0 0.0
    %1567 = vmatprep.subr.mxu0 0.0
    %1568 = vmatpush1.msra.mxu0 0.0
    %1569 = vmatprep.subr.mxu0 0.0
    %1570 = vmatpush1.msra.mxu0 0.0
    %1571 = vmatprep.subr.mxu0 0.0
    %1572 = vmatpush1.msra.mxu0 0.0
    %1573 = vmatprep.subr.mxu0 0.0
    %1574 = vmatpush1.msra.mxu0 0.0
    %1575 = vmatprep.subr.mxu0 0.0
    %1576 = vmatpush1.msra.mxu0 0.0
    %1577 = vmatprep.subr.mxu0 0.0
    %1578 = vmatpush1.msra.mxu0 0.0
    %1579 = vmatprep.subr.mxu0 0.0
    %1580 = vmatpush1.msra.mxu0 0.0
    %1581 = vmatprep.subr.mxu0 0.0
    %1582 = vmatpush1.msra.mxu0 0.0
    %1583 = vmatprep.subr.mxu0 0.0
    %1584 = vmatpush1.msra.mxu0 0.0
    %1585 = vmatprep.subr.mxu0 0.0
    %1586 = vmatpush1.msra.mxu0 0.0
    %1587 = vmatprep.subr.mxu0 0.0
    %1588 = vmatpush1.msra.mxu0 %v142
    %1589 = vmatprep.subr.mxu0 0.0
    %1590 = vmatpush1.msra.mxu0 %v141
    %1591 = vmatprep.subr.mxu0 0.0
    %1592 = vmatpush1.msra.mxu0 %v140
    %1593 = vmatprep.subr.mxu0 0.0
    %1594 = vmatpush1.msra.mxu0 %v139
    %1595 = vmatprep.subr.mxu0 0.0
    %1596 = vmatpush2.msra.mxu0 0.0
    %1597 = vmatprep.subr.mxu0 0.0
    %1598 = vmatpush2.msra.mxu0 0.0
    %1599 = vmatprep.subr.mxu0 0.0
    %1600 = vmatpush2.msra.mxu0 0.0
    %1601 = vmatprep.subr.mxu0 0.0
    %1602 = vmatpush2.msra.mxu0 0.0
    %1603 = vmatprep.subr.mxu0 0.0
    %1604 = vmatpush2.msra.mxu0 0.0
    %1605 = vmatprep.subr.mxu0 0.0
    %1606 = vmatpush2.msra.mxu0 0.0
    %1607 = vmatprep.subr.mxu0 0.0
    %1608 = vmatpush2.msra.mxu0 0.0
    %1609 = vmatprep.subr.mxu0 0.0
    %1610 = vmatpush2.msra.mxu0 0.0
    %1611 = vmatprep.subr.mxu0 0.0
    %1612 = vmatpush2.msra.mxu0 0.0
    %1613 = vmatprep.subr.mxu0 0.0
    %1614 = vmatpush2.msra.mxu0 0.0
    %1615 = vmatprep.subr.mxu0 0.0
    %1616 = vmatpush2.msra.mxu0 0.0
    %1617 = vmatprep.subr.mxu0 0.0
    %1618 = vmatpush2.msra.mxu0 0.0
    %1619 = vmatprep.subr.mxu0 0.0
    %1620 = vmatpush2.msra.mxu0 0.0
    %1621 = vmatprep.subr.mxu0 0.0
    %1622 = vmatpush2.msra.mxu0 0.0
    %1623 = vmatprep.subr.mxu0 0.0
    %1624 = vmatpush2.msra.mxu0 0.0
    %1625 = vmatprep.subr.mxu0 0.0
    %1626 = vmatpush2.msra.mxu0 0.0
    %1627 = vmatprep.mubr.f32.mxu0 0.0
    %1628 = vmatmul.mubr.f32.gmra.mxu0 %v1561
    %v1629 = vpop.f32.mrf.mxu0
    %v1630 = vadd.f32 %v163, %v1629
    %v1631 = vpop.f32.mrf.mxu0
    %1632 = vdwg.mxu0
    %v1633 = vmul.f32 %v359, %v1383
    %v1634 = vadd.f32 %v1633, %v1630
    %v1635 = vmul.f32 %v1386, %v355
    %v1636 = vsub.f32 %v1634, %v1635
    %vm1637 = vcmp.gt.f32.partialorder %v1636, %v355
    %v1638 = vsel %vm1637, 1, 0
    %v1639 = vcvt.s32.f32 %v1638
    %v1641 = vsel %vm281, %v1639, 0
    %1643 = vmatprep.subr.mxu0 0.0
    %1644 = vmatpush1.msra.mxu0 0.0
    %1645 = vmatprep.subr.mxu0 0.0
    %1646 = vmatpush1.msra.mxu0 0.0
    %1647 = vmatprep.subr.mxu0 0.0
    %1648 = vmatpush1.msra.mxu0 0.0
    %1649 = vmatprep.subr.mxu0 0.0
    %1650 = vmatpush1.msra.mxu0 0.0
    %1651 = vmatprep.subr.mxu0 0.0
    %1652 = vmatpush1.msra.mxu0 0.0
    %1653 = vmatprep.subr.mxu0 0.0
    %1654 = vmatpush1.msra.mxu0 0.0
    %1655 = vmatprep.subr.mxu0 0.0
    %1656 = vmatpush1.msra.mxu0 0.0
    %1657 = vmatprep.subr.mxu0 0.0
    %1658 = vmatpush1.msra.mxu0 0.0
    %1659 = vmatprep.subr.mxu0 0.0
    %1660 = vmatpush1.msra.mxu0 0.0
    %1661 = vmatprep.subr.mxu0 0.0
    %1662 = vmatpush1.msra.mxu0 0.0
    %1663 = vmatprep.subr.mxu0 0.0
    %1664 = vmatpush1.msra.mxu0 0.0
    %1665 = vmatprep.subr.mxu0 0.0
    %1666 = vmatpush1.msra.mxu0 0.0
    %1667 = vmatprep.subr.mxu0 0.0
    %1668 = vmatpush1.msra.mxu0 %v146
    %1669 = vmatprep.subr.mxu0 0.0
    %1670 = vmatpush1.msra.mxu0 %v145
    %1671 = vmatprep.subr.mxu0 0.0
    %1672 = vmatpush1.msra.mxu0 %v144
    %1673 = vmatprep.subr.mxu0 0.0
    %1674 = vmatpush1.msra.mxu0 %v143
    %1675 = vmatprep.subr.mxu0 0.0
    %1676 = vmatpush2.msra.mxu0 0.0
    %1677 = vmatprep.subr.mxu0 0.0
    %1678 = vmatpush2.msra.mxu0 0.0
    %1679 = vmatprep.subr.mxu0 0.0
    %1680 = vmatpush2.msra.mxu0 0.0
    %1681 = vmatprep.subr.mxu0 0.0
    %1682 = vmatpush2.msra.mxu0 0.0
    %1683 = vmatprep.subr.mxu0 0.0
    %1684 = vmatpush2.msra.mxu0 0.0
    %1685 = vmatprep.subr.mxu0 0.0
    %1686 = vmatpush2.msra.mxu0 0.0
    %1687 = vmatprep.subr.mxu0 0.0
    %1688 = vmatpush2.msra.mxu0 0.0
    %1689 = vmatprep.subr.mxu0 0.0
    %1690 = vmatpush2.msra.mxu0 0.0
    %1691 = vmatprep.subr.mxu0 0.0
    %1692 = vmatpush2.msra.mxu0 0.0
    %1693 = vmatprep.subr.mxu0 0.0
    %1694 = vmatpush2.msra.mxu0 0.0
    %1695 = vmatprep.subr.mxu0 0.0
    %1696 = vmatpush2.msra.mxu0 0.0
    %1697 = vmatprep.subr.mxu0 0.0
    %1698 = vmatpush2.msra.mxu0 0.0
    %1699 = vmatprep.subr.mxu0 0.0
    %1700 = vmatpush2.msra.mxu0 0.0
    %1701 = vmatprep.subr.mxu0 0.0
    %1702 = vmatpush2.msra.mxu0 0.0
    %1703 = vmatprep.subr.mxu0 0.0
    %1704 = vmatpush2.msra.mxu0 0.0
    %1705 = vmatprep.subr.mxu0 0.0
    %1706 = vmatpush2.msra.mxu0 0.0
    %1707 = vmatprep.mubr.f32.mxu0 0.0
    %1708 = vmatmul.mubr.f32.gmra.mxu0 %v1641
    %v1709 = vpop.f32.mrf.mxu0
    %v1710 = vadd.f32 %v170, %v1709
    %v1711 = vpop.f32.mrf.mxu0
    %1712 = vdwg.mxu0
    %v1713 = vmul.f32 %v444, %v1463
    %v1714 = vadd.f32 %v1713, %v1710
    %v1715 = vmul.f32 %v1466, %v440
    %v1716 = vsub.f32 %v1714, %v1715
    %vm1717 = vcmp.gt.f32.partialorder %v1716, %v440
    %v1718 = vsel %vm1717, 1, 0
    %v1719 = vcvt.s32.f32 %v1718
    %v1721 = vsel %vm281, %v1719, 0
    %1723 = vmatprep.subr.mxu0 0.0
    %1724 = vmatpush1.msra.mxu0 0.0
    %1725 = vmatprep.subr.mxu0 0.0
    %1726 = vmatpush1.msra.mxu0 0.0
    %1727 = vmatprep.subr.mxu0 0.0
    %1728 = vmatpush1.msra.mxu0 0.0
    %1729 = vmatprep.subr.mxu0 0.0
    %1730 = vmatpush1.msra.mxu0 0.0
    %1731 = vmatprep.subr.mxu0 0.0
    %1732 = vmatpush1.msra.mxu0 0.0
    %1733 = vmatprep.subr.mxu0 0.0
    %1734 = vmatpush1.msra.mxu0 0.0
    %1735 = vmatprep.subr.mxu0 0.0
    %1736 = vmatpush1.msra.mxu0 0.0
    %1737 = vmatprep.subr.mxu0 0.0
    %1738 = vmatpush1.msra.mxu0 0.0
    %1739 = vmatprep.subr.mxu0 0.0
    %1740 = vmatpush1.msra.mxu0 0.0
    %1741 = vmatprep.subr.mxu0 0.0
    %1742 = vmatpush1.msra.mxu0 0.0
    %1743 = vmatprep.subr.mxu0 0.0
    %1744 = vmatpush1.msra.mxu0 0.0
    %1745 = vmatprep.subr.mxu0 0.0
    %1746 = vmatpush1.msra.mxu0 0.0
    %1747 = vmatprep.subr.mxu0 0.0
    %1748 = vmatpush1.msra.mxu0 %v150
    %1749 = vmatprep.subr.mxu0 0.0
    %1750 = vmatpush1.msra.mxu0 %v149
    %1751 = vmatprep.subr.mxu0 0.0
    %1752 = vmatpush1.msra.mxu0 %v148
    %1753 = vmatprep.subr.mxu0 0.0
    %1754 = vmatpush1.msra.mxu0 %v147
    %1755 = vmatprep.subr.mxu0 0.0
    %1756 = vmatpush2.msra.mxu0 0.0
    %1757 = vmatprep.subr.mxu0 0.0
    %1758 = vmatpush2.msra.mxu0 0.0
    %1759 = vmatprep.subr.mxu0 0.0
    %1760 = vmatpush2.msra.mxu0 0.0
    %1761 = vmatprep.subr.mxu0 0.0
    %1762 = vmatpush2.msra.mxu0 0.0
    %1763 = vmatprep.subr.mxu0 0.0
    %1764 = vmatpush2.msra.mxu0 0.0
    %1765 = vmatprep.subr.mxu0 0.0
    %1766 = vmatpush2.msra.mxu0 0.0
    %1767 = vmatprep.subr.mxu0 0.0
    %1768 = vmatpush2.msra.mxu0 0.0
    %1769 = vmatprep.subr.mxu0 0.0
    %1770 = vmatpush2.msra.mxu0 0.0
    %1771 = vmatprep.subr.mxu0 0.0
    %1772 = vmatpush2.msra.mxu0 0.0
    %1773 = vmatprep.subr.mxu0 0.0
    %1774 = vmatpush2.msra.mxu0 0.0
    %1775 = vmatprep.subr.mxu0 0.0
    %1776 = vmatpush2.msra.mxu0 0.0
    %1777 = vmatprep.subr.mxu0 0.0
    %1778 = vmatpush2.msra.mxu0 0.0
    %1779 = vmatprep.subr.mxu0 0.0
    %1780 = vmatpush2.msra.mxu0 0.0
    %1781 = vmatprep.subr.mxu0 0.0
    %1782 = vmatpush2.msra.mxu0 0.0
    %1783 = vmatprep.subr.mxu0 0.0
    %1784 = vmatpush2.msra.mxu0 0.0
    %1785 = vmatprep.subr.mxu0 0.0
    %1786 = vmatpush2.msra.mxu0 0.0
    %1787 = vmatprep.mubr.f32.mxu0 0.0
    %1788 = vmatmul.mubr.f32.gmra.mxu0 %v1721
    %v1789 = vpop.f32.mrf.mxu0
    %v1790 = vadd.f32 %v177, %v1789
    %v1791 = vpop.f32.mrf.mxu0
    %1792 = vdwg.mxu0
    %v1793 = vmul.f32 %v529, %v1543
    %v1794 = vadd.f32 %v1793, %v1790
    %v1795 = vmul.f32 %v1546, %v525
    %v1796 = vsub.f32 %v1794, %v1795
    %vm1797 = vcmp.gt.f32.partialorder %v1796, %v525
    %v1798 = vsel %vm1797, 1, 0
    %v1799 = vcvt.s32.f32 %v1798
    %s1800 = scalar_lea.vmem [#allocation17], 40
    %1801 = vst.msk [vmem:[%s1800] sm:$0xff] %vm537, %v1790
    %s1802 = scalar_lea.vmem [#allocation18], 40
    %1803 = vst.msk [vmem:[%s1802] sm:$0xff] %vm537, %v1799
    %s1804 = scalar_lea.vmem [#allocation20], 40
    %1805 = vst.msk [vmem:[%s1804] sm:$0xff] %vm537, %v1796
    %v1806 = vmul.f32 %v273, %v1556
    %v1807 = vadd.f32 %v1806, %v266
    %v1808 = vmul.f32 %v1559, %v269
    %v1809 = vsub.f32 %v1807, %v1808
    %vm1810 = vcmp.gt.f32.partialorder %v1809, %v269
    %v1811 = vsel %vm1810, 1, 0
    %v1812 = vcvt.s32.f32 %v1811
    %v1814 = vsel %vm281, %v1812, 0
    %1816 = vmatprep.subr.mxu0 0.0
    %1817 = vmatpush1.msra.mxu0 0.0
    %1818 = vmatprep.subr.mxu0 0.0
    %1819 = vmatpush1.msra.mxu0 0.0
    %1820 = vmatprep.subr.mxu0 0.0
    %1821 = vmatpush1.msra.mxu0 0.0
    %1822 = vmatprep.subr.mxu0 0.0
    %1823 = vmatpush1.msra.mxu0 0.0
    %1824 = vmatprep.subr.mxu0 0.0
    %1825 = vmatpush1.msra.mxu0 0.0
    %1826 = vmatprep.subr.mxu0 0.0
    %1827 = vmatpush1.msra.mxu0 0.0
    %1828 = vmatprep.subr.mxu0 0.0
    %1829 = vmatpush1.msra.mxu0 0.0
    %1830 = vmatprep.subr.mxu0 0.0
    %1831 = vmatpush1.msra.mxu0 0.0
    %1832 = vmatprep.subr.mxu0 0.0
    %1833 = vmatpush1.msra.mxu0 0.0
    %1834 = vmatprep.subr.mxu0 0.0
    %1835 = vmatpush1.msra.mxu0 0.0
    %1836 = vmatprep.subr.mxu0 0.0
    %1837 = vmatpush1.msra.mxu0 0.0
    %1838 = vmatprep.subr.mxu0 0.0
    %1839 = vmatpush1.msra.mxu0 0.0
    %1840 = vmatprep.subr.mxu0 0.0
    %1841 = vmatpush1.msra.mxu0 %v142
    %1842 = vmatprep.subr.mxu0 0.0
    %1843 = vmatpush1.msra.mxu0 %v141
    %1844 = vmatprep.subr.mxu0 0.0
    %1845 = vmatpush1.msra.mxu0 %v140
    %1846 = vmatprep.subr.mxu0 0.0
    %1847 = vmatpush1.msra.mxu0 %v139
    %1848 = vmatprep.subr.mxu0 0.0
    %1849 = vmatpush2.msra.mxu0 0.0
    %1850 = vmatprep.subr.mxu0 0.0
    %1851 = vmatpush2.msra.mxu0 0.0
    %1852 = vmatprep.subr.mxu0 0.0
    %1853 = vmatpush2.msra.mxu0 0.0
    %1854 = vmatprep.subr.mxu0 0.0
    %1855 = vmatpush2.msra.mxu0 0.0
    %1856 = vmatprep.subr.mxu0 0.0
    %1857 = vmatpush2.msra.mxu0 0.0
    %1858 = vmatprep.subr.mxu0 0.0
    %1859 = vmatpush2.msra.mxu0 0.0
    %1860 = vmatprep.subr.mxu0 0.0
    %1861 = vmatpush2.msra.mxu0 0.0
    %1862 = vmatprep.subr.mxu0 0.0
    %1863 = vmatpush2.msra.mxu0 0.0
    %1864 = vmatprep.subr.mxu0 0.0
    %1865 = vmatpush2.msra.mxu0 0.0
    %1866 = vmatprep.subr.mxu0 0.0
    %1867 = vmatpush2.msra.mxu0 0.0
    %1868 = vmatprep.subr.mxu0 0.0
    %1869 = vmatpush2.msra.mxu0 0.0
    %1870 = vmatprep.subr.mxu0 0.0
    %1871 = vmatpush2.msra.mxu0 0.0
    %1872 = vmatprep.subr.mxu0 0.0
    %1873 = vmatpush2.msra.mxu0 0.0
    %1874 = vmatprep.subr.mxu0 0.0
    %1875 = vmatpush2.msra.mxu0 0.0
    %1876 = vmatprep.subr.mxu0 0.0
    %1877 = vmatpush2.msra.mxu0 0.0
    %1878 = vmatprep.subr.mxu0 0.0
    %1879 = vmatpush2.msra.mxu0 0.0
    %1880 = vmatprep.mubr.f32.mxu0 0.0
    %1881 = vmatmul.mubr.f32.gmra.mxu0 %v1814
    %v1882 = vpop.f32.mrf.mxu0
    %v1883 = vadd.f32 %v163, %v1882
    %v1884 = vpop.f32.mrf.mxu0
    %1885 = vdwg.mxu0
    %v1886 = vmul.f32 %v359, %v1636
    %v1887 = vadd.f32 %v1886, %v1883
    %v1888 = vmul.f32 %v1639, %v355
    %v1889 = vsub.f32 %v1887, %v1888
    %vm1890 = vcmp.gt.f32.partialorder %v1889, %v355
    %v1891 = vsel %vm1890, 1, 0
    %v1892 = vcvt.s32.f32 %v1891
    %v1894 = vsel %vm281, %v1892, 0
    %1896 = vmatprep.subr.mxu0 0.0
    %1897 = vmatpush1.msra.mxu0 0.0
    %1898 = vmatprep.subr.mxu0 0.0
    %1899 = vmatpush1.msra.mxu0 0.0
    %1900 = vmatprep.subr.mxu0 0.0
    %1901 = vmatpush1.msra.mxu0 0.0
    %1902 = vmatprep.subr.mxu0 0.0
    %1903 = vmatpush1.msra.mxu0 0.0
    %1904 = vmatprep.subr.mxu0 0.0
    %1905 = vmatpush1.msra.mxu0 0.0
    %1906 = vmatprep.subr.mxu0 0.0
    %1907 = vmatpush1.msra.mxu0 0.0
    %1908 = vmatprep.subr.mxu0 0.0
    %1909 = vmatpush1.msra.mxu0 0.0
    %1910 = vmatprep.subr.mxu0 0.0
    %1911 = vmatpush1.msra.mxu0 0.0
    %1912 = vmatprep.subr.mxu0 0.0
    %1913 = vmatpush1.msra.mxu0 0.0
    %1914 = vmatprep.subr.mxu0 0.0
    %1915 = vmatpush1.msra.mxu0 0.0
    %1916 = vmatprep.subr.mxu0 0.0
    %1917 = vmatpush1.msra.mxu0 0.0
    %1918 = vmatprep.subr.mxu0 0.0
    %1919 = vmatpush1.msra.mxu0 0.0
    %1920 = vmatprep.subr.mxu0 0.0
    %1921 = vmatpush1.msra.mxu0 %v146
    %1922 = vmatprep.subr.mxu0 0.0
    %1923 = vmatpush1.msra.mxu0 %v145
    %1924 = vmatprep.subr.mxu0 0.0
    %1925 = vmatpush1.msra.mxu0 %v144
    %1926 = vmatprep.subr.mxu0 0.0
    %1927 = vmatpush1.msra.mxu0 %v143
    %1928 = vmatprep.subr.mxu0 0.0
    %1929 = vmatpush2.msra.mxu0 0.0
    %1930 = vmatprep.subr.mxu0 0.0
    %1931 = vmatpush2.msra.mxu0 0.0
    %1932 = vmatprep.subr.mxu0 0.0
    %1933 = vmatpush2.msra.mxu0 0.0
    %1934 = vmatprep.subr.mxu0 0.0
    %1935 = vmatpush2.msra.mxu0 0.0
    %1936 = vmatprep.subr.mxu0 0.0
    %1937 = vmatpush2.msra.mxu0 0.0
    %1938 = vmatprep.subr.mxu0 0.0
    %1939 = vmatpush2.msra.mxu0 0.0
    %1940 = vmatprep.subr.mxu0 0.0
    %1941 = vmatpush2.msra.mxu0 0.0
    %1942 = vmatprep.subr.mxu0 0.0
    %1943 = vmatpush2.msra.mxu0 0.0
    %1944 = vmatprep.subr.mxu0 0.0
    %1945 = vmatpush2.msra.mxu0 0.0
    %1946 = vmatprep.subr.mxu0 0.0
    %1947 = vmatpush2.msra.mxu0 0.0
    %1948 = vmatprep.subr.mxu0 0.0
    %1949 = vmatpush2.msra.mxu0 0.0
    %1950 = vmatprep.subr.mxu0 0.0
    %1951 = vmatpush2.msra.mxu0 0.0
    %1952 = vmatprep.subr.mxu0 0.0
    %1953 = vmatpush2.msra.mxu0 0.0
    %1954 = vmatprep.subr.mxu0 0.0
    %1955 = vmatpush2.msra.mxu0 0.0
    %1956 = vmatprep.subr.mxu0 0.0
    %1957 = vmatpush2.msra.mxu0 0.0
    %1958 = vmatprep.subr.mxu0 0.0
    %1959 = vmatpush2.msra.mxu0 0.0
    %1960 = vmatprep.mubr.f32.mxu0 0.0
    %1961 = vmatmul.mubr.f32.gmra.mxu0 %v1894
    %v1962 = vpop.f32.mrf.mxu0
    %v1963 = vadd.f32 %v170, %v1962
    %v1964 = vpop.f32.mrf.mxu0
    %1965 = vdwg.mxu0
    %v1966 = vmul.f32 %v444, %v1716
    %v1967 = vadd.f32 %v1966, %v1963
    %v1968 = vmul.f32 %v1719, %v440
    %v1969 = vsub.f32 %v1967, %v1968
    %vm1970 = vcmp.gt.f32.partialorder %v1969, %v440
    %v1971 = vsel %vm1970, 1, 0
    %v1972 = vcvt.s32.f32 %v1971
    %v1974 = vsel %vm281, %v1972, 0
    %1976 = vmatprep.subr.mxu0 0.0
    %1977 = vmatpush1.msra.mxu0 0.0
    %1978 = vmatprep.subr.mxu0 0.0
    %1979 = vmatpush1.msra.mxu0 0.0
    %1980 = vmatprep.subr.mxu0 0.0
    %1981 = vmatpush1.msra.mxu0 0.0
    %1982 = vmatprep.subr.mxu0 0.0
    %1983 = vmatpush1.msra.mxu0 0.0
    %1984 = vmatprep.subr.mxu0 0.0
    %1985 = vmatpush1.msra.mxu0 0.0
    %1986 = vmatprep.subr.mxu0 0.0
    %1987 = vmatpush1.msra.mxu0 0.0
    %1988 = vmatprep.subr.mxu0 0.0
    %1989 = vmatpush1.msra.mxu0 0.0
    %1990 = vmatprep.subr.mxu0 0.0
    %1991 = vmatpush1.msra.mxu0 0.0
    %1992 = vmatprep.subr.mxu0 0.0
    %1993 = vmatpush1.msra.mxu0 0.0
    %1994 = vmatprep.subr.mxu0 0.0
    %1995 = vmatpush1.msra.mxu0 0.0
    %1996 = vmatprep.subr.mxu0 0.0
    %1997 = vmatpush1.msra.mxu0 0.0
    %1998 = vmatprep.subr.mxu0 0.0
    %1999 = vmatpush1.msra.mxu0 0.0
    %2000 = vmatprep.subr.mxu0 0.0
    %2001 = vmatpush1.msra.mxu0 %v150
    %2002 = vmatprep.subr.mxu0 0.0
    %2003 = vmatpush1.msra.mxu0 %v149
    %2004 = vmatprep.subr.mxu0 0.0
    %2005 = vmatpush1.msra.mxu0 %v148
    %2006 = vmatprep.subr.mxu0 0.0
    %2007 = vmatpush1.msra.mxu0 %v147
    %2008 = vmatprep.subr.mxu0 0.0
    %2009 = vmatpush2.msra.mxu0 0.0
    %2010 = vmatprep.subr.mxu0 0.0
    %2011 = vmatpush2.msra.mxu0 0.0
    %2012 = vmatprep.subr.mxu0 0.0
    %2013 = vmatpush2.msra.mxu0 0.0
    %2014 = vmatprep.subr.mxu0 0.0
    %2015 = vmatpush2.msra.mxu0 0.0
    %2016 = vmatprep.subr.mxu0 0.0
    %2017 = vmatpush2.msra.mxu0 0.0
    %2018 = vmatprep.subr.mxu0 0.0
    %2019 = vmatpush2.msra.mxu0 0.0
    %2020 = vmatprep.subr.mxu0 0.0
    %2021 = vmatpush2.msra.mxu0 0.0
    %2022 = vmatprep.subr.mxu0 0.0
    %2023 = vmatpush2.msra.mxu0 0.0
    %2024 = vmatprep.subr.mxu0 0.0
    %2025 = vmatpush2.msra.mxu0 0.0
    %2026 = vmatprep.subr.mxu0 0.0
    %2027 = vmatpush2.msra.mxu0 0.0
    %2028 = vmatprep.subr.mxu0 0.0
    %2029 = vmatpush2.msra.mxu0 0.0
    %2030 = vmatprep.subr.mxu0 0.0
    %2031 = vmatpush2.msra.mxu0 0.0
    %2032 = vmatprep.subr.mxu0 0.0
    %2033 = vmatpush2.msra.mxu0 0.0
    %2034 = vmatprep.subr.mxu0 0.0
    %2035 = vmatpush2.msra.mxu0 0.0
    %2036 = vmatprep.subr.mxu0 0.0
    %2037 = vmatpush2.msra.mxu0 0.0
    %2038 = vmatprep.subr.mxu0 0.0
    %2039 = vmatpush2.msra.mxu0 0.0
    %2040 = vmatprep.mubr.f32.mxu0 0.0
    %2041 = vmatmul.mubr.f32.gmra.mxu0 %v1974
    %v2042 = vpop.f32.mrf.mxu0
    %v2043 = vadd.f32 %v177, %v2042
    %v2044 = vpop.f32.mrf.mxu0
    %2045 = vdwg.mxu0
    %v2046 = vmul.f32 %v529, %v1796
    %v2047 = vadd.f32 %v2046, %v2043
    %v2048 = vmul.f32 %v1799, %v525
    %v2049 = vsub.f32 %v2047, %v2048
    %vm2050 = vcmp.gt.f32.partialorder %v2049, %v525
    %v2051 = vsel %vm2050, 1, 0
    %v2052 = vcvt.s32.f32 %v2051
    %s2053 = scalar_lea.vmem [#allocation17], 48
    %2054 = vst.msk [vmem:[%s2053] sm:$0xff] %vm537, %v2043
    %s2055 = scalar_lea.vmem [#allocation18], 48
    %2056 = vst.msk [vmem:[%s2055] sm:$0xff] %vm537, %v2052
    %s2057 = scalar_lea.vmem [#allocation20], 48
    %2058 = vst.msk [vmem:[%s2057] sm:$0xff] %vm537, %v2049
    %v2059 = vmul.f32 %v273, %v1809
    %v2060 = vadd.f32 %v2059, %v266
    %v2061 = vmul.f32 %v1812, %v269
    %v2062 = vsub.f32 %v2060, %v2061
    %vm2063 = vcmp.gt.f32.partialorder %v2062, %v269
    %v2064 = vsel %vm2063, 1, 0
    %v2065 = vcvt.s32.f32 %v2064
    %v2067 = vsel %vm281, %v2065, 0
    %2069 = vmatprep.subr.mxu0 0.0
    %2070 = vmatpush1.msra.mxu0 0.0
    %2071 = vmatprep.subr.mxu0 0.0
    %2072 = vmatpush1.msra.mxu0 0.0
    %2073 = vmatprep.subr.mxu0 0.0
    %2074 = vmatpush1.msra.mxu0 0.0
    %2075 = vmatprep.subr.mxu0 0.0
    %2076 = vmatpush1.msra.mxu0 0.0
    %2077 = vmatprep.subr.mxu0 0.0
    %2078 = vmatpush1.msra.mxu0 0.0
    %2079 = vmatprep.subr.mxu0 0.0
    %2080 = vmatpush1.msra.mxu0 0.0
    %2081 = vmatprep.subr.mxu0 0.0
    %2082 = vmatpush1.msra.mxu0 0.0
    %2083 = vmatprep.subr.mxu0 0.0
    %2084 = vmatpush1.msra.mxu0 0.0
    %2085 = vmatprep.subr.mxu0 0.0
    %2086 = vmatpush1.msra.mxu0 0.0
    %2087 = vmatprep.subr.mxu0 0.0
    %2088 = vmatpush1.msra.mxu0 0.0
    %2089 = vmatprep.subr.mxu0 0.0
    %2090 = vmatpush1.msra.mxu0 0.0
    %2091 = vmatprep.subr.mxu0 0.0
    %2092 = vmatpush1.msra.mxu0 0.0
    %2093 = vmatprep.subr.mxu0 0.0
    %2094 = vmatpush1.msra.mxu0 %v142
    %2095 = vmatprep.subr.mxu0 0.0
    %2096 = vmatpush1.msra.mxu0 %v141
    %2097 = vmatprep.subr.mxu0 0.0
    %2098 = vmatpush1.msra.mxu0 %v140
    %2099 = vmatprep.subr.mxu0 0.0
    %2100 = vmatpush1.msra.mxu0 %v139
    %2101 = vmatprep.subr.mxu0 0.0
    %2102 = vmatpush2.msra.mxu0 0.0
    %2103 = vmatprep.subr.mxu0 0.0
    %2104 = vmatpush2.msra.mxu0 0.0
    %2105 = vmatprep.subr.mxu0 0.0
    %2106 = vmatpush2.msra.mxu0 0.0
    %2107 = vmatprep.subr.mxu0 0.0
    %2108 = vmatpush2.msra.mxu0 0.0
    %2109 = vmatprep.subr.mxu0 0.0
    %2110 = vmatpush2.msra.mxu0 0.0
    %2111 = vmatprep.subr.mxu0 0.0
    %2112 = vmatpush2.msra.mxu0 0.0
    %2113 = vmatprep.subr.mxu0 0.0
    %2114 = vmatpush2.msra.mxu0 0.0
    %2115 = vmatprep.subr.mxu0 0.0
    %2116 = vmatpush2.msra.mxu0 0.0
    %2117 = vmatprep.subr.mxu0 0.0
    %2118 = vmatpush2.msra.mxu0 0.0
    %2119 = vmatprep.subr.mxu0 0.0
    %2120 = vmatpush2.msra.mxu0 0.0
    %2121 = vmatprep.subr.mxu0 0.0
    %2122 = vmatpush2.msra.mxu0 0.0
    %2123 = vmatprep.subr.mxu0 0.0
    %2124 = vmatpush2.msra.mxu0 0.0
    %2125 = vmatprep.subr.mxu0 0.0
    %2126 = vmatpush2.msra.mxu0 0.0
    %2127 = vmatprep.subr.mxu0 0.0
    %2128 = vmatpush2.msra.mxu0 0.0
    %2129 = vmatprep.subr.mxu0 0.0
    %2130 = vmatpush2.msra.mxu0 0.0
    %2131 = vmatprep.subr.mxu0 0.0
    %2132 = vmatpush2.msra.mxu0 0.0
    %2133 = vmatprep.mubr.f32.mxu0 0.0
    %2134 = vmatmul.mubr.f32.gmra.mxu0 %v2067
    %v2135 = vpop.f32.mrf.mxu0
    %v2136 = vadd.f32 %v163, %v2135
    %v2137 = vpop.f32.mrf.mxu0
    %2138 = vdwg.mxu0
    %v2139 = vmul.f32 %v359, %v1889
    %v2140 = vadd.f32 %v2139, %v2136
    %v2141 = vmul.f32 %v1892, %v355
    %v2142 = vsub.f32 %v2140, %v2141
    %vm2143 = vcmp.gt.f32.partialorder %v2142, %v355
    %v2144 = vsel %vm2143, 1, 0
    %v2145 = vcvt.s32.f32 %v2144
    %v2147 = vsel %vm281, %v2145, 0
    %2149 = vmatprep.subr.mxu0 0.0
    %2150 = vmatpush1.msra.mxu0 0.0
    %2151 = vmatprep.subr.mxu0 0.0
    %2152 = vmatpush1.msra.mxu0 0.0
    %2153 = vmatprep.subr.mxu0 0.0
    %2154 = vmatpush1.msra.mxu0 0.0
    %2155 = vmatprep.subr.mxu0 0.0
    %2156 = vmatpush1.msra.mxu0 0.0
    %2157 = vmatprep.subr.mxu0 0.0
    %2158 = vmatpush1.msra.mxu0 0.0
    %2159 = vmatprep.subr.mxu0 0.0
    %2160 = vmatpush1.msra.mxu0 0.0
    %2161 = vmatprep.subr.mxu0 0.0
    %2162 = vmatpush1.msra.mxu0 0.0
    %2163 = vmatprep.subr.mxu0 0.0
    %2164 = vmatpush1.msra.mxu0 0.0
    %2165 = vmatprep.subr.mxu0 0.0
    %2166 = vmatpush1.msra.mxu0 0.0
    %2167 = vmatprep.subr.mxu0 0.0
    %2168 = vmatpush1.msra.mxu0 0.0
    %2169 = vmatprep.subr.mxu0 0.0
    %2170 = vmatpush1.msra.mxu0 0.0
    %2171 = vmatprep.subr.mxu0 0.0
    %2172 = vmatpush1.msra.mxu0 0.0
    %2173 = vmatprep.subr.mxu0 0.0
    %2174 = vmatpush1.msra.mxu0 %v146
    %2175 = vmatprep.subr.mxu0 0.0
    %2176 = vmatpush1.msra.mxu0 %v145
    %2177 = vmatprep.subr.mxu0 0.0
    %2178 = vmatpush1.msra.mxu0 %v144
    %2179 = vmatprep.subr.mxu0 0.0
    %2180 = vmatpush1.msra.mxu0 %v143
    %2181 = vmatprep.subr.mxu0 0.0
    %2182 = vmatpush2.msra.mxu0 0.0
    %2183 = vmatprep.subr.mxu0 0.0
    %2184 = vmatpush2.msra.mxu0 0.0
    %2185 = vmatprep.subr.mxu0 0.0
    %2186 = vmatpush2.msra.mxu0 0.0
    %2187 = vmatprep.subr.mxu0 0.0
    %2188 = vmatpush2.msra.mxu0 0.0
    %2189 = vmatprep.subr.mxu0 0.0
    %2190 = vmatpush2.msra.mxu0 0.0
    %2191 = vmatprep.subr.mxu0 0.0
    %2192 = vmatpush2.msra.mxu0 0.0
    %2193 = vmatprep.subr.mxu0 0.0
    %2194 = vmatpush2.msra.mxu0 0.0
    %2195 = vmatprep.subr.mxu0 0.0
    %2196 = vmatpush2.msra.mxu0 0.0
    %2197 = vmatprep.subr.mxu0 0.0
    %2198 = vmatpush2.msra.mxu0 0.0
    %2199 = vmatprep.subr.mxu0 0.0
    %2200 = vmatpush2.msra.mxu0 0.0
    %2201 = vmatprep.subr.mxu0 0.0
    %2202 = vmatpush2.msra.mxu0 0.0
    %2203 = vmatprep.subr.mxu0 0.0
    %2204 = vmatpush2.msra.mxu0 0.0
    %2205 = vmatprep.subr.mxu0 0.0
    %2206 = vmatpush2.msra.mxu0 0.0
    %2207 = vmatprep.subr.mxu0 0.0
    %2208 = vmatpush2.msra.mxu0 0.0
    %2209 = vmatprep.subr.mxu0 0.0
    %2210 = vmatpush2.msra.mxu0 0.0
    %2211 = vmatprep.subr.mxu0 0.0
    %2212 = vmatpush2.msra.mxu0 0.0
    %2213 = vmatprep.mubr.f32.mxu0 0.0
    %2214 = vmatmul.mubr.f32.gmra.mxu0 %v2147
    %v2215 = vpop.f32.mrf.mxu0
    %v2216 = vadd.f32 %v170, %v2215
    %v2217 = vpop.f32.mrf.mxu0
    %2218 = vdwg.mxu0
    %v2219 = vmul.f32 %v444, %v1969
    %v2220 = vadd.f32 %v2219, %v2216
    %v2221 = vmul.f32 %v1972, %v440
    %v2222 = vsub.f32 %v2220, %v2221
    %vm2223 = vcmp.gt.f32.partialorder %v2222, %v440
    %v2224 = vsel %vm2223, 1, 0
    %v2225 = vcvt.s32.f32 %v2224
    %v2227 = vsel %vm281, %v2225, 0
    %2229 = vmatprep.subr.mxu0 0.0
    %2230 = vmatpush1.msra.mxu0 0.0
    %2231 = vmatprep.subr.mxu0 0.0
    %2232 = vmatpush1.msra.mxu0 0.0
    %2233 = vmatprep.subr.mxu0 0.0
    %2234 = vmatpush1.msra.mxu0 0.0
    %2235 = vmatprep.subr.mxu0 0.0
    %2236 = vmatpush1.msra.mxu0 0.0
    %2237 = vmatprep.subr.mxu0 0.0
    %2238 = vmatpush1.msra.mxu0 0.0
    %2239 = vmatprep.subr.mxu0 0.0
    %2240 = vmatpush1.msra.mxu0 0.0
    %2241 = vmatprep.subr.mxu0 0.0
    %2242 = vmatpush1.msra.mxu0 0.0
    %2243 = vmatprep.subr.mxu0 0.0
    %2244 = vmatpush1.msra.mxu0 0.0
    %2245 = vmatprep.subr.mxu0 0.0
    %2246 = vmatpush1.msra.mxu0 0.0
    %2247 = vmatprep.subr.mxu0 0.0
    %2248 = vmatpush1.msra.mxu0 0.0
    %2249 = vmatprep.subr.mxu0 0.0
    %2250 = vmatpush1.msra.mxu0 0.0
    %2251 = vmatprep.subr.mxu0 0.0
    %2252 = vmatpush1.msra.mxu0 0.0
    %2253 = vmatprep.subr.mxu0 0.0
    %2254 = vmatpush1.msra.mxu0 %v150
    %2255 = vmatprep.subr.mxu0 0.0
    %2256 = vmatpush1.msra.mxu0 %v149
    %2257 = vmatprep.subr.mxu0 0.0
    %2258 = vmatpush1.msra.mxu0 %v148
    %2259 = vmatprep.subr.mxu0 0.0
    %2260 = vmatpush1.msra.mxu0 %v147
    %2261 = vmatprep.subr.mxu0 0.0
    %2262 = vmatpush2.msra.mxu0 0.0
    %2263 = vmatprep.subr.mxu0 0.0
    %2264 = vmatpush2.msra.mxu0 0.0
    %2265 = vmatprep.subr.mxu0 0.0
    %2266 = vmatpush2.msra.mxu0 0.0
    %2267 = vmatprep.subr.mxu0 0.0
    %2268 = vmatpush2.msra.mxu0 0.0
    %2269 = vmatprep.subr.mxu0 0.0
    %2270 = vmatpush2.msra.mxu0 0.0
    %2271 = vmatprep.subr.mxu0 0.0
    %2272 = vmatpush2.msra.mxu0 0.0
    %2273 = vmatprep.subr.mxu0 0.0
    %2274 = vmatpush2.msra.mxu0 0.0
    %2275 = vmatprep.subr.mxu0 0.0
    %2276 = vmatpush2.msra.mxu0 0.0
    %2277 = vmatprep.subr.mxu0 0.0
    %2278 = vmatpush2.msra.mxu0 0.0
    %2279 = vmatprep.subr.mxu0 0.0
    %2280 = vmatpush2.msra.mxu0 0.0
    %2281 = vmatprep.subr.mxu0 0.0
    %2282 = vmatpush2.msra.mxu0 0.0
    %2283 = vmatprep.subr.mxu0 0.0
    %2284 = vmatpush2.msra.mxu0 0.0
    %2285 = vmatprep.subr.mxu0 0.0
    %2286 = vmatpush2.msra.mxu0 0.0
    %2287 = vmatprep.subr.mxu0 0.0
    %2288 = vmatpush2.msra.mxu0 0.0
    %2289 = vmatprep.subr.mxu0 0.0
    %2290 = vmatpush2.msra.mxu0 0.0
    %2291 = vmatprep.subr.mxu0 0.0
    %2292 = vmatpush2.msra.mxu0 0.0
    %2293 = vmatprep.mubr.f32.mxu0 0.0
    %2294 = vmatmul.mubr.f32.gmra.mxu0 %v2227
    %v2295 = vpop.f32.mrf.mxu0
    %v2296 = vadd.f32 %v177, %v2295
    %v2297 = vpop.f32.mrf.mxu0
    %2298 = vdwg.mxu0
    %v2299 = vmul.f32 %v529, %v2049
    %v2300 = vadd.f32 %v2299, %v2296
    %v2301 = vmul.f32 %v2052, %v525
    %v2302 = vsub.f32 %v2300, %v2301
    %vm2303 = vcmp.gt.f32.partialorder %v2302, %v525
    %v2304 = vsel %vm2303, 1, 0
    %v2305 = vcvt.s32.f32 %v2304
    %s2306 = scalar_lea.vmem [#allocation17], 56
    %2307 = vst.msk [vmem:[%s2306] sm:$0xff] %vm537, %v2296
    %s2308 = scalar_lea.vmem [#allocation18], 56
    %2309 = vst.msk [vmem:[%s2308] sm:$0xff] %vm537, %v2305
    %s2310 = scalar_lea.vmem [#allocation20], 56
    %2311 = vst.msk [vmem:[%s2310] sm:$0xff] %vm537, %v2302
    // Predicated region
    $region78: #{ffsnn_forward.1} parent=1 // pred_check
      _
    $region79: #{ffsnn_forward.1} parent=1 // pred_check_branch
      %2313 = sbr.rel (0) target = $region81
    $region80: #{ffsnn_forward.1} parent=1 // pred_region
      %s2315 = ssub.s32 1024, 1024
      %2316 = vsyncadd [#allocation4], %s2315
      %s2317 = sshll.u32 [#allocation17], 4
      %s2318 = int_to_ptr.vmem [resolvable:$true] %s2317
      %2323 = dma.vmem_to_hbm [thread:$0]  %s2318, 1024, %s11, [#allocation4], 128, 128, 8
    $region81: #{ffsnn_forward.1} parent=1 // pred_fallthru
      _
    // Predicated region
    $region82: #{ffsnn_forward.1} parent=1 // pred_check
      _
    $region83: #{ffsnn_forward.1} parent=1 // pred_check_branch
      %2325 = sbr.rel (0) target = $region85
    $region84: #{ffsnn_forward.1} parent=1 // pred_region
      %s2327 = ssub.s32 1024, 1024
      %2328 = vsyncadd [#allocation19], %s2327
      %s2329 = sshll.u32 [#allocation18], 4
      %s2330 = int_to_ptr.vmem [resolvable:$true] %s2329
      %2335 = dma.vmem_to_hbm [thread:$0]  %s2330, 1024, %s12, [#allocation19], 128, 128, 8
    $region85: #{ffsnn_forward.1} parent=1 // pred_fallthru
      _
    // Predicated region
    $region86: #{ffsnn_forward.1} parent=1 // pred_check
      _
    $region87: #{ffsnn_forward.1} parent=1 // pred_check_branch
      %2337 = sbr.rel (0) target = $region89
    $region88: #{ffsnn_forward.1} parent=1 // pred_region
      %s2339 = ssub.s32 1024, 1024
      %2340 = vsyncadd [#allocation19], %s2339
      %s2341 = sshll.u32 [#allocation20], 4
      %s2342 = int_to_ptr.vmem [resolvable:$true] %s2341
      %2347 = dma.vmem_to_hbm [thread:$0]  %s2342, 1024, %s13, [#allocation19], 128, 128, 8
    $region89: #{ffsnn_forward.1} parent=1 // pred_fallthru
      _
    // Predicated region
    $region90: #{ffsnn_forward.1} parent=1 // pred_check
      _
    $region91: #{ffsnn_forward.1} parent=1 // pred_check_branch
      %2349 = sbr.rel (0) target = $region93
    $region92: #{ffsnn_forward.1} parent=1 // pred_region
      %2350 = dma.done [#allocation4], 1024
    $region93: #{ffsnn_forward.1} parent=1 // pred_fallthru
      _
    // Predicated region
    $region94: #{ffsnn_forward.1} parent=1 // pred_check
      _
    $region95: #{ffsnn_forward.1} parent=1 // pred_check_branch
      %2352 = sbr.rel (0) target = $region97
    $region96: #{ffsnn_forward.1} parent=1 // pred_region
      %2353 = dma.done [#allocation19], 1024
    $region97: #{ffsnn_forward.1} parent=1 // pred_fallthru
      _
    // Predicated region
    $region98: #{ffsnn_forward.1} parent=1 // pred_check
      _
    $region99: #{ffsnn_forward.1} parent=1 // pred_check_branch
      %2355 = sbr.rel (0) target = $region101
    $region100: #{ffsnn_forward.1} parent=1 // pred_region
      %2356 = dma.done [#allocation19], 1024
    $region101: #{ffsnn_forward.1} parent=1 // pred_fallthru
      _
    %2357 = vsyncpa [#allocation3], 1
    %2358 = vsyncpa [#allocation10], 1
    %2359 = vsyncpa [#allocation13], 1
    %2360 = vsyncpa [#allocation16], 1
    %2361 = vsyncpa [#allocation4], 1
    %2362 = vsyncpa [#allocation19], 1
    %2363 = vsyncpa [#allocation5], 1
    %2364 = vsyncpa [#allocation7], 1

</llo_original>
